<compile_context>
chip_gen: v5e
topology: v5e:2x2
jax: 0.10.0
libtpu: 0.0.40
codegen_flags: <defaults>
</compile_context>

<pallas_src>
import jax
import jax.numpy as jnp
from jax.experimental import pallas as pl
from jax.experimental.pallas import tpu as pltpu


def _tree_reduce(parts, op):
    """Balanced (depth ~log2 N) reduction of a Python list of arrays."""
    parts = list(parts)
    while len(parts) > 1:
        nxt = [op(parts[i], parts[i + 1]) for i in range(0, len(parts) - 1, 2)]
        if len(parts) % 2:
            nxt.append(parts[-1])
        parts = nxt
    return parts[0]


# ----------------------------------------------------------------------------
# Fused kernel: embedding gather + stacked LSTM + additive attention + head
# ----------------------------------------------------------------------------
def build_fused_kernel(T, B, B_pad, E, H, A, C, n_layers):
    del A, C  # shapes come from the refs

    def kernel(*refs):
        tok_ref = refs[0]                         # (B, T) int32, SMEM
        embed_ref = refs[1]                       # (n_vocab, E) f32, HBM (ANY)
        lstm_refs = refs[2:2 + 3 * n_layers]      # (w_ih, w_hh, b) x L
        base = 2 + 3 * n_layers
        (w_m1_ref, b_m1_ref, w_m2_ref, b_m2_ref, v_ref,
         w_na_ref, w_nb_ref, b_n_ref, w_out_ref, b_out_ref) = refs[base:base + 10]
        logit_ref = refs[base + 10]               # (B_pad, n_classes)
        x_scr = refs[base + 11]                   # (T*B_pad, E)  f32 VMEM
        seq_scr = refs[base + 12]                 # (T*B_pad, H)  f32 VMEM
        gates_scr = refs[base + 13]               # (T*B_pad, 4H) f32 VMEM
        gsem = refs[base + 14]                    # (T, B) DMA semaphores

        # -------- fused embedding gather: one small DMA per (t, b) token -----
        copies = []
        for t in range(T):
            for b in range(B):
                tok = tok_ref[b, t]               # scalar int32 from SMEM
                row = t * B_pad + b
                cp = pltpu.make_async_copy(
                    embed_ref.at[pl.ds(tok, 1), :],
                    x_scr.at[pl.ds(row, 1), :],
                    gsem.at[t, b])
                cp.start()
                copies.append(cp)
        # Zero the padded batch rows (disjoint from the DMA destinations), done
        # while the gather DMAs are in flight.
        if B_pad > B:
            for t in range(T):
                x_scr[pl.ds(t * B_pad + B, B_pad - B), :] = jnp.zeros(
                    (B_pad - B, E), jnp.float32)
        for cp in copies:
            cp.wait()

        # -------- one LSTM layer (input projection hoisted out of the chain) -
        def run_layer(x_in_bf16, w_ih_ref, w_hh_ref, b_ref):
            # Whole-sequence input projection: ONE bf16 MXU matmul, f32 acc,
            # bias folded in with a single broadcast.
            gates_scr[...] = (
                jnp.dot(x_in_bf16, w_ih_ref[...],
                        preferred_element_type=jnp.float32) + b_ref[...])
            w_hh = w_hh_ref[...]                  # bf16, loaded once per layer
            h = jnp.zeros((B_pad, H), jnp.float32)
            c = jnp.zeros((B_pad, H), jnp.float32)
            # Recurrence: only h @ W_hh on the serial chain; T is small &
            # static so the loop is fully unrolled for scheduler overlap.
            for t in range(T):
                g = gates_scr[pl.ds(t * B_pad, B_pad), :]
                if t > 0:                         # h == 0 at t == 0
                    g = g + jnp.dot(h.astype(jnp.bfloat16), w_hh,
                                    preferred_element_type=jnp.float32)
                i_g = jax.nn.sigmoid(g[:, 0 * H:1 * H])   # gate math kept f32
                f_g = jax.nn.sigmoid(g[:, 1 * H:2 * H])
                g_g = jnp.tanh(g[:, 2 * H:3 * H])
                o_g = jax.nn.sigmoid(g[:, 3 * H:4 * H])
                c = f_g * c + i_g * g_g
                h = o_g * jnp.tanh(c)
                seq_scr[pl.ds(t * B_pad, B_pad), :] = h

        # -------- stacked LSTM, all layers fused (VMEM-resident activations) -
        run_layer(x_scr[...].astype(jnp.bfloat16),
                  lstm_refs[0], lstm_refs[1], lstm_refs[2])
        for l in range(1, n_layers):
            # full previous-layer sequence is loaded before the recurrence
            # overwrites seq_scr in place (safe by dataflow).
            run_layer(seq_scr[...].astype(jnp.bfloat16),
                      lstm_refs[3 * l], lstm_refs[3 * l + 1],
                      lstm_refs[3 * l + 2])

        # -------- additive attention over time + MLP head ---------------------
        out2d = seq_scr[...]                                   # (T*B_pad, H) f32
        out_bf = out2d.astype(jnp.bfloat16)
        h_last = out2d[(T - 1) * B_pad:T * B_pad, :]           # (B_pad, H) f32
        h_last_bf = h_last.astype(jnp.bfloat16)

        # m1 for every timestep in one matmul; m2 once for the last step.
        m1_all = (jnp.dot(out_bf, w_m1_ref[...],
                          preferred_element_type=jnp.float32) + b_m1_ref[...])
        m2 = (jnp.dot(h_last_bf, w_m2_ref[...],
                      preferred_element_type=jnp.float32) + b_m2_ref[...])
        v_row = v_ref[...]                                     # (1, A)

        # Per-timestep scores (independent across t -> interleavable); no
        # concatenate([m2]*T) broadcast chain.
        s_parts = []
        for t in range(T):
            u_t = jnp.tanh(m1_all[t * B_pad:(t + 1) * B_pad, :] + m2)
            s_parts.append(jnp.sum(u_t * v_row, axis=1, keepdims=True))

        # Softmax over the TIME axis per batch row (legacy F.softmax dim=0),
        # balanced-tree max/sum, approx reciprocal on the EUP.
        m_max = _tree_reduce(s_parts, jnp.maximum)             # (B_pad, 1)
        e_parts = [jnp.exp(p - m_max) for p in s_parts]
        den = _tree_reduce(e_parts, lambda a, b: a + b)        # (B_pad, 1)
        inv_den = pl.reciprocal(den, approx=True)

        # context[b] = sum_t alpha[t,b] * out[t,b,:]  (balanced tree over T)
        ctx_parts = [(e_parts[t] * inv_den)
                     * out2d[t * B_pad:(t + 1) * B_pad, :] for t in range(T)]
        context = _tree_reduce(ctx_parts, lambda a, b: a + b)  # (B_pad, H)

        # MLP head: split-weight dots avoid the lane-axis concatenate.
        n_act = jnp.tanh(
            jnp.dot(context.astype(jnp.bfloat16), w_na_ref[...],
                    preferred_element_type=jnp.float32)
            + jnp.dot(h_last_bf, w_nb_ref[...],
                      preferred_element_type=jnp.float32)
            + b_n_ref[...])
        logit_ref[...] = (jnp.dot(n_act.astype(jnp.bfloat16), w_out_ref[...],
                                  preferred_element_type=jnp.float32)
                          + b_out_ref[...])

    return kernel


# ----------------------------------------------------------------------------
# Forward pass: everything (including the embedding gather) in ONE pallas_call
# ----------------------------------------------------------------------------
def attention_lstm_forward(tokens, params):
    B, T = tokens.shape
    E = params["embed"].shape[1]
    H = params["lstm"][0][1].shape[0]
    A = params["w_m1"].shape[1]
    C = params["w_out"].shape[1]
    n_layers = len(params["lstm"])
    B_pad = max(8, ((B + 7) // 8) * 8)            # sublane-aligned batch

    bf = jnp.bfloat16
    w_n = params["w_n"]
    inputs = [tokens.astype(jnp.int32),           # -> SMEM
              params["embed"]]                    # -> HBM (ANY), gathered by DMA
    for (w_ih, w_hh, b) in params["lstm"]:
        inputs += [w_ih.astype(bf), w_hh.astype(bf), b]
    inputs += [params["w_m1"].astype(bf), params["b_m1"],
               params["w_m2"].astype(bf), params["b_m2"],
               params["v"].reshape(1, A),
               w_n[:H, :].astype(bf), w_n[H:, :].astype(bf), params["b_n"],
               params["w_out"].astype(bf), params["b_out"]]

    in_specs = ([pl.BlockSpec(memory_space=pltpu.MemorySpace.SMEM),   # tokens
                 pl.BlockSpec(memory_space=pl.ANY)]                   # embed
                + [pl.BlockSpec(memory_space=pltpu.MemorySpace.VMEM)]
                * (len(inputs) - 2))

    scratch_shapes = [
        pltpu.VMEM((T * B_pad, E), jnp.float32),       # gathered embeddings
        pltpu.VMEM((T * B_pad, H), jnp.float32),       # layer outputs
        pltpu.VMEM((T * B_pad, 4 * H), jnp.float32),   # hoisted gates_x
        pltpu.SemaphoreType.DMA((T, B)),               # gather semaphores
    ]

    # Exact VMEM accounting (+25% headroom +2 MiB internal scratch), 48 MiB cap
    # so the setting stays valid on v7x (64 MiB/TC).
    weight_bytes = sum(int(a.size) * jnp.dtype(a.dtype).itemsize
                       for a in inputs[2:])
    scratch_bytes = T * B_pad * (E + H + 4 * H) * 4
    out_bytes = B_pad * C * 4
    exact = weight_bytes + scratch_bytes + out_bytes
    vmem_limit = int(min(48 * 1024 * 1024,
                         max(16 * 1024 * 1024,
                             1.25 * exact + 2 * 1024 * 1024)))

    kernel = build_fused_kernel(T, B, B_pad, E, H, A, C, n_layers)
    logits_pad = pl.pallas_call(
        kernel,
        out_shape=jax.ShapeDtypeStruct((B_pad, C), jnp.float32),
        in_specs=in_specs,
        out_specs=pl.BlockSpec(memory_space=pltpu.MemorySpace.VMEM),
        scratch_shapes=scratch_shapes,
        compiler_params=pltpu.CompilerParams(vmem_limit_bytes=vmem_limit),
    )(*inputs)
    return logits_pad[:B]


# ----------------------------------------------------------------------------
# Pure-JAX reference (same math, f32 throughout) for a correctness check
# ----------------------------------------------------------------------------
def reference_forward(tokens, params):
    x = params["embed"][tokens]
    h = jnp.transpose(x, (1, 0, 2))
    for (w_ih, w_hh, b) in params["lstm"]:
        T, B, _ = h.shape
        H = w_hh.shape[0]

        def step(carry, x_t):
            hh, cc = carry
            g = x_t @ w_ih + hh @ w_hh + b
            i = jax.nn.sigmoid(g[:, :H])
            f = jax.nn.sigmoid(g[:, H:2 * H])
            gg = jnp.tanh(g[:, 2 * H:3 * H])
            o = jax.nn.sigmoid(g[:, 3 * H:])
            cc = f * cc + i * gg
            hh = o * jnp.tanh(cc)
            return (hh, cc), hh

        (_, _), h = jax.lax.scan(
            step, (jnp.zeros((B, H)), jnp.zeros((B, H))), h)
    out_seq = h
    h_last = out_seq[-1]
    m2 = h_last @ params["w_m2"] + params["b_m2"]
    m1 = jnp.einsum("tbh,ha->tba", out_seq, params["w_m1"]) + params["b_m1"]
    scores = jnp.einsum("tba,ao->tbo", jnp.tanh(m1 + m2[None]), params["v"])[..., 0]
    alpha = jax.nn.softmax(scores, axis=0)
    context = jnp.einsum("tb,tbh->bh", alpha, out_seq)
    n = jnp.tanh(jnp.concatenate([context, h_last], 1) @ params["w_n"]
                 + params["b_n"])
    return n @ params["w_out"] + params["b_out"]


# ----------------------------------------------------------------------------
# Deterministic parameter initialization (shapes from AttentionLSTM.__init__)
# ----------------------------------------------------------------------------
def init_params(key, n_vocab, embed_dim, hidden_dim, attention_dim,
                n_classes, n_layers):
    keys = jax.random.split(key, 8 + 3 * n_layers)
    s = 0.1
    params = {
        "embed": s * jax.random.normal(keys[0], (n_vocab, embed_dim), jnp.float32),
        "w_m1": s * jax.random.normal(keys[1], (hidden_dim, attention_dim), jnp.float32),
        "b_m1": s * jax.random.normal(keys[2], (1, attention_dim), jnp.float32),
        "w_m2": s * jax.random.normal(keys[3], (hidden_dim, attention_dim), jnp.float32),
        "b_m2": s * jax.random.normal(keys[4], (1, attention_dim), jnp.float32),
        "v":    s * jax.random.normal(keys[5], (attention_dim, 1), jnp.float32),
        "w_n":  s * jax.random.normal(keys[6], (2 * hidden_dim, hidden_dim), jnp.float32),
        "b_n":  jnp.zeros((1, hidden_dim), jnp.float32),
        "w_out": s * jax.random.normal(keys[7], (hidden_dim, n_classes), jnp.float32),
        "b_out": jnp.zeros((1, n_classes), jnp.float32),
    }
    lstm = []
    for l in range(n_layers):
        in_dim = embed_dim if l == 0 else hidden_dim
        k0, k1, k2 = keys[8 + 3 * l: 11 + 3 * l]
        w_ih = s * jax.random.normal(k0, (in_dim, 4 * hidden_dim), jnp.float32)
        w_hh = s * jax.random.normal(k1, (hidden_dim, 4 * hidden_dim), jnp.float32)
        b = s * jax.random.normal(k2, (1, 4 * hidden_dim), jnp.float32)  # b_ih + b_hh
        lstm.append((w_ih, w_hh, b))
    params["lstm"] = lstm
    return params


if __name__ == "__main__":
    B, T = 2, 8
    n_vocab, embed_dim = 50, 16
    hidden_dim, attention_dim = 32, 16
    n_classes, n_layers = 4, 2

    key = jax.random.PRNGKey(0)
    k_tok, k_par = jax.random.split(key)
    tokens = jax.random.randint(k_tok, (B, T), 0, n_vocab, dtype=jnp.int32)
    params = init_params(k_par, n_vocab, embed_dim, hidden_dim,
                         attention_dim, n_classes, n_layers)

    logits = jax.jit(attention_lstm_forward)(tokens, params)
    jax.block_until_ready(logits)

    ref = reference_forward(tokens, params)
    assert logits.shape == (B, n_classes)
    # Tolerance relaxed vs the pure-f32 reference: kernel uses bf16 MXU
    # operands (f32 accumulation) and an approx-reciprocal softmax denominator.
    assert jnp.allclose(logits, ref, atol=2e-2, rtol=2e-2), (logits, ref)

    print("KERNEL_OK")
</pallas_src>

<mosaic_0001>
module attributes {stable_mosaic.version = 11 : i64} {
  func.func @kernel(%arg0: memref<2x8xi32, #tpu.memory_space<smem>>, %arg1: memref<50x16xf32, #tpu.memory_space<any>>, %arg2: memref<16x128xbf16, #tpu.memory_space<vmem>>, %arg3: memref<32x128xbf16, #tpu.memory_space<vmem>>, %arg4: memref<1x128xf32, #tpu.memory_space<vmem>>, %arg5: memref<32x128xbf16, #tpu.memory_space<vmem>>, %arg6: memref<32x128xbf16, #tpu.memory_space<vmem>>, %arg7: memref<1x128xf32, #tpu.memory_space<vmem>>, %arg8: memref<32x16xbf16, #tpu.memory_space<vmem>>, %arg9: memref<1x16xf32, #tpu.memory_space<vmem>>, %arg10: memref<32x16xbf16, #tpu.memory_space<vmem>>, %arg11: memref<1x16xf32, #tpu.memory_space<vmem>>, %arg12: memref<1x16xf32, #tpu.memory_space<vmem>>, %arg13: memref<32x32xbf16, #tpu.memory_space<vmem>>, %arg14: memref<32x32xbf16, #tpu.memory_space<vmem>>, %arg15: memref<1x32xf32, #tpu.memory_space<vmem>>, %arg16: memref<32x4xbf16, #tpu.memory_space<vmem>>, %arg17: memref<1x4xf32, #tpu.memory_space<vmem>>, %arg18: memref<8x4xf32, #tpu.memory_space<vmem>>, %arg19: memref<64x16xf32, #tpu.memory_space<vmem>>, %arg20: memref<64x32xf32, #tpu.memory_space<vmem>>, %arg21: memref<64x128xf32, #tpu.memory_space<vmem>>, %arg22: memref<8x2x!tpu.dma_semaphore, #tpu.memory_space<semaphore_mem>>) attributes {dimension_semantics = [], scalar_prefetch = 0 : i64, scratch_operands = 4 : i64, tpu.core_type = #tpu.core_type<tc>} {
    %c0 = arith.constant 0 : index
    %c0_0 = arith.constant 0 : index
    %0 = memref.load %arg0[%c0, %c0_0] : memref<2x8xi32, #tpu.memory_space<smem>>
    %c0_i32 = arith.constant 0 : i32
    %c0_i32_1 = arith.constant 0 : i32
    %c0_i32_2 = arith.constant 0 : i32
    %1 = tpu.memref_slice %arg1[%0, %c0_i32_2] : memref<50x16xf32, #tpu.memory_space<any>> -> memref<1x16xf32, #tpu.memory_space<any>>
    %c0_i32_3 = arith.constant 0 : i32
    %c0_i32_4 = arith.constant 0 : i32
    %2 = tpu.memref_slice %arg19[%c0_i32_3, %c0_i32_4] : memref<64x16xf32, #tpu.memory_space<vmem>> -> memref<1x16xf32, #tpu.memory_space<vmem>>
    %3 = tpu.memref_slice %arg22[%c0_i32, %c0_i32_1] : memref<8x2x!tpu.dma_semaphore, #tpu.memory_space<semaphore_mem>> -> memref<1x1x!tpu.dma_semaphore, #tpu.memory_space<semaphore_mem>>
    %4 = tpu.memref_squeeze %3 : memref<1x1x!tpu.dma_semaphore, #tpu.memory_space<semaphore_mem>> -> memref<!tpu.dma_semaphore, #tpu.memory_space<semaphore_mem>>
    tpu.enqueue_dma source(%1 : memref<1x16xf32, #tpu.memory_space<any>>) target(%2 : memref<1x16xf32, #tpu.memory_space<vmem>>) target_semaphore(%4 : memref<!tpu.dma_semaphore, #tpu.memory_space<semaphore_mem>>)
    %c1 = arith.constant 1 : index
    %c0_5 = arith.constant 0 : index
    %5 = memref.load %arg0[%c1, %c0_5] : memref<2x8xi32, #tpu.memory_space<smem>>
    %c0_i32_6 = arith.constant 0 : i32
    %c1_i32 = arith.constant 1 : i32
    %c0_i32_7 = arith.constant 0 : i32
    %6 = tpu.memref_slice %arg1[%5, %c0_i32_7] : memref<50x16xf32, #tpu.memory_space<any>> -> memref<1x16xf32, #tpu.memory_space<any>>
    %c1_i32_8 = arith.constant 1 : i32
    %c0_i32_9 = arith.constant 0 : i32
    %7 = tpu.memref_slice %arg19[%c1_i32_8, %c0_i32_9] : memref<64x16xf32, #tpu.memory_space<vmem>> -> memref<1x16xf32, #tpu.memory_space<vmem>>
    %8 = tpu.memref_slice %arg22[%c0_i32_6, %c1_i32] : memref<8x2x!tpu.dma_semaphore, #tpu.memory_space<semaphore_mem>> -> memref<1x1x!tpu.dma_semaphore, #tpu.memory_space<semaphore_mem>>
    %9 = tpu.memref_squeeze %8 : memref<1x1x!tpu.dma_semaphore, #tpu.memory_space<semaphore_mem>> -> memref<!tpu.dma_semaphore, #tpu.memory_space<semaphore_mem>>
    tpu.enqueue_dma source(%6 : memref<1x16xf32, #tpu.memory_space<any>>) target(%7 : memref<1x16xf32, #tpu.memory_space<vmem>>) target_semaphore(%9 : memref<!tpu.dma_semaphore, #tpu.memory_space<semaphore_mem>>)
    %c0_10 = arith.constant 0 : index
    %c1_11 = arith.constant 1 : index
    %10 = memref.load %arg0[%c0_10, %c1_11] : memref<2x8xi32, #tpu.memory_space<smem>>
    %c1_i32_12 = arith.constant 1 : i32
    %c0_i32_13 = arith.constant 0 : i32
    %c0_i32_14 = arith.constant 0 : i32
    %11 = tpu.memref_slice %arg1[%10, %c0_i32_14] : memref<50x16xf32, #tpu.memory_space<any>> -> memref<1x16xf32, #tpu.memory_space<any>>
    %c8_i32 = arith.constant 8 : i32
    %c0_i32_15 = arith.constant 0 : i32
    %12 = tpu.memref_slice %arg19[%c8_i32, %c0_i32_15] : memref<64x16xf32, #tpu.memory_space<vmem>> -> memref<1x16xf32, #tpu.memory_space<vmem>>
    %13 = tpu.memref_slice %arg22[%c1_i32_12, %c0_i32_13] : memref<8x2x!tpu.dma_semaphore, #tpu.memory_space<semaphore_mem>> -> memref<1x1x!tpu.dma_semaphore, #tpu.memory_space<semaphore_mem>>
    %14 = tpu.memref_squeeze %13 : memref<1x1x!tpu.dma_semaphore, #tpu.memory_space<semaphore_mem>> -> memref<!tpu.dma_semaphore, #tpu.memory_space<semaphore_mem>>
    tpu.enqueue_dma source(%11 : memref<1x16xf32, #tpu.memory_space<any>>) target(%12 : memref<1x16xf32, #tpu.memory_space<vmem>>) target_semaphore(%14 : memref<!tpu.dma_semaphore, #tpu.memory_space<semaphore_mem>>)
    %c1_16 = arith.constant 1 : index
    %c1_17 = arith.constant 1 : index
    %15 = memref.load %arg0[%c1_16, %c1_17] : memref<2x8xi32, #tpu.memory_space<smem>>
    %c1_i32_18 = arith.constant 1 : i32
    %c1_i32_19 = arith.constant 1 : i32
    %c0_i32_20 = arith.constant 0 : i32
    %16 = tpu.memref_slice %arg1[%15, %c0_i32_20] : memref<50x16xf32, #tpu.memory_space<any>> -> memref<1x16xf32, #tpu.memory_space<any>>
    %c9_i32 = arith.constant 9 : i32
    %c0_i32_21 = arith.constant 0 : i32
    %17 = tpu.memref_slice %arg19[%c9_i32, %c0_i32_21] : memref<64x16xf32, #tpu.memory_space<vmem>> -> memref<1x16xf32, #tpu.memory_space<vmem>>
    %18 = tpu.memref_slice %arg22[%c1_i32_18, %c1_i32_19] : memref<8x2x!tpu.dma_semaphore, #tpu.memory_space<semaphore_mem>> -> memref<1x1x!tpu.dma_semaphore, #tpu.memory_space<semaphore_mem>>
    %19 = tpu.memref_squeeze %18 : memref<1x1x!tpu.dma_semaphore, #tpu.memory_space<semaphore_mem>> -> memref<!tpu.dma_semaphore, #tpu.memory_space<semaphore_mem>>
    tpu.enqueue_dma source(%16 : memref<1x16xf32, #tpu.memory_space<any>>) target(%17 : memref<1x16xf32, #tpu.memory_space<vmem>>) target_semaphore(%19 : memref<!tpu.dma_semaphore, #tpu.memory_space<semaphore_mem>>)
    %c0_22 = arith.constant 0 : index
    %c2 = arith.constant 2 : index
    %20 = memref.load %arg0[%c0_22, %c2] : memref<2x8xi32, #tpu.memory_space<smem>>
    %c2_i32 = arith.constant 2 : i32
    %c0_i32_23 = arith.constant 0 : i32
    %c0_i32_24 = arith.constant 0 : i32
    %21 = tpu.memref_slice %arg1[%20, %c0_i32_24] : memref<50x16xf32, #tpu.memory_space<any>> -> memref<1x16xf32, #tpu.memory_space<any>>
    %c16_i32 = arith.constant 16 : i32
    %c0_i32_25 = arith.constant 0 : i32
    %22 = tpu.memref_slice %arg19[%c16_i32, %c0_i32_25] : memref<64x16xf32, #tpu.memory_space<vmem>> -> memref<1x16xf32, #tpu.memory_space<vmem>>
    %23 = tpu.memref_slice %arg22[%c2_i32, %c0_i32_23] : memref<8x2x!tpu.dma_semaphore, #tpu.memory_space<semaphore_mem>> -> memref<1x1x!tpu.dma_semaphore, #tpu.memory_space<semaphore_mem>>
    %24 = tpu.memref_squeeze %23 : memref<1x1x!tpu.dma_semaphore, #tpu.memory_space<semaphore_mem>> -> memref<!tpu.dma_semaphore, #tpu.memory_space<semaphore_mem>>
    tpu.enqueue_dma source(%21 : memref<1x16xf32, #tpu.memory_space<any>>) target(%22 : memref<1x16xf32, #tpu.memory_space<vmem>>) target_semaphore(%24 : memref<!tpu.dma_semaphore, #tpu.memory_space<semaphore_mem>>)
    %c1_26 = arith.constant 1 : index
    %c2_27 = arith.constant 2 : index
    %25 = memref.load %arg0[%c1_26, %c2_27] : memref<2x8xi32, #tpu.memory_space<smem>>
    %c2_i32_28 = arith.constant 2 : i32
    %c1_i32_29 = arith.constant 1 : i32
    %c0_i32_30 = arith.constant 0 : i32
    %26 = tpu.memref_slice %arg1[%25, %c0_i32_30] : memref<50x16xf32, #tpu.memory_space<any>> -> memref<1x16xf32, #tpu.memory_space<any>>
    %c17_i32 = arith.constant 17 : i32
    %c0_i32_31 = arith.constant 0 : i32
    %27 = tpu.memref_slice %arg19[%c17_i32, %c0_i32_31] : memref<64x16xf32, #tpu.memory_space<vmem>> -> memref<1x16xf32, #tpu.memory_space<vmem>>
    %28 = tpu.memref_slice %arg22[%c2_i32_28, %c1_i32_29] : memref<8x2x!tpu.dma_semaphore, #tpu.memory_space<semaphore_mem>> -> memref<1x1x!tpu.dma_semaphore, #tpu.memory_space<semaphore_mem>>
    %29 = tpu.memref_squeeze %28 : memref<1x1x!tpu.dma_semaphore, #tpu.memory_space<semaphore_mem>> -> memref<!tpu.dma_semaphore, #tpu.memory_space<semaphore_mem>>
    tpu.enqueue_dma source(%26 : memref<1x16xf32, #tpu.memory_space<any>>) target(%27 : memref<1x16xf32, #tpu.memory_space<vmem>>) target_semaphore(%29 : memref<!tpu.dma_semaphore, #tpu.memory_space<semaphore_mem>>)
    %c0_32 = arith.constant 0 : index
    %c3 = arith.constant 3 : index
    %30 = memref.load %arg0[%c0_32, %c3] : memref<2x8xi32, #tpu.memory_space<smem>>
    %c3_i32 = arith.constant 3 : i32
    %c0_i32_33 = arith.constant 0 : i32
    %c0_i32_34 = arith.constant 0 : i32
    %31 = tpu.memref_slice %arg1[%30, %c0_i32_34] : memref<50x16xf32, #tpu.memory_space<any>> -> memref<1x16xf32, #tpu.memory_space<any>>
    %c24_i32 = arith.constant 24 : i32
    %c0_i32_35 = arith.constant 0 : i32
    %32 = tpu.memref_slice %arg19[%c24_i32, %c0_i32_35] : memref<64x16xf32, #tpu.memory_space<vmem>> -> memref<1x16xf32, #tpu.memory_space<vmem>>
    %33 = tpu.memref_slice %arg22[%c3_i32, %c0_i32_33] : memref<8x2x!tpu.dma_semaphore, #tpu.memory_space<semaphore_mem>> -> memref<1x1x!tpu.dma_semaphore, #tpu.memory_space<semaphore_mem>>
    %34 = tpu.memref_squeeze %33 : memref<1x1x!tpu.dma_semaphore, #tpu.memory_space<semaphore_mem>> -> memref<!tpu.dma_semaphore, #tpu.memory_space<semaphore_mem>>
    tpu.enqueue_dma source(%31 : memref<1x16xf32, #tpu.memory_space<any>>) target(%32 : memref<1x16xf32, #tpu.memory_space<vmem>>) target_semaphore(%34 : memref<!tpu.dma_semaphore, #tpu.memory_space<semaphore_mem>>)
    %c1_36 = arith.constant 1 : index
    %c3_37 = arith.constant 3 : index
    %35 = memref.load %arg0[%c1_36, %c3_37] : memref<2x8xi32, #tpu.memory_space<smem>>
    %c3_i32_38 = arith.constant 3 : i32
    %c1_i32_39 = arith.constant 1 : i32
    %c0_i32_40 = arith.constant 0 : i32
    %36 = tpu.memref_slice %arg1[%35, %c0_i32_40] : memref<50x16xf32, #tpu.memory_space<any>> -> memref<1x16xf32, #tpu.memory_space<any>>
    %c25_i32 = arith.constant 25 : i32
    %c0_i32_41 = arith.constant 0 : i32
    %37 = tpu.memref_slice %arg19[%c25_i32, %c0_i32_41] : memref<64x16xf32, #tpu.memory_space<vmem>> -> memref<1x16xf32, #tpu.memory_space<vmem>>
    %38 = tpu.memref_slice %arg22[%c3_i32_38, %c1_i32_39] : memref<8x2x!tpu.dma_semaphore, #tpu.memory_space<semaphore_mem>> -> memref<1x1x!tpu.dma_semaphore, #tpu.memory_space<semaphore_mem>>
    %39 = tpu.memref_squeeze %38 : memref<1x1x!tpu.dma_semaphore, #tpu.memory_space<semaphore_mem>> -> memref<!tpu.dma_semaphore, #tpu.memory_space<semaphore_mem>>
    tpu.enqueue_dma source(%36 : memref<1x16xf32, #tpu.memory_space<any>>) target(%37 : memref<1x16xf32, #tpu.memory_space<vmem>>) target_semaphore(%39 : memref<!tpu.dma_semaphore, #tpu.memory_space<semaphore_mem>>)
    %c0_42 = arith.constant 0 : index
    %c4 = arith.constant 4 : index
    %40 = memref.load %arg0[%c0_42, %c4] : memref<2x8xi32, #tpu.memory_space<smem>>
    %c4_i32 = arith.constant 4 : i32
    %c0_i32_43 = arith.constant 0 : i32
    %c0_i32_44 = arith.constant 0 : i32
    %41 = tpu.memref_slice %arg1[%40, %c0_i32_44] : memref<50x16xf32, #tpu.memory_space<any>> -> memref<1x16xf32, #tpu.memory_space<any>>
    %c32_i32 = arith.constant 32 : i32
    %c0_i32_45 = arith.constant 0 : i32
    %42 = tpu.memref_slice %arg19[%c32_i32, %c0_i32_45] : memref<64x16xf32, #tpu.memory_space<vmem>> -> memref<1x16xf32, #tpu.memory_space<vmem>>
    %43 = tpu.memref_slice %arg22[%c4_i32, %c0_i32_43] : memref<8x2x!tpu.dma_semaphore, #tpu.memory_space<semaphore_mem>> -> memref<1x1x!tpu.dma_semaphore, #tpu.memory_space<semaphore_mem>>
    %44 = tpu.memref_squeeze %43 : memref<1x1x!tpu.dma_semaphore, #tpu.memory_space<semaphore_mem>> -> memref<!tpu.dma_semaphore, #tpu.memory_space<semaphore_mem>>
    tpu.enqueue_dma source(%41 : memref<1x16xf32, #tpu.memory_space<any>>) target(%42 : memref<1x16xf32, #tpu.memory_space<vmem>>) target_semaphore(%44 : memref<!tpu.dma_semaphore, #tpu.memory_space<semaphore_mem>>)
    %c1_46 = arith.constant 1 : index
    %c4_47 = arith.constant 4 : index
    %45 = memref.load %arg0[%c1_46, %c4_47] : memref<2x8xi32, #tpu.memory_space<smem>>
    %c4_i32_48 = arith.constant 4 : i32
    %c1_i32_49 = arith.constant 1 : i32
    %c0_i32_50 = arith.constant 0 : i32
    %46 = tpu.memref_slice %arg1[%45, %c0_i32_50] : memref<50x16xf32, #tpu.memory_space<any>> -> memref<1x16xf32, #tpu.memory_space<any>>
    %c33_i32 = arith.constant 33 : i32
    %c0_i32_51 = arith.constant 0 : i32
    %47 = tpu.memref_slice %arg19[%c33_i32, %c0_i32_51] : memref<64x16xf32, #tpu.memory_space<vmem>> -> memref<1x16xf32, #tpu.memory_space<vmem>>
    %48 = tpu.memref_slice %arg22[%c4_i32_48, %c1_i32_49] : memref<8x2x!tpu.dma_semaphore, #tpu.memory_space<semaphore_mem>> -> memref<1x1x!tpu.dma_semaphore, #tpu.memory_space<semaphore_mem>>
    %49 = tpu.memref_squeeze %48 : memref<1x1x!tpu.dma_semaphore, #tpu.memory_space<semaphore_mem>> -> memref<!tpu.dma_semaphore, #tpu.memory_space<semaphore_mem>>
    tpu.enqueue_dma source(%46 : memref<1x16xf32, #tpu.memory_space<any>>) target(%47 : memref<1x16xf32, #tpu.memory_space<vmem>>) target_semaphore(%49 : memref<!tpu.dma_semaphore, #tpu.memory_space<semaphore_mem>>)
    %c0_52 = arith.constant 0 : index
    %c5 = arith.constant 5 : index
    %50 = memref.load %arg0[%c0_52, %c5] : memref<2x8xi32, #tpu.memory_space<smem>>
    %c5_i32 = arith.constant 5 : i32
    %c0_i32_53 = arith.constant 0 : i32
    %c0_i32_54 = arith.constant 0 : i32
    %51 = tpu.memref_slice %arg1[%50, %c0_i32_54] : memref<50x16xf32, #tpu.memory_space<any>> -> memref<1x16xf32, #tpu.memory_space<any>>
    %c40_i32 = arith.constant 40 : i32
    %c0_i32_55 = arith.constant 0 : i32
    %52 = tpu.memref_slice %arg19[%c40_i32, %c0_i32_55] : memref<64x16xf32, #tpu.memory_space<vmem>> -> memref<1x16xf32, #tpu.memory_space<vmem>>
    %53 = tpu.memref_slice %arg22[%c5_i32, %c0_i32_53] : memref<8x2x!tpu.dma_semaphore, #tpu.memory_space<semaphore_mem>> -> memref<1x1x!tpu.dma_semaphore, #tpu.memory_space<semaphore_mem>>
    %54 = tpu.memref_squeeze %53 : memref<1x1x!tpu.dma_semaphore, #tpu.memory_space<semaphore_mem>> -> memref<!tpu.dma_semaphore, #tpu.memory_space<semaphore_mem>>
    tpu.enqueue_dma source(%51 : memref<1x16xf32, #tpu.memory_space<any>>) target(%52 : memref<1x16xf32, #tpu.memory_space<vmem>>) target_semaphore(%54 : memref<!tpu.dma_semaphore, #tpu.memory_space<semaphore_mem>>)
    %c1_56 = arith.constant 1 : index
    %c5_57 = arith.constant 5 : index
    %55 = memref.load %arg0[%c1_56, %c5_57] : memref<2x8xi32, #tpu.memory_space<smem>>
    %c5_i32_58 = arith.constant 5 : i32
    %c1_i32_59 = arith.constant 1 : i32
    %c0_i32_60 = arith.constant 0 : i32
    %56 = tpu.memref_slice %arg1[%55, %c0_i32_60] : memref<50x16xf32, #tpu.memory_space<any>> -> memref<1x16xf32, #tpu.memory_space<any>>
    %c41_i32 = arith.constant 41 : i32
    %c0_i32_61 = arith.constant 0 : i32
    %57 = tpu.memref_slice %arg19[%c41_i32, %c0_i32_61] : memref<64x16xf32, #tpu.memory_space<vmem>> -> memref<1x16xf32, #tpu.memory_space<vmem>>
    %58 = tpu.memref_slice %arg22[%c5_i32_58, %c1_i32_59] : memref<8x2x!tpu.dma_semaphore, #tpu.memory_space<semaphore_mem>> -> memref<1x1x!tpu.dma_semaphore, #tpu.memory_space<semaphore_mem>>
    %59 = tpu.memref_squeeze %58 : memref<1x1x!tpu.dma_semaphore, #tpu.memory_space<semaphore_mem>> -> memref<!tpu.dma_semaphore, #tpu.memory_space<semaphore_mem>>
    tpu.enqueue_dma source(%56 : memref<1x16xf32, #tpu.memory_space<any>>) target(%57 : memref<1x16xf32, #tpu.memory_space<vmem>>) target_semaphore(%59 : memref<!tpu.dma_semaphore, #tpu.memory_space<semaphore_mem>>)
    %c0_62 = arith.constant 0 : index
    %c6 = arith.constant 6 : index
    %60 = memref.load %arg0[%c0_62, %c6] : memref<2x8xi32, #tpu.memory_space<smem>>
    %c6_i32 = arith.constant 6 : i32
    %c0_i32_63 = arith.constant 0 : i32
    %c0_i32_64 = arith.constant 0 : i32
    %61 = tpu.memref_slice %arg1[%60, %c0_i32_64] : memref<50x16xf32, #tpu.memory_space<any>> -> memref<1x16xf32, #tpu.memory_space<any>>
    %c48_i32 = arith.constant 48 : i32
    %c0_i32_65 = arith.constant 0 : i32
    %62 = tpu.memref_slice %arg19[%c48_i32, %c0_i32_65] : memref<64x16xf32, #tpu.memory_space<vmem>> -> memref<1x16xf32, #tpu.memory_space<vmem>>
    %63 = tpu.memref_slice %arg22[%c6_i32, %c0_i32_63] : memref<8x2x!tpu.dma_semaphore, #tpu.memory_space<semaphore_mem>> -> memref<1x1x!tpu.dma_semaphore, #tpu.memory_space<semaphore_mem>>
    %64 = tpu.memref_squeeze %63 : memref<1x1x!tpu.dma_semaphore, #tpu.memory_space<semaphore_mem>> -> memref<!tpu.dma_semaphore, #tpu.memory_space<semaphore_mem>>
    tpu.enqueue_dma source(%61 : memref<1x16xf32, #tpu.memory_space<any>>) target(%62 : memref<1x16xf32, #tpu.memory_space<vmem>>) target_semaphore(%64 : memref<!tpu.dma_semaphore, #tpu.memory_space<semaphore_mem>>)
    %c1_66 = arith.constant 1 : index
    %c6_67 = arith.constant 6 : index
    %65 = memref.load %arg0[%c1_66, %c6_67] : memref<2x8xi32, #tpu.memory_space<smem>>
    %c6_i32_68 = arith.constant 6 : i32
    %c1_i32_69 = arith.constant 1 : i32
    %c0_i32_70 = arith.constant 0 : i32
    %66 = tpu.memref_slice %arg1[%65, %c0_i32_70] : memref<50x16xf32, #tpu.memory_space<any>> -> memref<1x16xf32, #tpu.memory_space<any>>
    %c49_i32 = arith.constant 49 : i32
    %c0_i32_71 = arith.constant 0 : i32
    %67 = tpu.memref_slice %arg19[%c49_i32, %c0_i32_71] : memref<64x16xf32, #tpu.memory_space<vmem>> -> memref<1x16xf32, #tpu.memory_space<vmem>>
    %68 = tpu.memref_slice %arg22[%c6_i32_68, %c1_i32_69] : memref<8x2x!tpu.dma_semaphore, #tpu.memory_space<semaphore_mem>> -> memref<1x1x!tpu.dma_semaphore, #tpu.memory_space<semaphore_mem>>
    %69 = tpu.memref_squeeze %68 : memref<1x1x!tpu.dma_semaphore, #tpu.memory_space<semaphore_mem>> -> memref<!tpu.dma_semaphore, #tpu.memory_space<semaphore_mem>>
    tpu.enqueue_dma source(%66 : memref<1x16xf32, #tpu.memory_space<any>>) target(%67 : memref<1x16xf32, #tpu.memory_space<vmem>>) target_semaphore(%69 : memref<!tpu.dma_semaphore, #tpu.memory_space<semaphore_mem>>)
    %c0_72 = arith.constant 0 : index
    %c7 = arith.constant 7 : index
    %70 = memref.load %arg0[%c0_72, %c7] : memref<2x8xi32, #tpu.memory_space<smem>>
    %c7_i32 = arith.constant 7 : i32
    %c0_i32_73 = arith.constant 0 : i32
    %c0_i32_74 = arith.constant 0 : i32
    %71 = tpu.memref_slice %arg1[%70, %c0_i32_74] : memref<50x16xf32, #tpu.memory_space<any>> -> memref<1x16xf32, #tpu.memory_space<any>>
    %c56_i32 = arith.constant 56 : i32
    %c0_i32_75 = arith.constant 0 : i32
    %72 = tpu.memref_slice %arg19[%c56_i32, %c0_i32_75] : memref<64x16xf32, #tpu.memory_space<vmem>> -> memref<1x16xf32, #tpu.memory_space<vmem>>
    %73 = tpu.memref_slice %arg22[%c7_i32, %c0_i32_73] : memref<8x2x!tpu.dma_semaphore, #tpu.memory_space<semaphore_mem>> -> memref<1x1x!tpu.dma_semaphore, #tpu.memory_space<semaphore_mem>>
    %74 = tpu.memref_squeeze %73 : memref<1x1x!tpu.dma_semaphore, #tpu.memory_space<semaphore_mem>> -> memref<!tpu.dma_semaphore, #tpu.memory_space<semaphore_mem>>
    tpu.enqueue_dma source(%71 : memref<1x16xf32, #tpu.memory_space<any>>) target(%72 : memref<1x16xf32, #tpu.memory_space<vmem>>) target_semaphore(%74 : memref<!tpu.dma_semaphore, #tpu.memory_space<semaphore_mem>>)
    %c1_76 = arith.constant 1 : index
    %c7_77 = arith.constant 7 : index
    %75 = memref.load %arg0[%c1_76, %c7_77] : memref<2x8xi32, #tpu.memory_space<smem>>
    %c7_i32_78 = arith.constant 7 : i32
    %c1_i32_79 = arith.constant 1 : i32
    %c0_i32_80 = arith.constant 0 : i32
    %76 = tpu.memref_slice %arg1[%75, %c0_i32_80] : memref<50x16xf32, #tpu.memory_space<any>> -> memref<1x16xf32, #tpu.memory_space<any>>
    %c57_i32 = arith.constant 57 : i32
    %c0_i32_81 = arith.constant 0 : i32
    %77 = tpu.memref_slice %arg19[%c57_i32, %c0_i32_81] : memref<64x16xf32, #tpu.memory_space<vmem>> -> memref<1x16xf32, #tpu.memory_space<vmem>>
    %78 = tpu.memref_slice %arg22[%c7_i32_78, %c1_i32_79] : memref<8x2x!tpu.dma_semaphore, #tpu.memory_space<semaphore_mem>> -> memref<1x1x!tpu.dma_semaphore, #tpu.memory_space<semaphore_mem>>
    %79 = tpu.memref_squeeze %78 : memref<1x1x!tpu.dma_semaphore, #tpu.memory_space<semaphore_mem>> -> memref<!tpu.dma_semaphore, #tpu.memory_space<semaphore_mem>>
    tpu.enqueue_dma source(%76 : memref<1x16xf32, #tpu.memory_space<any>>) target(%77 : memref<1x16xf32, #tpu.memory_space<vmem>>) target_semaphore(%79 : memref<!tpu.dma_semaphore, #tpu.memory_space<semaphore_mem>>)
    %cst = arith.constant 0.000000e+00 : f32
    %80 = vector.broadcast %cst : f32 to vector<6x16xf32>
    %c2_82 = arith.constant 2 : index
    %c0_83 = arith.constant 0 : index
    %81 = vector.load %arg19[%c2_82, %c0_83] : memref<64x16xf32, #tpu.memory_space<vmem>>, vector<6x16xf32>
    tpu.vector_store %arg19[%c2_82, %c0_83], %80 {strides = array<i32>} : memref<64x16xf32, #tpu.memory_space<vmem>>, vector<6x16xf32>,
    %cst_84 = arith.constant 0.000000e+00 : f32
    %82 = vector.broadcast %cst_84 : f32 to vector<6x16xf32>
    %c10 = arith.constant 10 : index
    %c0_85 = arith.constant 0 : index
    %83 = vector.load %arg19[%c10, %c0_85] : memref<64x16xf32, #tpu.memory_space<vmem>>, vector<6x16xf32>
    tpu.vector_store %arg19[%c10, %c0_85], %82 {strides = array<i32>} : memref<64x16xf32, #tpu.memory_space<vmem>>, vector<6x16xf32>,
    %cst_86 = arith.constant 0.000000e+00 : f32
    %84 = vector.broadcast %cst_86 : f32 to vector<6x16xf32>
    %c18 = arith.constant 18 : index
    %c0_87 = arith.constant 0 : index
    %85 = vector.load %arg19[%c18, %c0_87] : memref<64x16xf32, #tpu.memory_space<vmem>>, vector<6x16xf32>
    tpu.vector_store %arg19[%c18, %c0_87], %84 {strides = array<i32>} : memref<64x16xf32, #tpu.memory_space<vmem>>, vector<6x16xf32>,
    %cst_88 = arith.constant 0.000000e+00 : f32
    %86 = vector.broadcast %cst_88 : f32 to vector<6x16xf32>
    %c26 = arith.constant 26 : index
    %c0_89 = arith.constant 0 : index
    %87 = vector.load %arg19[%c26, %c0_89] : memref<64x16xf32, #tpu.memory_space<vmem>>, vector<6x16xf32>
    tpu.vector_store %arg19[%c26, %c0_89], %86 {strides = array<i32>} : memref<64x16xf32, #tpu.memory_space<vmem>>, vector<6x16xf32>,
    %cst_90 = arith.constant 0.000000e+00 : f32
    %88 = vector.broadcast %cst_90 : f32 to vector<6x16xf32>
    %c34 = arith.constant 34 : index
    %c0_91 = arith.constant 0 : index
    %89 = vector.load %arg19[%c34, %c0_91] : memref<64x16xf32, #tpu.memory_space<vmem>>, vector<6x16xf32>
    tpu.vector_store %arg19[%c34, %c0_91], %88 {strides = array<i32>} : memref<64x16xf32, #tpu.memory_space<vmem>>, vector<6x16xf32>,
    %cst_92 = arith.constant 0.000000e+00 : f32
    %90 = vector.broadcast %cst_92 : f32 to vector<6x16xf32>
    %c42 = arith.constant 42 : index
    %c0_93 = arith.constant 0 : index
    %91 = vector.load %arg19[%c42, %c0_93] : memref<64x16xf32, #tpu.memory_space<vmem>>, vector<6x16xf32>
    tpu.vector_store %arg19[%c42, %c0_93], %90 {strides = array<i32>} : memref<64x16xf32, #tpu.memory_space<vmem>>, vector<6x16xf32>,
    %cst_94 = arith.constant 0.000000e+00 : f32
    %92 = vector.broadcast %cst_94 : f32 to vector<6x16xf32>
    %c50 = arith.constant 50 : index
    %c0_95 = arith.constant 0 : index
    %93 = vector.load %arg19[%c50, %c0_95] : memref<64x16xf32, #tpu.memory_space<vmem>>, vector<6x16xf32>
    tpu.vector_store %arg19[%c50, %c0_95], %92 {strides = array<i32>} : memref<64x16xf32, #tpu.memory_space<vmem>>, vector<6x16xf32>,
    %cst_96 = arith.constant 0.000000e+00 : f32
    %94 = vector.broadcast %cst_96 : f32 to vector<6x16xf32>
    %c58 = arith.constant 58 : index
    %c0_97 = arith.constant 0 : index
    %95 = vector.load %arg19[%c58, %c0_97] : memref<64x16xf32, #tpu.memory_space<vmem>>, vector<6x16xf32>
    tpu.vector_store %arg19[%c58, %c0_97], %94 {strides = array<i32>} : memref<64x16xf32, #tpu.memory_space<vmem>>, vector<6x16xf32>,
    %c0_i32_98 = arith.constant 0 : i32
    %c0_i32_99 = arith.constant 0 : i32
    %c0_i32_100 = arith.constant 0 : i32
    %96 = tpu.memref_slice %arg1[%0, %c0_i32_100] : memref<50x16xf32, #tpu.memory_space<any>> -> memref<1x16xf32, #tpu.memory_space<any>>
    %c0_i32_101 = arith.constant 0 : i32
    %c0_i32_102 = arith.constant 0 : i32
    %97 = tpu.memref_slice %arg19[%c0_i32_101, %c0_i32_102] : memref<64x16xf32, #tpu.memory_space<vmem>> -> memref<1x16xf32, #tpu.memory_space<vmem>>
    %98 = tpu.memref_slice %arg22[%c0_i32_98, %c0_i32_99] : memref<8x2x!tpu.dma_semaphore, #tpu.memory_space<semaphore_mem>> -> memref<1x1x!tpu.dma_semaphore, #tpu.memory_space<semaphore_mem>>
    %99 = tpu.memref_squeeze %98 : memref<1x1x!tpu.dma_semaphore, #tpu.memory_space<semaphore_mem>> -> memref<!tpu.dma_semaphore, #tpu.memory_space<semaphore_mem>>
    tpu.wait_dma2 semaphore(%99 : memref<!tpu.dma_semaphore, #tpu.memory_space<semaphore_mem>>) src(%96 : memref<1x16xf32, #tpu.memory_space<any>>) dst(%97 : memref<1x16xf32, #tpu.memory_space<vmem>>)
    %c0_i32_103 = arith.constant 0 : i32
    %c1_i32_104 = arith.constant 1 : i32
    %c0_i32_105 = arith.constant 0 : i32
    %100 = tpu.memref_slice %arg1[%5, %c0_i32_105] : memref<50x16xf32, #tpu.memory_space<any>> -> memref<1x16xf32, #tpu.memory_space<any>>
    %c1_i32_106 = arith.constant 1 : i32
    %c0_i32_107 = arith.constant 0 : i32
    %101 = tpu.memref_slice %arg19[%c1_i32_106, %c0_i32_107] : memref<64x16xf32, #tpu.memory_space<vmem>> -> memref<1x16xf32, #tpu.memory_space<vmem>>
    %102 = tpu.memref_slice %arg22[%c0_i32_103, %c1_i32_104] : memref<8x2x!tpu.dma_semaphore, #tpu.memory_space<semaphore_mem>> -> memref<1x1x!tpu.dma_semaphore, #tpu.memory_space<semaphore_mem>>
    %103 = tpu.memref_squeeze %102 : memref<1x1x!tpu.dma_semaphore, #tpu.memory_space<semaphore_mem>> -> memref<!tpu.dma_semaphore, #tpu.memory_space<semaphore_mem>>
    tpu.wait_dma2 semaphore(%103 : memref<!tpu.dma_semaphore, #tpu.memory_space<semaphore_mem>>) src(%100 : memref<1x16xf32, #tpu.memory_space<any>>) dst(%101 : memref<1x16xf32, #tpu.memory_space<vmem>>)
    %c1_i32_108 = arith.constant 1 : i32
    %c0_i32_109 = arith.constant 0 : i32
    %c0_i32_110 = arith.constant 0 : i32
    %104 = tpu.memref_slice %arg1[%10, %c0_i32_110] : memref<50x16xf32, #tpu.memory_space<any>> -> memref<1x16xf32, #tpu.memory_space<any>>
    %c8_i32_111 = arith.constant 8 : i32
    %c0_i32_112 = arith.constant 0 : i32
    %105 = tpu.memref_slice %arg19[%c8_i32_111, %c0_i32_112] : memref<64x16xf32, #tpu.memory_space<vmem>> -> memref<1x16xf32, #tpu.memory_space<vmem>>
    %106 = tpu.memref_slice %arg22[%c1_i32_108, %c0_i32_109] : memref<8x2x!tpu.dma_semaphore, #tpu.memory_space<semaphore_mem>> -> memref<1x1x!tpu.dma_semaphore, #tpu.memory_space<semaphore_mem>>
    %107 = tpu.memref_squeeze %106 : memref<1x1x!tpu.dma_semaphore, #tpu.memory_space<semaphore_mem>> -> memref<!tpu.dma_semaphore, #tpu.memory_space<semaphore_mem>>
    tpu.wait_dma2 semaphore(%107 : memref<!tpu.dma_semaphore, #tpu.memory_space<semaphore_mem>>) src(%104 : memref<1x16xf32, #tpu.memory_space<any>>) dst(%105 : memref<1x16xf32, #tpu.memory_space<vmem>>)
    %c1_i32_113 = arith.constant 1 : i32
    %c1_i32_114 = arith.constant 1 : i32
    %c0_i32_115 = arith.constant 0 : i32
    %108 = tpu.memref_slice %arg1[%15, %c0_i32_115] : memref<50x16xf32, #tpu.memory_space<any>> -> memref<1x16xf32, #tpu.memory_space<any>>
    %c9_i32_116 = arith.constant 9 : i32
    %c0_i32_117 = arith.constant 0 : i32
    %109 = tpu.memref_slice %arg19[%c9_i32_116, %c0_i32_117] : memref<64x16xf32, #tpu.memory_space<vmem>> -> memref<1x16xf32, #tpu.memory_space<vmem>>
    %110 = tpu.memref_slice %arg22[%c1_i32_113, %c1_i32_114] : memref<8x2x!tpu.dma_semaphore, #tpu.memory_space<semaphore_mem>> -> memref<1x1x!tpu.dma_semaphore, #tpu.memory_space<semaphore_mem>>
    %111 = tpu.memref_squeeze %110 : memref<1x1x!tpu.dma_semaphore, #tpu.memory_space<semaphore_mem>> -> memref<!tpu.dma_semaphore, #tpu.memory_space<semaphore_mem>>
    tpu.wait_dma2 semaphore(%111 : memref<!tpu.dma_semaphore, #tpu.memory_space<semaphore_mem>>) src(%108 : memref<1x16xf32, #tpu.memory_space<any>>) dst(%109 : memref<1x16xf32, #tpu.memory_space<vmem>>)
    %c2_i32_118 = arith.constant 2 : i32
    %c0_i32_119 = arith.constant 0 : i32
    %c0_i32_120 = arith.constant 0 : i32
    %112 = tpu.memref_slice %arg1[%20, %c0_i32_120] : memref<50x16xf32, #tpu.memory_space<any>> -> memref<1x16xf32, #tpu.memory_space<any>>
    %c16_i32_121 = arith.constant 16 : i32
    %c0_i32_122 = arith.constant 0 : i32
    %113 = tpu.memref_slice %arg19[%c16_i32_121, %c0_i32_122] : memref<64x16xf32, #tpu.memory_space<vmem>> -> memref<1x16xf32, #tpu.memory_space<vmem>>
    %114 = tpu.memref_slice %arg22[%c2_i32_118, %c0_i32_119] : memref<8x2x!tpu.dma_semaphore, #tpu.memory_space<semaphore_mem>> -> memref<1x1x!tpu.dma_semaphore, #tpu.memory_space<semaphore_mem>>
    %115 = tpu.memref_squeeze %114 : memref<1x1x!tpu.dma_semaphore, #tpu.memory_space<semaphore_mem>> -> memref<!tpu.dma_semaphore, #tpu.memory_space<semaphore_mem>>
    tpu.wait_dma2 semaphore(%115 : memref<!tpu.dma_semaphore, #tpu.memory_space<semaphore_mem>>) src(%112 : memref<1x16xf32, #tpu.memory_space<any>>) dst(%113 : memref<1x16xf32, #tpu.memory_space<vmem>>)
    %c2_i32_123 = arith.constant 2 : i32
    %c1_i32_124 = arith.constant 1 : i32
    %c0_i32_125 = arith.constant 0 : i32
    %116 = tpu.memref_slice %arg1[%25, %c0_i32_125] : memref<50x16xf32, #tpu.memory_space<any>> -> memref<1x16xf32, #tpu.memory_space<any>>
    %c17_i32_126 = arith.constant 17 : i32
    %c0_i32_127 = arith.constant 0 : i32
    %117 = tpu.memref_slice %arg19[%c17_i32_126, %c0_i32_127] : memref<64x16xf32, #tpu.memory_space<vmem>> -> memref<1x16xf32, #tpu.memory_space<vmem>>
    %118 = tpu.memref_slice %arg22[%c2_i32_123, %c1_i32_124] : memref<8x2x!tpu.dma_semaphore, #tpu.memory_space<semaphore_mem>> -> memref<1x1x!tpu.dma_semaphore, #tpu.memory_space<semaphore_mem>>
    %119 = tpu.memref_squeeze %118 : memref<1x1x!tpu.dma_semaphore, #tpu.memory_space<semaphore_mem>> -> memref<!tpu.dma_semaphore, #tpu.memory_space<semaphore_mem>>
    tpu.wait_dma2 semaphore(%119 : memref<!tpu.dma_semaphore, #tpu.memory_space<semaphore_mem>>) src(%116 : memref<1x16xf32, #tpu.memory_space<any>>) dst(%117 : memref<1x16xf32, #tpu.memory_space<vmem>>)
    %c3_i32_128 = arith.constant 3 : i32
    %c0_i32_129 = arith.constant 0 : i32
    %c0_i32_130 = arith.constant 0 : i32
    %120 = tpu.memref_slice %arg1[%30, %c0_i32_130] : memref<50x16xf32, #tpu.memory_space<any>> -> memref<1x16xf32, #tpu.memory_space<any>>
    %c24_i32_131 = arith.constant 24 : i32
    %c0_i32_132 = arith.constant 0 : i32
    %121 = tpu.memref_slice %arg19[%c24_i32_131, %c0_i32_132] : memref<64x16xf32, #tpu.memory_space<vmem>> -> memref<1x16xf32, #tpu.memory_space<vmem>>
    %122 = tpu.memref_slice %arg22[%c3_i32_128, %c0_i32_129] : memref<8x2x!tpu.dma_semaphore, #tpu.memory_space<semaphore_mem>> -> memref<1x1x!tpu.dma_semaphore, #tpu.memory_space<semaphore_mem>>
    %123 = tpu.memref_squeeze %122 : memref<1x1x!tpu.dma_semaphore, #tpu.memory_space<semaphore_mem>> -> memref<!tpu.dma_semaphore, #tpu.memory_space<semaphore_mem>>
    tpu.wait_dma2 semaphore(%123 : memref<!tpu.dma_semaphore, #tpu.memory_space<semaphore_mem>>) src(%120 : memref<1x16xf32, #tpu.memory_space<any>>) dst(%121 : memref<1x16xf32, #tpu.memory_space<vmem>>)
    %c3_i32_133 = arith.constant 3 : i32
    %c1_i32_134 = arith.constant 1 : i32
    %c0_i32_135 = arith.constant 0 : i32
    %124 = tpu.memref_slice %arg1[%35, %c0_i32_135] : memref<50x16xf32, #tpu.memory_space<any>> -> memref<1x16xf32, #tpu.memory_space<any>>
    %c25_i32_136 = arith.constant 25 : i32
    %c0_i32_137 = arith.constant 0 : i32
    %125 = tpu.memref_slice %arg19[%c25_i32_136, %c0_i32_137] : memref<64x16xf32, #tpu.memory_space<vmem>> -> memref<1x16xf32, #tpu.memory_space<vmem>>
    %126 = tpu.memref_slice %arg22[%c3_i32_133, %c1_i32_134] : memref<8x2x!tpu.dma_semaphore, #tpu.memory_space<semaphore_mem>> -> memref<1x1x!tpu.dma_semaphore, #tpu.memory_space<semaphore_mem>>
    %127 = tpu.memref_squeeze %126 : memref<1x1x!tpu.dma_semaphore, #tpu.memory_space<semaphore_mem>> -> memref<!tpu.dma_semaphore, #tpu.memory_space<semaphore_mem>>
    tpu.wait_dma2 semaphore(%127 : memref<!tpu.dma_semaphore, #tpu.memory_space<semaphore_mem>>) src(%124 : memref<1x16xf32, #tpu.memory_space<any>>) dst(%125 : memref<1x16xf32, #tpu.memory_space<vmem>>)
    %c4_i32_138 = arith.constant 4 : i32
    %c0_i32_139 = arith.constant 0 : i32
    %c0_i32_140 = arith.constant 0 : i32
    %128 = tpu.memref_slice %arg1[%40, %c0_i32_140] : memref<50x16xf32, #tpu.memory_space<any>> -> memref<1x16xf32, #tpu.memory_space<any>>
    %c32_i32_141 = arith.constant 32 : i32
    %c0_i32_142 = arith.constant 0 : i32
    %129 = tpu.memref_slice %arg19[%c32_i32_141, %c0_i32_142] : memref<64x16xf32, #tpu.memory_space<vmem>> -> memref<1x16xf32, #tpu.memory_space<vmem>>
    %130 = tpu.memref_slice %arg22[%c4_i32_138, %c0_i32_139] : memref<8x2x!tpu.dma_semaphore, #tpu.memory_space<semaphore_mem>> -> memref<1x1x!tpu.dma_semaphore, #tpu.memory_space<semaphore_mem>>
    %131 = tpu.memref_squeeze %130 : memref<1x1x!tpu.dma_semaphore, #tpu.memory_space<semaphore_mem>> -> memref<!tpu.dma_semaphore, #tpu.memory_space<semaphore_mem>>
    tpu.wait_dma2 semaphore(%131 : memref<!tpu.dma_semaphore, #tpu.memory_space<semaphore_mem>>) src(%128 : memref<1x16xf32, #tpu.memory_space<any>>) dst(%129 : memref<1x16xf32, #tpu.memory_space<vmem>>)
    %c4_i32_143 = arith.constant 4 : i32
    %c1_i32_144 = arith.constant 1 : i32
    %c0_i32_145 = arith.constant 0 : i32
    %132 = tpu.memref_slice %arg1[%45, %c0_i32_145] : memref<50x16xf32, #tpu.memory_space<any>> -> memref<1x16xf32, #tpu.memory_space<any>>
    %c33_i32_146 = arith.constant 33 : i32
    %c0_i32_147 = arith.constant 0 : i32
    %133 = tpu.memref_slice %arg19[%c33_i32_146, %c0_i32_147] : memref<64x16xf32, #tpu.memory_space<vmem>> -> memref<1x16xf32, #tpu.memory_space<vmem>>
    %134 = tpu.memref_slice %arg22[%c4_i32_143, %c1_i32_144] : memref<8x2x!tpu.dma_semaphore, #tpu.memory_space<semaphore_mem>> -> memref<1x1x!tpu.dma_semaphore, #tpu.memory_space<semaphore_mem>>
    %135 = tpu.memref_squeeze %134 : memref<1x1x!tpu.dma_semaphore, #tpu.memory_space<semaphore_mem>> -> memref<!tpu.dma_semaphore, #tpu.memory_space<semaphore_mem>>
    tpu.wait_dma2 semaphore(%135 : memref<!tpu.dma_semaphore, #tpu.memory_space<semaphore_mem>>) src(%132 : memref<1x16xf32, #tpu.memory_space<any>>) dst(%133 : memref<1x16xf32, #tpu.memory_space<vmem>>)
    %c5_i32_148 = arith.constant 5 : i32
    %c0_i32_149 = arith.constant 0 : i32
    %c0_i32_150 = arith.constant 0 : i32
    %136 = tpu.memref_slice %arg1[%50, %c0_i32_150] : memref<50x16xf32, #tpu.memory_space<any>> -> memref<1x16xf32, #tpu.memory_space<any>>
    %c40_i32_151 = arith.constant 40 : i32
    %c0_i32_152 = arith.constant 0 : i32
    %137 = tpu.memref_slice %arg19[%c40_i32_151, %c0_i32_152] : memref<64x16xf32, #tpu.memory_space<vmem>> -> memref<1x16xf32, #tpu.memory_space<vmem>>
    %138 = tpu.memref_slice %arg22[%c5_i32_148, %c0_i32_149] : memref<8x2x!tpu.dma_semaphore, #tpu.memory_space<semaphore_mem>> -> memref<1x1x!tpu.dma_semaphore, #tpu.memory_space<semaphore_mem>>
    %139 = tpu.memref_squeeze %138 : memref<1x1x!tpu.dma_semaphore, #tpu.memory_space<semaphore_mem>> -> memref<!tpu.dma_semaphore, #tpu.memory_space<semaphore_mem>>
    tpu.wait_dma2 semaphore(%139 : memref<!tpu.dma_semaphore, #tpu.memory_space<semaphore_mem>>) src(%136 : memref<1x16xf32, #tpu.memory_space<any>>) dst(%137 : memref<1x16xf32, #tpu.memory_space<vmem>>)
    %c5_i32_153 = arith.constant 5 : i32
    %c1_i32_154 = arith.constant 1 : i32
    %c0_i32_155 = arith.constant 0 : i32
    %140 = tpu.memref_slice %arg1[%55, %c0_i32_155] : memref<50x16xf32, #tpu.memory_space<any>> -> memref<1x16xf32, #tpu.memory_space<any>>
    %c41_i32_156 = arith.constant 41 : i32
    %c0_i32_157 = arith.constant 0 : i32
    %141 = tpu.memref_slice %arg19[%c41_i32_156, %c0_i32_157] : memref<64x16xf32, #tpu.memory_space<vmem>> -> memref<1x16xf32, #tpu.memory_space<vmem>>
    %142 = tpu.memref_slice %arg22[%c5_i32_153, %c1_i32_154] : memref<8x2x!tpu.dma_semaphore, #tpu.memory_space<semaphore_mem>> -> memref<1x1x!tpu.dma_semaphore, #tpu.memory_space<semaphore_mem>>
    %143 = tpu.memref_squeeze %142 : memref<1x1x!tpu.dma_semaphore, #tpu.memory_space<semaphore_mem>> -> memref<!tpu.dma_semaphore, #tpu.memory_space<semaphore_mem>>
    tpu.wait_dma2 semaphore(%143 : memref<!tpu.dma_semaphore, #tpu.memory_space<semaphore_mem>>) src(%140 : memref<1x16xf32, #tpu.memory_space<any>>) dst(%141 : memref<1x16xf32, #tpu.memory_space<vmem>>)
    %c6_i32_158 = arith.constant 6 : i32
    %c0_i32_159 = arith.constant 0 : i32
    %c0_i32_160 = arith.constant 0 : i32
    %144 = tpu.memref_slice %arg1[%60, %c0_i32_160] : memref<50x16xf32, #tpu.memory_space<any>> -> memref<1x16xf32, #tpu.memory_space<any>>
    %c48_i32_161 = arith.constant 48 : i32
    %c0_i32_162 = arith.constant 0 : i32
    %145 = tpu.memref_slice %arg19[%c48_i32_161, %c0_i32_162] : memref<64x16xf32, #tpu.memory_space<vmem>> -> memref<1x16xf32, #tpu.memory_space<vmem>>
    %146 = tpu.memref_slice %arg22[%c6_i32_158, %c0_i32_159] : memref<8x2x!tpu.dma_semaphore, #tpu.memory_space<semaphore_mem>> -> memref<1x1x!tpu.dma_semaphore, #tpu.memory_space<semaphore_mem>>
    %147 = tpu.memref_squeeze %146 : memref<1x1x!tpu.dma_semaphore, #tpu.memory_space<semaphore_mem>> -> memref<!tpu.dma_semaphore, #tpu.memory_space<semaphore_mem>>
    tpu.wait_dma2 semaphore(%147 : memref<!tpu.dma_semaphore, #tpu.memory_space<semaphore_mem>>) src(%144 : memref<1x16xf32, #tpu.memory_space<any>>) dst(%145 : memref<1x16xf32, #tpu.memory_space<vmem>>)
    %c6_i32_163 = arith.constant 6 : i32
    %c1_i32_164 = arith.constant 1 : i32
    %c0_i32_165 = arith.constant 0 : i32
    %148 = tpu.memref_slice %arg1[%65, %c0_i32_165] : memref<50x16xf32, #tpu.memory_space<any>> -> memref<1x16xf32, #tpu.memory_space<any>>
    %c49_i32_166 = arith.constant 49 : i32
    %c0_i32_167 = arith.constant 0 : i32
    %149 = tpu.memref_slice %arg19[%c49_i32_166, %c0_i32_167] : memref<64x16xf32, #tpu.memory_space<vmem>> -> memref<1x16xf32, #tpu.memory_space<vmem>>
    %150 = tpu.memref_slice %arg22[%c6_i32_163, %c1_i32_164] : memref<8x2x!tpu.dma_semaphore, #tpu.memory_space<semaphore_mem>> -> memref<1x1x!tpu.dma_semaphore, #tpu.memory_space<semaphore_mem>>
    %151 = tpu.memref_squeeze %150 : memref<1x1x!tpu.dma_semaphore, #tpu.memory_space<semaphore_mem>> -> memref<!tpu.dma_semaphore, #tpu.memory_space<semaphore_mem>>
    tpu.wait_dma2 semaphore(%151 : memref<!tpu.dma_semaphore, #tpu.memory_space<semaphore_mem>>) src(%148 : memref<1x16xf32, #tpu.memory_space<any>>) dst(%149 : memref<1x16xf32, #tpu.memory_space<vmem>>)
    %c7_i32_168 = arith.constant 7 : i32
    %c0_i32_169 = arith.constant 0 : i32
    %c0_i32_170 = arith.constant 0 : i32
    %152 = tpu.memref_slice %arg1[%70, %c0_i32_170] : memref<50x16xf32, #tpu.memory_space<any>> -> memref<1x16xf32, #tpu.memory_space<any>>
    %c56_i32_171 = arith.constant 56 : i32
    %c0_i32_172 = arith.constant 0 : i32
    %153 = tpu.memref_slice %arg19[%c56_i32_171, %c0_i32_172] : memref<64x16xf32, #tpu.memory_space<vmem>> -> memref<1x16xf32, #tpu.memory_space<vmem>>
    %154 = tpu.memref_slice %arg22[%c7_i32_168, %c0_i32_169] : memref<8x2x!tpu.dma_semaphore, #tpu.memory_space<semaphore_mem>> -> memref<1x1x!tpu.dma_semaphore, #tpu.memory_space<semaphore_mem>>
    %155 = tpu.memref_squeeze %154 : memref<1x1x!tpu.dma_semaphore, #tpu.memory_space<semaphore_mem>> -> memref<!tpu.dma_semaphore, #tpu.memory_space<semaphore_mem>>
    tpu.wait_dma2 semaphore(%155 : memref<!tpu.dma_semaphore, #tpu.memory_space<semaphore_mem>>) src(%152 : memref<1x16xf32, #tpu.memory_space<any>>) dst(%153 : memref<1x16xf32, #tpu.memory_space<vmem>>)
    %c7_i32_173 = arith.constant 7 : i32
    %c1_i32_174 = arith.constant 1 : i32
    %c0_i32_175 = arith.constant 0 : i32
    %156 = tpu.memref_slice %arg1[%75, %c0_i32_175] : memref<50x16xf32, #tpu.memory_space<any>> -> memref<1x16xf32, #tpu.memory_space<any>>
    %c57_i32_176 = arith.constant 57 : i32
    %c0_i32_177 = arith.constant 0 : i32
    %157 = tpu.memref_slice %arg19[%c57_i32_176, %c0_i32_177] : memref<64x16xf32, #tpu.memory_space<vmem>> -> memref<1x16xf32, #tpu.memory_space<vmem>>
    %158 = tpu.memref_slice %arg22[%c7_i32_173, %c1_i32_174] : memref<8x2x!tpu.dma_semaphore, #tpu.memory_space<semaphore_mem>> -> memref<1x1x!tpu.dma_semaphore, #tpu.memory_space<semaphore_mem>>
    %159 = tpu.memref_squeeze %158 : memref<1x1x!tpu.dma_semaphore, #tpu.memory_space<semaphore_mem>> -> memref<!tpu.dma_semaphore, #tpu.memory_space<semaphore_mem>>
    tpu.wait_dma2 semaphore(%159 : memref<!tpu.dma_semaphore, #tpu.memory_space<semaphore_mem>>) src(%156 : memref<1x16xf32, #tpu.memory_space<any>>) dst(%157 : memref<1x16xf32, #tpu.memory_space<vmem>>)
    %c0_178 = arith.constant 0 : index
    %c0_179 = arith.constant 0 : index
    %160 = vector.load %arg19[%c0_178, %c0_179] : memref<64x16xf32, #tpu.memory_space<vmem>>, vector<64x16xf32>
    %161 = arith.truncf %160 : vector<64x16xf32> to vector<64x16xbf16>
    %c0_180 = arith.constant 0 : index
    %c0_181 = arith.constant 0 : index
    %162 = vector.load %arg2[%c0_180, %c0_181] : memref<16x128xbf16, #tpu.memory_space<vmem>>, vector<16x128xbf16>
    %cst_182 = arith.constant dense<0.000000e+00> : vector<64x128xf32>
    %163 = tpu.matmul %161, %162, %cst_182 {dimension_numbers = #tpu.dot_dimension_numbers<[1], [0], [0], [1], [0, 0, 1, 1], [], []>} : vector<64x16xbf16>, vector<16x128xbf16>, vector<64x128xf32> -> vector<64x128xf32>
    %c0_183 = arith.constant 0 : index
    %c0_184 = arith.constant 0 : index
    %164 = vector.load %arg4[%c0_183, %c0_184] : memref<1x128xf32, #tpu.memory_space<vmem>>, vector<1x128xf32>
    %165 = vector.broadcast %164 : vector<1x128xf32> to vector<64x128xf32>
    %166 = arith.addf %163, %165 : vector<64x128xf32>
    %c0_185 = arith.constant 0 : index
    %c0_186 = arith.constant 0 : index
    %167 = vector.load %arg21[%c0_185, %c0_186] : memref<64x128xf32, #tpu.memory_space<vmem>>, vector<64x128xf32>
    tpu.vector_store %arg21[%c0_185, %c0_186], %166 {strides = array<i32>} : memref<64x128xf32, #tpu.memory_space<vmem>>, vector<64x128xf32>,
    %c0_187 = arith.constant 0 : index
    %c0_188 = arith.constant 0 : index
    %168 = vector.load %arg3[%c0_187, %c0_188] : memref<32x128xbf16, #tpu.memory_space<vmem>>, vector<32x128xbf16>
    %cst_189 = arith.constant 0.000000e+00 : f32
    %169 = vector.broadcast %cst_189 : f32 to vector<8x32xf32>
    %c0_190 = arith.constant 0 : index
    %c0_191 = arith.constant 0 : index
    %170 = vector.load %arg21[%c0_190, %c0_191] : memref<64x128xf32, #tpu.memory_space<vmem>>, vector<8x128xf32>
    %171 = vector.extract_strided_slice %170 {offsets = [0, 0], sizes = [8, 32], strides = [1, 1]} : vector<8x128xf32> to vector<8x32xf32>
    %172 = arith.negf %171 : vector<8x32xf32>
    %173 = math.exp %172 : vector<8x32xf32>
    %cst_192 = arith.constant 1.000000e+00 : f32
    %174 = vector.broadcast %cst_192 : f32 to vector<8x32xf32>
    %175 = arith.addf %174, %173 : vector<8x32xf32>
    %176 = arith.divf %174, %175 : vector<8x32xf32>
    %177 = vector.extract_strided_slice %170 {offsets = [0, 32], sizes = [8, 32], strides = [1, 1]} : vector<8x128xf32> to vector<8x32xf32>
    %178 = arith.negf %177 : vector<8x32xf32>
    %179 = math.exp %178 : vector<8x32xf32>
    %cst_193 = arith.constant 1.000000e+00 : f32
    %180 = vector.broadcast %cst_193 : f32 to vector<8x32xf32>
    %181 = arith.addf %180, %179 : vector<8x32xf32>
    %182 = arith.divf %180, %181 : vector<8x32xf32>
    %183 = vector.extract_strided_slice %170 {offsets = [0, 64], sizes = [8, 32], strides = [1, 1]} : vector<8x128xf32> to vector<8x32xf32>
    %184 = math.tanh %183 : vector<8x32xf32>
    %185 = vector.extract_strided_slice %170 {offsets = [0, 96], sizes = [8, 32], strides = [1, 1]} : vector<8x128xf32> to vector<8x32xf32>
    %186 = arith.negf %185 : vector<8x32xf32>
    %187 = math.exp %186 : vector<8x32xf32>
    %cst_194 = arith.constant 1.000000e+00 : f32
    %188 = vector.broadcast %cst_194 : f32 to vector<8x32xf32>
    %189 = arith.addf %188, %187 : vector<8x32xf32>
    %190 = arith.divf %188, %189 : vector<8x32xf32>
    %191 = arith.mulf %182, %169 : vector<8x32xf32>
    %192 = arith.mulf %176, %184 : vector<8x32xf32>
    %193 = arith.addf %191, %192 : vector<8x32xf32>
    %194 = math.tanh %193 : vector<8x32xf32>
    %195 = arith.mulf %190, %194 : vector<8x32xf32>
    %c0_195 = arith.constant 0 : index
    %c0_196 = arith.constant 0 : index
    %196 = vector.load %arg20[%c0_195, %c0_196] : memref<64x32xf32, #tpu.memory_space<vmem>>, vector<8x32xf32>
    tpu.vector_store %arg20[%c0_195, %c0_196], %195 {strides = array<i32>} : memref<64x32xf32, #tpu.memory_space<vmem>>, vector<8x32xf32>,
    %c8 = arith.constant 8 : index
    %c0_197 = arith.constant 0 : index
    %197 = vector.load %arg21[%c8, %c0_197] : memref<64x128xf32, #tpu.memory_space<vmem>>, vector<8x128xf32>
    %198 = arith.truncf %195 : vector<8x32xf32> to vector<8x32xbf16>
    %cst_198 = arith.constant dense<0.000000e+00> : vector<8x128xf32>
    %199 = tpu.matmul %198, %168, %cst_198 {dimension_numbers = #tpu.dot_dimension_numbers<[1], [0], [0], [1], [0, 0, 1, 1], [], []>} : vector<8x32xbf16>, vector<32x128xbf16>, vector<8x128xf32> -> vector<8x128xf32>
    %200 = arith.addf %197, %199 : vector<8x128xf32>
    %201 = vector.extract_strided_slice %200 {offsets = [0, 0], sizes = [8, 32], strides = [1, 1]} : vector<8x128xf32> to vector<8x32xf32>
    %202 = arith.negf %201 : vector<8x32xf32>
    %203 = math.exp %202 : vector<8x32xf32>
    %cst_199 = arith.constant 1.000000e+00 : f32
    %204 = vector.broadcast %cst_199 : f32 to vector<8x32xf32>
    %205 = arith.addf %204, %203 : vector<8x32xf32>
    %206 = arith.divf %204, %205 : vector<8x32xf32>
    %207 = vector.extract_strided_slice %200 {offsets = [0, 32], sizes = [8, 32], strides = [1, 1]} : vector<8x128xf32> to vector<8x32xf32>
    %208 = arith.negf %207 : vector<8x32xf32>
    %209 = math.exp %208 : vector<8x32xf32>
    %cst_200 = arith.constant 1.000000e+00 : f32
    %210 = vector.broadcast %cst_200 : f32 to vector<8x32xf32>
    %211 = arith.addf %210, %209 : vector<8x32xf32>
    %212 = arith.divf %210, %211 : vector<8x32xf32>
    %213 = vector.extract_strided_slice %200 {offsets = [0, 64], sizes = [8, 32], strides = [1, 1]} : vector<8x128xf32> to vector<8x32xf32>
    %214 = math.tanh %213 : vector<8x32xf32>
    %215 = vector.extract_strided_slice %200 {offsets = [0, 96], sizes = [8, 32], strides = [1, 1]} : vector<8x128xf32> to vector<8x32xf32>
    %216 = arith.negf %215 : vector<8x32xf32>
    %217 = math.exp %216 : vector<8x32xf32>
    %cst_201 = arith.constant 1.000000e+00 : f32
    %218 = vector.broadcast %cst_201 : f32 to vector<8x32xf32>
    %219 = arith.addf %218, %217 : vector<8x32xf32>
    %220 = arith.divf %218, %219 : vector<8x32xf32>
    %221 = arith.mulf %212, %193 : vector<8x32xf32>
    %222 = arith.mulf %206, %214 : vector<8x32xf32>
    %223 = arith.addf %221, %222 : vector<8x32xf32>
    %224 = math.tanh %223 : vector<8x32xf32>
    %225 = arith.mulf %220, %224 : vector<8x32xf32>
    %c8_202 = arith.constant 8 : index
    %c0_203 = arith.constant 0 : index
    %226 = vector.load %arg20[%c8_202, %c0_203] : memref<64x32xf32, #tpu.memory_space<vmem>>, vector<8x32xf32>
    tpu.vector_store %arg20[%c8_202, %c0_203], %225 {strides = array<i32>} : memref<64x32xf32, #tpu.memory_space<vmem>>, vector<8x32xf32>,
    %c16 = arith.constant 16 : index
    %c0_204 = arith.constant 0 : index
    %227 = vector.load %arg21[%c16, %c0_204] : memref<64x128xf32, #tpu.memory_space<vmem>>, vector<8x128xf32>
    %228 = arith.truncf %225 : vector<8x32xf32> to vector<8x32xbf16>
    %cst_205 = arith.constant dense<0.000000e+00> : vector<8x128xf32>
    %229 = tpu.matmul %228, %168, %cst_205 {dimension_numbers = #tpu.dot_dimension_numbers<[1], [0], [0], [1], [0, 0, 1, 1], [], []>} : vector<8x32xbf16>, vector<32x128xbf16>, vector<8x128xf32> -> vector<8x128xf32>
    %230 = arith.addf %227, %229 : vector<8x128xf32>
    %231 = vector.extract_strided_slice %230 {offsets = [0, 0], sizes = [8, 32], strides = [1, 1]} : vector<8x128xf32> to vector<8x32xf32>
    %232 = arith.negf %231 : vector<8x32xf32>
    %233 = math.exp %232 : vector<8x32xf32>
    %cst_206 = arith.constant 1.000000e+00 : f32
    %234 = vector.broadcast %cst_206 : f32 to vector<8x32xf32>
    %235 = arith.addf %234, %233 : vector<8x32xf32>
    %236 = arith.divf %234, %235 : vector<8x32xf32>
    %237 = vector.extract_strided_slice %230 {offsets = [0, 32], sizes = [8, 32], strides = [1, 1]} : vector<8x128xf32> to vector<8x32xf32>
    %238 = arith.negf %237 : vector<8x32xf32>
    %239 = math.exp %238 : vector<8x32xf32>
    %cst_207 = arith.constant 1.000000e+00 : f32
    %240 = vector.broadcast %cst_207 : f32 to vector<8x32xf32>
    %241 = arith.addf %240, %239 : vector<8x32xf32>
    %242 = arith.divf %240, %241 : vector<8x32xf32>
    %243 = vector.extract_strided_slice %230 {offsets = [0, 64], sizes = [8, 32], strides = [1, 1]} : vector<8x128xf32> to vector<8x32xf32>
    %244 = math.tanh %243 : vector<8x32xf32>
    %245 = vector.extract_strided_slice %230 {offsets = [0, 96], sizes = [8, 32], strides = [1, 1]} : vector<8x128xf32> to vector<8x32xf32>
    %246 = arith.negf %245 : vector<8x32xf32>
    %247 = math.exp %246 : vector<8x32xf32>
    %cst_208 = arith.constant 1.000000e+00 : f32
    %248 = vector.broadcast %cst_208 : f32 to vector<8x32xf32>
    %249 = arith.addf %248, %247 : vector<8x32xf32>
    %250 = arith.divf %248, %249 : vector<8x32xf32>
    %251 = arith.mulf %242, %223 : vector<8x32xf32>
    %252 = arith.mulf %236, %244 : vector<8x32xf32>
    %253 = arith.addf %251, %252 : vector<8x32xf32>
    %254 = math.tanh %253 : vector<8x32xf32>
    %255 = arith.mulf %250, %254 : vector<8x32xf32>
    %c16_209 = arith.constant 16 : index
    %c0_210 = arith.constant 0 : index
    %256 = vector.load %arg20[%c16_209, %c0_210] : memref<64x32xf32, #tpu.memory_space<vmem>>, vector<8x32xf32>
    tpu.vector_store %arg20[%c16_209, %c0_210], %255 {strides = array<i32>} : memref<64x32xf32, #tpu.memory_space<vmem>>, vector<8x32xf32>,
    %c24 = arith.constant 24 : index
    %c0_211 = arith.constant 0 : index
    %257 = vector.load %arg21[%c24, %c0_211] : memref<64x128xf32, #tpu.memory_space<vmem>>, vector<8x128xf32>
    %258 = arith.truncf %255 : vector<8x32xf32> to vector<8x32xbf16>
    %cst_212 = arith.constant dense<0.000000e+00> : vector<8x128xf32>
    %259 = tpu.matmul %258, %168, %cst_212 {dimension_numbers = #tpu.dot_dimension_numbers<[1], [0], [0], [1], [0, 0, 1, 1], [], []>} : vector<8x32xbf16>, vector<32x128xbf16>, vector<8x128xf32> -> vector<8x128xf32>
    %260 = arith.addf %257, %259 : vector<8x128xf32>
    %261 = vector.extract_strided_slice %260 {offsets = [0, 0], sizes = [8, 32], strides = [1, 1]} : vector<8x128xf32> to vector<8x32xf32>
    %262 = arith.negf %261 : vector<8x32xf32>
    %263 = math.exp %262 : vector<8x32xf32>
    %cst_213 = arith.constant 1.000000e+00 : f32
    %264 = vector.broadcast %cst_213 : f32 to vector<8x32xf32>
    %265 = arith.addf %264, %263 : vector<8x32xf32>
    %266 = arith.divf %264, %265 : vector<8x32xf32>
    %267 = vector.extract_strided_slice %260 {offsets = [0, 32], sizes = [8, 32], strides = [1, 1]} : vector<8x128xf32> to vector<8x32xf32>
    %268 = arith.negf %267 : vector<8x32xf32>
    %269 = math.exp %268 : vector<8x32xf32>
    %cst_214 = arith.constant 1.000000e+00 : f32
    %270 = vector.broadcast %cst_214 : f32 to vector<8x32xf32>
    %271 = arith.addf %270, %269 : vector<8x32xf32>
    %272 = arith.divf %270, %271 : vector<8x32xf32>
    %273 = vector.extract_strided_slice %260 {offsets = [0, 64], sizes = [8, 32], strides = [1, 1]} : vector<8x128xf32> to vector<8x32xf32>
    %274 = math.tanh %273 : vector<8x32xf32>
    %275 = vector.extract_strided_slice %260 {offsets = [0, 96], sizes = [8, 32], strides = [1, 1]} : vector<8x128xf32> to vector<8x32xf32>
    %276 = arith.negf %275 : vector<8x32xf32>
    %277 = math.exp %276 : vector<8x32xf32>
    %cst_215 = arith.constant 1.000000e+00 : f32
    %278 = vector.broadcast %cst_215 : f32 to vector<8x32xf32>
    %279 = arith.addf %278, %277 : vector<8x32xf32>
    %280 = arith.divf %278, %279 : vector<8x32xf32>
    %281 = arith.mulf %272, %253 : vector<8x32xf32>
    %282 = arith.mulf %266, %274 : vector<8x32xf32>
    %283 = arith.addf %281, %282 : vector<8x32xf32>
    %284 = math.tanh %283 : vector<8x32xf32>
    %285 = arith.mulf %280, %284 : vector<8x32xf32>
    %c24_216 = arith.constant 24 : index
    %c0_217 = arith.constant 0 : index
    %286 = vector.load %arg20[%c24_216, %c0_217] : memref<64x32xf32, #tpu.memory_space<vmem>>, vector<8x32xf32>
    tpu.vector_store %arg20[%c24_216, %c0_217], %285 {strides = array<i32>} : memref<64x32xf32, #tpu.memory_space<vmem>>, vector<8x32xf32>,
    %c32 = arith.constant 32 : index
    %c0_218 = arith.constant 0 : index
    %287 = vector.load %arg21[%c32, %c0_218] : memref<64x128xf32, #tpu.memory_space<vmem>>, vector<8x128xf32>
    %288 = arith.truncf %285 : vector<8x32xf32> to vector<8x32xbf16>
    %cst_219 = arith.constant dense<0.000000e+00> : vector<8x128xf32>
    %289 = tpu.matmul %288, %168, %cst_219 {dimension_numbers = #tpu.dot_dimension_numbers<[1], [0], [0], [1], [0, 0, 1, 1], [], []>} : vector<8x32xbf16>, vector<32x128xbf16>, vector<8x128xf32> -> vector<8x128xf32>
    %290 = arith.addf %287, %289 : vector<8x128xf32>
    %291 = vector.extract_strided_slice %290 {offsets = [0, 0], sizes = [8, 32], strides = [1, 1]} : vector<8x128xf32> to vector<8x32xf32>
    %292 = arith.negf %291 : vector<8x32xf32>
    %293 = math.exp %292 : vector<8x32xf32>
    %cst_220 = arith.constant 1.000000e+00 : f32
    %294 = vector.broadcast %cst_220 : f32 to vector<8x32xf32>
    %295 = arith.addf %294, %293 : vector<8x32xf32>
    %296 = arith.divf %294, %295 : vector<8x32xf32>
    %297 = vector.extract_strided_slice %290 {offsets = [0, 32], sizes = [8, 32], strides = [1, 1]} : vector<8x128xf32> to vector<8x32xf32>
    %298 = arith.negf %297 : vector<8x32xf32>
    %299 = math.exp %298 : vector<8x32xf32>
    %cst_221 = arith.constant 1.000000e+00 : f32
    %300 = vector.broadcast %cst_221 : f32 to vector<8x32xf32>
    %301 = arith.addf %300, %299 : vector<8x32xf32>
    %302 = arith.divf %300, %301 : vector<8x32xf32>
    %303 = vector.extract_strided_slice %290 {offsets = [0, 64], sizes = [8, 32], strides = [1, 1]} : vector<8x128xf32> to vector<8x32xf32>
    %304 = math.tanh %303 : vector<8x32xf32>
    %305 = vector.extract_strided_slice %290 {offsets = [0, 96], sizes = [8, 32], strides = [1, 1]} : vector<8x128xf32> to vector<8x32xf32>
    %306 = arith.negf %305 : vector<8x32xf32>
    %307 = math.exp %306 : vector<8x32xf32>
    %cst_222 = arith.constant 1.000000e+00 : f32
    %308 = vector.broadcast %cst_222 : f32 to vector<8x32xf32>
    %309 = arith.addf %308, %307 : vector<8x32xf32>
    %310 = arith.divf %308, %309 : vector<8x32xf32>
    %311 = arith.mulf %302, %283 : vector<8x32xf32>
    %312 = arith.mulf %296, %304 : vector<8x32xf32>
    %313 = arith.addf %311, %312 : vector<8x32xf32>
    %314 = math.tanh %313 : vector<8x32xf32>
    %315 = arith.mulf %310, %314 : vector<8x32xf32>
    %c32_223 = arith.constant 32 : index
    %c0_224 = arith.constant 0 : index
    %316 = vector.load %arg20[%c32_223, %c0_224] : memref<64x32xf32, #tpu.memory_space<vmem>>, vector<8x32xf32>
    tpu.vector_store %arg20[%c32_223, %c0_224], %315 {strides = array<i32>} : memref<64x32xf32, #tpu.memory_space<vmem>>, vector<8x32xf32>,
    %c40 = arith.constant 40 : index
    %c0_225 = arith.constant 0 : index
    %317 = vector.load %arg21[%c40, %c0_225] : memref<64x128xf32, #tpu.memory_space<vmem>>, vector<8x128xf32>
    %318 = arith.truncf %315 : vector<8x32xf32> to vector<8x32xbf16>
    %cst_226 = arith.constant dense<0.000000e+00> : vector<8x128xf32>
    %319 = tpu.matmul %318, %168, %cst_226 {dimension_numbers = #tpu.dot_dimension_numbers<[1], [0], [0], [1], [0, 0, 1, 1], [], []>} : vector<8x32xbf16>, vector<32x128xbf16>, vector<8x128xf32> -> vector<8x128xf32>
    %320 = arith.addf %317, %319 : vector<8x128xf32>
    %321 = vector.extract_strided_slice %320 {offsets = [0, 0], sizes = [8, 32], strides = [1, 1]} : vector<8x128xf32> to vector<8x32xf32>
    %322 = arith.negf %321 : vector<8x32xf32>
    %323 = math.exp %322 : vector<8x32xf32>
    %cst_227 = arith.constant 1.000000e+00 : f32
    %324 = vector.broadcast %cst_227 : f32 to vector<8x32xf32>
    %325 = arith.addf %324, %323 : vector<8x32xf32>
    %326 = arith.divf %324, %325 : vector<8x32xf32>
    %327 = vector.extract_strided_slice %320 {offsets = [0, 32], sizes = [8, 32], strides = [1, 1]} : vector<8x128xf32> to vector<8x32xf32>
    %328 = arith.negf %327 : vector<8x32xf32>
    %329 = math.exp %328 : vector<8x32xf32>
    %cst_228 = arith.constant 1.000000e+00 : f32
    %330 = vector.broadcast %cst_228 : f32 to vector<8x32xf32>
    %331 = arith.addf %330, %329 : vector<8x32xf32>
    %332 = arith.divf %330, %331 : vector<8x32xf32>
    %333 = vector.extract_strided_slice %320 {offsets = [0, 64], sizes = [8, 32], strides = [1, 1]} : vector<8x128xf32> to vector<8x32xf32>
    %334 = math.tanh %333 : vector<8x32xf32>
    %335 = vector.extract_strided_slice %320 {offsets = [0, 96], sizes = [8, 32], strides = [1, 1]} : vector<8x128xf32> to vector<8x32xf32>
    %336 = arith.negf %335 : vector<8x32xf32>
    %337 = math.exp %336 : vector<8x32xf32>
    %cst_229 = arith.constant 1.000000e+00 : f32
    %338 = vector.broadcast %cst_229 : f32 to vector<8x32xf32>
    %339 = arith.addf %338, %337 : vector<8x32xf32>
    %340 = arith.divf %338, %339 : vector<8x32xf32>
    %341 = arith.mulf %332, %313 : vector<8x32xf32>
    %342 = arith.mulf %326, %334 : vector<8x32xf32>
    %343 = arith.addf %341, %342 : vector<8x32xf32>
    %344 = math.tanh %343 : vector<8x32xf32>
    %345 = arith.mulf %340, %344 : vector<8x32xf32>
    %c40_230 = arith.constant 40 : index
    %c0_231 = arith.constant 0 : index
    %346 = vector.load %arg20[%c40_230, %c0_231] : memref<64x32xf32, #tpu.memory_space<vmem>>, vector<8x32xf32>
    tpu.vector_store %arg20[%c40_230, %c0_231], %345 {strides = array<i32>} : memref<64x32xf32, #tpu.memory_space<vmem>>, vector<8x32xf32>,
    %c48 = arith.constant 48 : index
    %c0_232 = arith.constant 0 : index
    %347 = vector.load %arg21[%c48, %c0_232] : memref<64x128xf32, #tpu.memory_space<vmem>>, vector<8x128xf32>
    %348 = arith.truncf %345 : vector<8x32xf32> to vector<8x32xbf16>
    %cst_233 = arith.constant dense<0.000000e+00> : vector<8x128xf32>
    %349 = tpu.matmul %348, %168, %cst_233 {dimension_numbers = #tpu.dot_dimension_numbers<[1], [0], [0], [1], [0, 0, 1, 1], [], []>} : vector<8x32xbf16>, vector<32x128xbf16>, vector<8x128xf32> -> vector<8x128xf32>
    %350 = arith.addf %347, %349 : vector<8x128xf32>
    %351 = vector.extract_strided_slice %350 {offsets = [0, 0], sizes = [8, 32], strides = [1, 1]} : vector<8x128xf32> to vector<8x32xf32>
    %352 = arith.negf %351 : vector<8x32xf32>
    %353 = math.exp %352 : vector<8x32xf32>
    %cst_234 = arith.constant 1.000000e+00 : f32
    %354 = vector.broadcast %cst_234 : f32 to vector<8x32xf32>
    %355 = arith.addf %354, %353 : vector<8x32xf32>
    %356 = arith.divf %354, %355 : vector<8x32xf32>
    %357 = vector.extract_strided_slice %350 {offsets = [0, 32], sizes = [8, 32], strides = [1, 1]} : vector<8x128xf32> to vector<8x32xf32>
    %358 = arith.negf %357 : vector<8x32xf32>
    %359 = math.exp %358 : vector<8x32xf32>
    %cst_235 = arith.constant 1.000000e+00 : f32
    %360 = vector.broadcast %cst_235 : f32 to vector<8x32xf32>
    %361 = arith.addf %360, %359 : vector<8x32xf32>
    %362 = arith.divf %360, %361 : vector<8x32xf32>
    %363 = vector.extract_strided_slice %350 {offsets = [0, 64], sizes = [8, 32], strides = [1, 1]} : vector<8x128xf32> to vector<8x32xf32>
    %364 = math.tanh %363 : vector<8x32xf32>
    %365 = vector.extract_strided_slice %350 {offsets = [0, 96], sizes = [8, 32], strides = [1, 1]} : vector<8x128xf32> to vector<8x32xf32>
    %366 = arith.negf %365 : vector<8x32xf32>
    %367 = math.exp %366 : vector<8x32xf32>
    %cst_236 = arith.constant 1.000000e+00 : f32
    %368 = vector.broadcast %cst_236 : f32 to vector<8x32xf32>
    %369 = arith.addf %368, %367 : vector<8x32xf32>
    %370 = arith.divf %368, %369 : vector<8x32xf32>
    %371 = arith.mulf %362, %343 : vector<8x32xf32>
    %372 = arith.mulf %356, %364 : vector<8x32xf32>
    %373 = arith.addf %371, %372 : vector<8x32xf32>
    %374 = math.tanh %373 : vector<8x32xf32>
    %375 = arith.mulf %370, %374 : vector<8x32xf32>
    %c48_237 = arith.constant 48 : index
    %c0_238 = arith.constant 0 : index
    %376 = vector.load %arg20[%c48_237, %c0_238] : memref<64x32xf32, #tpu.memory_space<vmem>>, vector<8x32xf32>
    tpu.vector_store %arg20[%c48_237, %c0_238], %375 {strides = array<i32>} : memref<64x32xf32, #tpu.memory_space<vmem>>, vector<8x32xf32>,
    %c56 = arith.constant 56 : index
    %c0_239 = arith.constant 0 : index
    %377 = vector.load %arg21[%c56, %c0_239] : memref<64x128xf32, #tpu.memory_space<vmem>>, vector<8x128xf32>
    %378 = arith.truncf %375 : vector<8x32xf32> to vector<8x32xbf16>
    %cst_240 = arith.constant dense<0.000000e+00> : vector<8x128xf32>
    %379 = tpu.matmul %378, %168, %cst_240 {dimension_numbers = #tpu.dot_dimension_numbers<[1], [0], [0], [1], [0, 0, 1, 1], [], []>} : vector<8x32xbf16>, vector<32x128xbf16>, vector<8x128xf32> -> vector<8x128xf32>
    %380 = arith.addf %377, %379 : vector<8x128xf32>
    %381 = vector.extract_strided_slice %380 {offsets = [0, 0], sizes = [8, 32], strides = [1, 1]} : vector<8x128xf32> to vector<8x32xf32>
    %382 = arith.negf %381 : vector<8x32xf32>
    %383 = math.exp %382 : vector<8x32xf32>
    %cst_241 = arith.constant 1.000000e+00 : f32
    %384 = vector.broadcast %cst_241 : f32 to vector<8x32xf32>
    %385 = arith.addf %384, %383 : vector<8x32xf32>
    %386 = arith.divf %384, %385 : vector<8x32xf32>
    %387 = vector.extract_strided_slice %380 {offsets = [0, 32], sizes = [8, 32], strides = [1, 1]} : vector<8x128xf32> to vector<8x32xf32>
    %388 = arith.negf %387 : vector<8x32xf32>
    %389 = math.exp %388 : vector<8x32xf32>
    %cst_242 = arith.constant 1.000000e+00 : f32
    %390 = vector.broadcast %cst_242 : f32 to vector<8x32xf32>
    %391 = arith.addf %390, %389 : vector<8x32xf32>
    %392 = arith.divf %390, %391 : vector<8x32xf32>
    %393 = vector.extract_strided_slice %380 {offsets = [0, 64], sizes = [8, 32], strides = [1, 1]} : vector<8x128xf32> to vector<8x32xf32>
    %394 = math.tanh %393 : vector<8x32xf32>
    %395 = vector.extract_strided_slice %380 {offsets = [0, 96], sizes = [8, 32], strides = [1, 1]} : vector<8x128xf32> to vector<8x32xf32>
    %396 = arith.negf %395 : vector<8x32xf32>
    %397 = math.exp %396 : vector<8x32xf32>
    %cst_243 = arith.constant 1.000000e+00 : f32
    %398 = vector.broadcast %cst_243 : f32 to vector<8x32xf32>
    %399 = arith.addf %398, %397 : vector<8x32xf32>
    %400 = arith.divf %398, %399 : vector<8x32xf32>
    %401 = arith.mulf %392, %373 : vector<8x32xf32>
    %402 = arith.mulf %386, %394 : vector<8x32xf32>
    %403 = arith.addf %401, %402 : vector<8x32xf32>
    %404 = math.tanh %403 : vector<8x32xf32>
    %405 = arith.mulf %400, %404 : vector<8x32xf32>
    %c56_244 = arith.constant 56 : index
    %c0_245 = arith.constant 0 : index
    %406 = vector.load %arg20[%c56_244, %c0_245] : memref<64x32xf32, #tpu.memory_space<vmem>>, vector<8x32xf32>
    tpu.vector_store %arg20[%c56_244, %c0_245], %405 {strides = array<i32>} : memref<64x32xf32, #tpu.memory_space<vmem>>, vector<8x32xf32>,
    %c0_246 = arith.constant 0 : index
    %c0_247 = arith.constant 0 : index
    %407 = vector.load %arg20[%c0_246, %c0_247] : memref<64x32xf32, #tpu.memory_space<vmem>>, vector<64x32xf32>
    %408 = arith.truncf %407 : vector<64x32xf32> to vector<64x32xbf16>
    %c0_248 = arith.constant 0 : index
    %c0_249 = arith.constant 0 : index
    %409 = vector.load %arg5[%c0_248, %c0_249] : memref<32x128xbf16, #tpu.memory_space<vmem>>, vector<32x128xbf16>
    %cst_250 = arith.constant dense<0.000000e+00> : vector<64x128xf32>
    %410 = tpu.matmul %408, %409, %cst_250 {dimension_numbers = #tpu.dot_dimension_numbers<[1], [0], [0], [1], [0, 0, 1, 1], [], []>} : vector<64x32xbf16>, vector<32x128xbf16>, vector<64x128xf32> -> vector<64x128xf32>
    %c0_251 = arith.constant 0 : index
    %c0_252 = arith.constant 0 : index
    %411 = vector.load %arg7[%c0_251, %c0_252] : memref<1x128xf32, #tpu.memory_space<vmem>>, vector<1x128xf32>
    %412 = vector.broadcast %411 : vector<1x128xf32> to vector<64x128xf32>
    %413 = arith.addf %410, %412 : vector<64x128xf32>
    %c0_253 = arith.constant 0 : index
    %c0_254 = arith.constant 0 : index
    %414 = vector.load %arg21[%c0_253, %c0_254] : memref<64x128xf32, #tpu.memory_space<vmem>>, vector<64x128xf32>
    tpu.vector_store %arg21[%c0_253, %c0_254], %413 {strides = array<i32>} : memref<64x128xf32, #tpu.memory_space<vmem>>, vector<64x128xf32>,
    %c0_255 = arith.constant 0 : index
    %c0_256 = arith.constant 0 : index
    %415 = vector.load %arg6[%c0_255, %c0_256] : memref<32x128xbf16, #tpu.memory_space<vmem>>, vector<32x128xbf16>
    %cst_257 = arith.constant 0.000000e+00 : f32
    %416 = vector.broadcast %cst_257 : f32 to vector<8x32xf32>
    %c0_258 = arith.constant 0 : index
    %c0_259 = arith.constant 0 : index
    %417 = vector.load %arg21[%c0_258, %c0_259] : memref<64x128xf32, #tpu.memory_space<vmem>>, vector<8x128xf32>
    %418 = vector.extract_strided_slice %417 {offsets = [0, 0], sizes = [8, 32], strides = [1, 1]} : vector<8x128xf32> to vector<8x32xf32>
    %419 = arith.negf %418 : vector<8x32xf32>
    %420 = math.exp %419 : vector<8x32xf32>
    %cst_260 = arith.constant 1.000000e+00 : f32
    %421 = vector.broadcast %cst_260 : f32 to vector<8x32xf32>
    %422 = arith.addf %421, %420 : vector<8x32xf32>
    %423 = arith.divf %421, %422 : vector<8x32xf32>
    %424 = vector.extract_strided_slice %417 {offsets = [0, 32], sizes = [8, 32], strides = [1, 1]} : vector<8x128xf32> to vector<8x32xf32>
    %425 = arith.negf %424 : vector<8x32xf32>
    %426 = math.exp %425 : vector<8x32xf32>
    %cst_261 = arith.constant 1.000000e+00 : f32
    %427 = vector.broadcast %cst_261 : f32 to vector<8x32xf32>
    %428 = arith.addf %427, %426 : vector<8x32xf32>
    %429 = arith.divf %427, %428 : vector<8x32xf32>
    %430 = vector.extract_strided_slice %417 {offsets = [0, 64], sizes = [8, 32], strides = [1, 1]} : vector<8x128xf32> to vector<8x32xf32>
    %431 = math.tanh %430 : vector<8x32xf32>
    %432 = vector.extract_strided_slice %417 {offsets = [0, 96], sizes = [8, 32], strides = [1, 1]} : vector<8x128xf32> to vector<8x32xf32>
    %433 = arith.negf %432 : vector<8x32xf32>
    %434 = math.exp %433 : vector<8x32xf32>
    %cst_262 = arith.constant 1.000000e+00 : f32
    %435 = vector.broadcast %cst_262 : f32 to vector<8x32xf32>
    %436 = arith.addf %435, %434 : vector<8x32xf32>
    %437 = arith.divf %435, %436 : vector<8x32xf32>
    %438 = arith.mulf %429, %416 : vector<8x32xf32>
    %439 = arith.mulf %423, %431 : vector<8x32xf32>
    %440 = arith.addf %438, %439 : vector<8x32xf32>
    %441 = math.tanh %440 : vector<8x32xf32>
    %442 = arith.mulf %437, %441 : vector<8x32xf32>
    %c0_263 = arith.constant 0 : index
    %c0_264 = arith.constant 0 : index
    %443 = vector.load %arg20[%c0_263, %c0_264] : memref<64x32xf32, #tpu.memory_space<vmem>>, vector<8x32xf32>
    tpu.vector_store %arg20[%c0_263, %c0_264], %442 {strides = array<i32>} : memref<64x32xf32, #tpu.memory_space<vmem>>, vector<8x32xf32>,
    %c8_265 = arith.constant 8 : index
    %c0_266 = arith.constant 0 : index
    %444 = vector.load %arg21[%c8_265, %c0_266] : memref<64x128xf32, #tpu.memory_space<vmem>>, vector<8x128xf32>
    %445 = arith.truncf %442 : vector<8x32xf32> to vector<8x32xbf16>
    %cst_267 = arith.constant dense<0.000000e+00> : vector<8x128xf32>
    %446 = tpu.matmul %445, %415, %cst_267 {dimension_numbers = #tpu.dot_dimension_numbers<[1], [0], [0], [1], [0, 0, 1, 1], [], []>} : vector<8x32xbf16>, vector<32x128xbf16>, vector<8x128xf32> -> vector<8x128xf32>
    %447 = arith.addf %444, %446 : vector<8x128xf32>
    %448 = vector.extract_strided_slice %447 {offsets = [0, 0], sizes = [8, 32], strides = [1, 1]} : vector<8x128xf32> to vector<8x32xf32>
    %449 = arith.negf %448 : vector<8x32xf32>
    %450 = math.exp %449 : vector<8x32xf32>
    %cst_268 = arith.constant 1.000000e+00 : f32
    %451 = vector.broadcast %cst_268 : f32 to vector<8x32xf32>
    %452 = arith.addf %451, %450 : vector<8x32xf32>
    %453 = arith.divf %451, %452 : vector<8x32xf32>
    %454 = vector.extract_strided_slice %447 {offsets = [0, 32], sizes = [8, 32], strides = [1, 1]} : vector<8x128xf32> to vector<8x32xf32>
    %455 = arith.negf %454 : vector<8x32xf32>
    %456 = math.exp %455 : vector<8x32xf32>
    %cst_269 = arith.constant 1.000000e+00 : f32
    %457 = vector.broadcast %cst_269 : f32 to vector<8x32xf32>
    %458 = arith.addf %457, %456 : vector<8x32xf32>
    %459 = arith.divf %457, %458 : vector<8x32xf32>
    %460 = vector.extract_strided_slice %447 {offsets = [0, 64], sizes = [8, 32], strides = [1, 1]} : vector<8x128xf32> to vector<8x32xf32>
    %461 = math.tanh %460 : vector<8x32xf32>
    %462 = vector.extract_strided_slice %447 {offsets = [0, 96], sizes = [8, 32], strides = [1, 1]} : vector<8x128xf32> to vector<8x32xf32>
    %463 = arith.negf %462 : vector<8x32xf32>
    %464 = math.exp %463 : vector<8x32xf32>
    %cst_270 = arith.constant 1.000000e+00 : f32
    %465 = vector.broadcast %cst_270 : f32 to vector<8x32xf32>
    %466 = arith.addf %465, %464 : vector<8x32xf32>
    %467 = arith.divf %465, %466 : vector<8x32xf32>
    %468 = arith.mulf %459, %440 : vector<8x32xf32>
    %469 = arith.mulf %453, %461 : vector<8x32xf32>
    %470 = arith.addf %468, %469 : vector<8x32xf32>
    %471 = math.tanh %470 : vector<8x32xf32>
    %472 = arith.mulf %467, %471 : vector<8x32xf32>
    %c8_271 = arith.constant 8 : index
    %c0_272 = arith.constant 0 : index
    %473 = vector.load %arg20[%c8_271, %c0_272] : memref<64x32xf32, #tpu.memory_space<vmem>>, vector<8x32xf32>
    tpu.vector_store %arg20[%c8_271, %c0_272], %472 {strides = array<i32>} : memref<64x32xf32, #tpu.memory_space<vmem>>, vector<8x32xf32>,
    %c16_273 = arith.constant 16 : index
    %c0_274 = arith.constant 0 : index
    %474 = vector.load %arg21[%c16_273, %c0_274] : memref<64x128xf32, #tpu.memory_space<vmem>>, vector<8x128xf32>
    %475 = arith.truncf %472 : vector<8x32xf32> to vector<8x32xbf16>
    %cst_275 = arith.constant dense<0.000000e+00> : vector<8x128xf32>
    %476 = tpu.matmul %475, %415, %cst_275 {dimension_numbers = #tpu.dot_dimension_numbers<[1], [0], [0], [1], [0, 0, 1, 1], [], []>} : vector<8x32xbf16>, vector<32x128xbf16>, vector<8x128xf32> -> vector<8x128xf32>
    %477 = arith.addf %474, %476 : vector<8x128xf32>
    %478 = vector.extract_strided_slice %477 {offsets = [0, 0], sizes = [8, 32], strides = [1, 1]} : vector<8x128xf32> to vector<8x32xf32>
    %479 = arith.negf %478 : vector<8x32xf32>
    %480 = math.exp %479 : vector<8x32xf32>
    %cst_276 = arith.constant 1.000000e+00 : f32
    %481 = vector.broadcast %cst_276 : f32 to vector<8x32xf32>
    %482 = arith.addf %481, %480 : vector<8x32xf32>
    %483 = arith.divf %481, %482 : vector<8x32xf32>
    %484 = vector.extract_strided_slice %477 {offsets = [0, 32], sizes = [8, 32], strides = [1, 1]} : vector<8x128xf32> to vector<8x32xf32>
    %485 = arith.negf %484 : vector<8x32xf32>
    %486 = math.exp %485 : vector<8x32xf32>
    %cst_277 = arith.constant 1.000000e+00 : f32
    %487 = vector.broadcast %cst_277 : f32 to vector<8x32xf32>
    %488 = arith.addf %487, %486 : vector<8x32xf32>
    %489 = arith.divf %487, %488 : vector<8x32xf32>
    %490 = vector.extract_strided_slice %477 {offsets = [0, 64], sizes = [8, 32], strides = [1, 1]} : vector<8x128xf32> to vector<8x32xf32>
    %491 = math.tanh %490 : vector<8x32xf32>
    %492 = vector.extract_strided_slice %477 {offsets = [0, 96], sizes = [8, 32], strides = [1, 1]} : vector<8x128xf32> to vector<8x32xf32>
    %493 = arith.negf %492 : vector<8x32xf32>
    %494 = math.exp %493 : vector<8x32xf32>
    %cst_278 = arith.constant 1.000000e+00 : f32
    %495 = vector.broadcast %cst_278 : f32 to vector<8x32xf32>
    %496 = arith.addf %495, %494 : vector<8x32xf32>
    %497 = arith.divf %495, %496 : vector<8x32xf32>
    %498 = arith.mulf %489, %470 : vector<8x32xf32>
    %499 = arith.mulf %483, %491 : vector<8x32xf32>
    %500 = arith.addf %498, %499 : vector<8x32xf32>
    %501 = math.tanh %500 : vector<8x32xf32>
    %502 = arith.mulf %497, %501 : vector<8x32xf32>
    %c16_279 = arith.constant 16 : index
    %c0_280 = arith.constant 0 : index
    %503 = vector.load %arg20[%c16_279, %c0_280] : memref<64x32xf32, #tpu.memory_space<vmem>>, vector<8x32xf32>
    tpu.vector_store %arg20[%c16_279, %c0_280], %502 {strides = array<i32>} : memref<64x32xf32, #tpu.memory_space<vmem>>, vector<8x32xf32>,
    %c24_281 = arith.constant 24 : index
    %c0_282 = arith.constant 0 : index
    %504 = vector.load %arg21[%c24_281, %c0_282] : memref<64x128xf32, #tpu.memory_space<vmem>>, vector<8x128xf32>
    %505 = arith.truncf %502 : vector<8x32xf32> to vector<8x32xbf16>
    %cst_283 = arith.constant dense<0.000000e+00> : vector<8x128xf32>
    %506 = tpu.matmul %505, %415, %cst_283 {dimension_numbers = #tpu.dot_dimension_numbers<[1], [0], [0], [1], [0, 0, 1, 1], [], []>} : vector<8x32xbf16>, vector<32x128xbf16>, vector<8x128xf32> -> vector<8x128xf32>
    %507 = arith.addf %504, %506 : vector<8x128xf32>
    %508 = vector.extract_strided_slice %507 {offsets = [0, 0], sizes = [8, 32], strides = [1, 1]} : vector<8x128xf32> to vector<8x32xf32>
    %509 = arith.negf %508 : vector<8x32xf32>
    %510 = math.exp %509 : vector<8x32xf32>
    %cst_284 = arith.constant 1.000000e+00 : f32
    %511 = vector.broadcast %cst_284 : f32 to vector<8x32xf32>
    %512 = arith.addf %511, %510 : vector<8x32xf32>
    %513 = arith.divf %511, %512 : vector<8x32xf32>
    %514 = vector.extract_strided_slice %507 {offsets = [0, 32], sizes = [8, 32], strides = [1, 1]} : vector<8x128xf32> to vector<8x32xf32>
    %515 = arith.negf %514 : vector<8x32xf32>
    %516 = math.exp %515 : vector<8x32xf32>
    %cst_285 = arith.constant 1.000000e+00 : f32
    %517 = vector.broadcast %cst_285 : f32 to vector<8x32xf32>
    %518 = arith.addf %517, %516 : vector<8x32xf32>
    %519 = arith.divf %517, %518 : vector<8x32xf32>
    %520 = vector.extract_strided_slice %507 {offsets = [0, 64], sizes = [8, 32], strides = [1, 1]} : vector<8x128xf32> to vector<8x32xf32>
    %521 = math.tanh %520 : vector<8x32xf32>
    %522 = vector.extract_strided_slice %507 {offsets = [0, 96], sizes = [8, 32], strides = [1, 1]} : vector<8x128xf32> to vector<8x32xf32>
    %523 = arith.negf %522 : vector<8x32xf32>
    %524 = math.exp %523 : vector<8x32xf32>
    %cst_286 = arith.constant 1.000000e+00 : f32
    %525 = vector.broadcast %cst_286 : f32 to vector<8x32xf32>
    %526 = arith.addf %525, %524 : vector<8x32xf32>
    %527 = arith.divf %525, %526 : vector<8x32xf32>
    %528 = arith.mulf %519, %500 : vector<8x32xf32>
    %529 = arith.mulf %513, %521 : vector<8x32xf32>
    %530 = arith.addf %528, %529 : vector<8x32xf32>
    %531 = math.tanh %530 : vector<8x32xf32>
    %532 = arith.mulf %527, %531 : vector<8x32xf32>
    %c24_287 = arith.constant 24 : index
    %c0_288 = arith.constant 0 : index
    %533 = vector.load %arg20[%c24_287, %c0_288] : memref<64x32xf32, #tpu.memory_space<vmem>>, vector<8x32xf32>
    tpu.vector_store %arg20[%c24_287, %c0_288], %532 {strides = array<i32>} : memref<64x32xf32, #tpu.memory_space<vmem>>, vector<8x32xf32>,
    %c32_289 = arith.constant 32 : index
    %c0_290 = arith.constant 0 : index
    %534 = vector.load %arg21[%c32_289, %c0_290] : memref<64x128xf32, #tpu.memory_space<vmem>>, vector<8x128xf32>
    %535 = arith.truncf %532 : vector<8x32xf32> to vector<8x32xbf16>
    %cst_291 = arith.constant dense<0.000000e+00> : vector<8x128xf32>
    %536 = tpu.matmul %535, %415, %cst_291 {dimension_numbers = #tpu.dot_dimension_numbers<[1], [0], [0], [1], [0, 0, 1, 1], [], []>} : vector<8x32xbf16>, vector<32x128xbf16>, vector<8x128xf32> -> vector<8x128xf32>
    %537 = arith.addf %534, %536 : vector<8x128xf32>
    %538 = vector.extract_strided_slice %537 {offsets = [0, 0], sizes = [8, 32], strides = [1, 1]} : vector<8x128xf32> to vector<8x32xf32>
    %539 = arith.negf %538 : vector<8x32xf32>
    %540 = math.exp %539 : vector<8x32xf32>
    %cst_292 = arith.constant 1.000000e+00 : f32
    %541 = vector.broadcast %cst_292 : f32 to vector<8x32xf32>
    %542 = arith.addf %541, %540 : vector<8x32xf32>
    %543 = arith.divf %541, %542 : vector<8x32xf32>
    %544 = vector.extract_strided_slice %537 {offsets = [0, 32], sizes = [8, 32], strides = [1, 1]} : vector<8x128xf32> to vector<8x32xf32>
    %545 = arith.negf %544 : vector<8x32xf32>
    %546 = math.exp %545 : vector<8x32xf32>
    %cst_293 = arith.constant 1.000000e+00 : f32
    %547 = vector.broadcast %cst_293 : f32 to vector<8x32xf32>
    %548 = arith.addf %547, %546 : vector<8x32xf32>
    %549 = arith.divf %547, %548 : vector<8x32xf32>
    %550 = vector.extract_strided_slice %537 {offsets = [0, 64], sizes = [8, 32], strides = [1, 1]} : vector<8x128xf32> to vector<8x32xf32>
    %551 = math.tanh %550 : vector<8x32xf32>
    %552 = vector.extract_strided_slice %537 {offsets = [0, 96], sizes = [8, 32], strides = [1, 1]} : vector<8x128xf32> to vector<8x32xf32>
    %553 = arith.negf %552 : vector<8x32xf32>
    %554 = math.exp %553 : vector<8x32xf32>
    %cst_294 = arith.constant 1.000000e+00 : f32
    %555 = vector.broadcast %cst_294 : f32 to vector<8x32xf32>
    %556 = arith.addf %555, %554 : vector<8x32xf32>
    %557 = arith.divf %555, %556 : vector<8x32xf32>
    %558 = arith.mulf %549, %530 : vector<8x32xf32>
    %559 = arith.mulf %543, %551 : vector<8x32xf32>
    %560 = arith.addf %558, %559 : vector<8x32xf32>
    %561 = math.tanh %560 : vector<8x32xf32>
    %562 = arith.mulf %557, %561 : vector<8x32xf32>
    %c32_295 = arith.constant 32 : index
    %c0_296 = arith.constant 0 : index
    %563 = vector.load %arg20[%c32_295, %c0_296] : memref<64x32xf32, #tpu.memory_space<vmem>>, vector<8x32xf32>
    tpu.vector_store %arg20[%c32_295, %c0_296], %562 {strides = array<i32>} : memref<64x32xf32, #tpu.memory_space<vmem>>, vector<8x32xf32>,
    %c40_297 = arith.constant 40 : index
    %c0_298 = arith.constant 0 : index
    %564 = vector.load %arg21[%c40_297, %c0_298] : memref<64x128xf32, #tpu.memory_space<vmem>>, vector<8x128xf32>
    %565 = arith.truncf %562 : vector<8x32xf32> to vector<8x32xbf16>
    %cst_299 = arith.constant dense<0.000000e+00> : vector<8x128xf32>
    %566 = tpu.matmul %565, %415, %cst_299 {dimension_numbers = #tpu.dot_dimension_numbers<[1], [0], [0], [1], [0, 0, 1, 1], [], []>} : vector<8x32xbf16>, vector<32x128xbf16>, vector<8x128xf32> -> vector<8x128xf32>
    %567 = arith.addf %564, %566 : vector<8x128xf32>
    %568 = vector.extract_strided_slice %567 {offsets = [0, 0], sizes = [8, 32], strides = [1, 1]} : vector<8x128xf32> to vector<8x32xf32>
    %569 = arith.negf %568 : vector<8x32xf32>
    %570 = math.exp %569 : vector<8x32xf32>
    %cst_300 = arith.constant 1.000000e+00 : f32
    %571 = vector.broadcast %cst_300 : f32 to vector<8x32xf32>
    %572 = arith.addf %571, %570 : vector<8x32xf32>
    %573 = arith.divf %571, %572 : vector<8x32xf32>
    %574 = vector.extract_strided_slice %567 {offsets = [0, 32], sizes = [8, 32], strides = [1, 1]} : vector<8x128xf32> to vector<8x32xf32>
    %575 = arith.negf %574 : vector<8x32xf32>
    %576 = math.exp %575 : vector<8x32xf32>
    %cst_301 = arith.constant 1.000000e+00 : f32
    %577 = vector.broadcast %cst_301 : f32 to vector<8x32xf32>
    %578 = arith.addf %577, %576 : vector<8x32xf32>
    %579 = arith.divf %577, %578 : vector<8x32xf32>
    %580 = vector.extract_strided_slice %567 {offsets = [0, 64], sizes = [8, 32], strides = [1, 1]} : vector<8x128xf32> to vector<8x32xf32>
    %581 = math.tanh %580 : vector<8x32xf32>
    %582 = vector.extract_strided_slice %567 {offsets = [0, 96], sizes = [8, 32], strides = [1, 1]} : vector<8x128xf32> to vector<8x32xf32>
    %583 = arith.negf %582 : vector<8x32xf32>
    %584 = math.exp %583 : vector<8x32xf32>
    %cst_302 = arith.constant 1.000000e+00 : f32
    %585 = vector.broadcast %cst_302 : f32 to vector<8x32xf32>
    %586 = arith.addf %585, %584 : vector<8x32xf32>
    %587 = arith.divf %585, %586 : vector<8x32xf32>
    %588 = arith.mulf %579, %560 : vector<8x32xf32>
    %589 = arith.mulf %573, %581 : vector<8x32xf32>
    %590 = arith.addf %588, %589 : vector<8x32xf32>
    %591 = math.tanh %590 : vector<8x32xf32>
    %592 = arith.mulf %587, %591 : vector<8x32xf32>
    %c40_303 = arith.constant 40 : index
    %c0_304 = arith.constant 0 : index
    %593 = vector.load %arg20[%c40_303, %c0_304] : memref<64x32xf32, #tpu.memory_space<vmem>>, vector<8x32xf32>
    tpu.vector_store %arg20[%c40_303, %c0_304], %592 {strides = array<i32>} : memref<64x32xf32, #tpu.memory_space<vmem>>, vector<8x32xf32>,
    %c48_305 = arith.constant 48 : index
    %c0_306 = arith.constant 0 : index
    %594 = vector.load %arg21[%c48_305, %c0_306] : memref<64x128xf32, #tpu.memory_space<vmem>>, vector<8x128xf32>
    %595 = arith.truncf %592 : vector<8x32xf32> to vector<8x32xbf16>
    %cst_307 = arith.constant dense<0.000000e+00> : vector<8x128xf32>
    %596 = tpu.matmul %595, %415, %cst_307 {dimension_numbers = #tpu.dot_dimension_numbers<[1], [0], [0], [1], [0, 0, 1, 1], [], []>} : vector<8x32xbf16>, vector<32x128xbf16>, vector<8x128xf32> -> vector<8x128xf32>
    %597 = arith.addf %594, %596 : vector<8x128xf32>
    %598 = vector.extract_strided_slice %597 {offsets = [0, 0], sizes = [8, 32], strides = [1, 1]} : vector<8x128xf32> to vector<8x32xf32>
    %599 = arith.negf %598 : vector<8x32xf32>
    %600 = math.exp %599 : vector<8x32xf32>
    %cst_308 = arith.constant 1.000000e+00 : f32
    %601 = vector.broadcast %cst_308 : f32 to vector<8x32xf32>
    %602 = arith.addf %601, %600 : vector<8x32xf32>
    %603 = arith.divf %601, %602 : vector<8x32xf32>
    %604 = vector.extract_strided_slice %597 {offsets = [0, 32], sizes = [8, 32], strides = [1, 1]} : vector<8x128xf32> to vector<8x32xf32>
    %605 = arith.negf %604 : vector<8x32xf32>
    %606 = math.exp %605 : vector<8x32xf32>
    %cst_309 = arith.constant 1.000000e+00 : f32
    %607 = vector.broadcast %cst_309 : f32 to vector<8x32xf32>
    %608 = arith.addf %607, %606 : vector<8x32xf32>
    %609 = arith.divf %607, %608 : vector<8x32xf32>
    %610 = vector.extract_strided_slice %597 {offsets = [0, 64], sizes = [8, 32], strides = [1, 1]} : vector<8x128xf32> to vector<8x32xf32>
    %611 = math.tanh %610 : vector<8x32xf32>
    %612 = vector.extract_strided_slice %597 {offsets = [0, 96], sizes = [8, 32], strides = [1, 1]} : vector<8x128xf32> to vector<8x32xf32>
    %613 = arith.negf %612 : vector<8x32xf32>
    %614 = math.exp %613 : vector<8x32xf32>
    %cst_310 = arith.constant 1.000000e+00 : f32
    %615 = vector.broadcast %cst_310 : f32 to vector<8x32xf32>
    %616 = arith.addf %615, %614 : vector<8x32xf32>
    %617 = arith.divf %615, %616 : vector<8x32xf32>
    %618 = arith.mulf %609, %590 : vector<8x32xf32>
    %619 = arith.mulf %603, %611 : vector<8x32xf32>
    %620 = arith.addf %618, %619 : vector<8x32xf32>
    %621 = math.tanh %620 : vector<8x32xf32>
    %622 = arith.mulf %617, %621 : vector<8x32xf32>
    %c48_311 = arith.constant 48 : index
    %c0_312 = arith.constant 0 : index
    %623 = vector.load %arg20[%c48_311, %c0_312] : memref<64x32xf32, #tpu.memory_space<vmem>>, vector<8x32xf32>
    tpu.vector_store %arg20[%c48_311, %c0_312], %622 {strides = array<i32>} : memref<64x32xf32, #tpu.memory_space<vmem>>, vector<8x32xf32>,
    %c56_313 = arith.constant 56 : index
    %c0_314 = arith.constant 0 : index
    %624 = vector.load %arg21[%c56_313, %c0_314] : memref<64x128xf32, #tpu.memory_space<vmem>>, vector<8x128xf32>
    %625 = arith.truncf %622 : vector<8x32xf32> to vector<8x32xbf16>
    %cst_315 = arith.constant dense<0.000000e+00> : vector<8x128xf32>
    %626 = tpu.matmul %625, %415, %cst_315 {dimension_numbers = #tpu.dot_dimension_numbers<[1], [0], [0], [1], [0, 0, 1, 1], [], []>} : vector<8x32xbf16>, vector<32x128xbf16>, vector<8x128xf32> -> vector<8x128xf32>
    %627 = arith.addf %624, %626 : vector<8x128xf32>
    %628 = vector.extract_strided_slice %627 {offsets = [0, 0], sizes = [8, 32], strides = [1, 1]} : vector<8x128xf32> to vector<8x32xf32>
    %629 = arith.negf %628 : vector<8x32xf32>
    %630 = math.exp %629 : vector<8x32xf32>
    %cst_316 = arith.constant 1.000000e+00 : f32
    %631 = vector.broadcast %cst_316 : f32 to vector<8x32xf32>
    %632 = arith.addf %631, %630 : vector<8x32xf32>
    %633 = arith.divf %631, %632 : vector<8x32xf32>
    %634 = vector.extract_strided_slice %627 {offsets = [0, 32], sizes = [8, 32], strides = [1, 1]} : vector<8x128xf32> to vector<8x32xf32>
    %635 = arith.negf %634 : vector<8x32xf32>
    %636 = math.exp %635 : vector<8x32xf32>
    %cst_317 = arith.constant 1.000000e+00 : f32
    %637 = vector.broadcast %cst_317 : f32 to vector<8x32xf32>
    %638 = arith.addf %637, %636 : vector<8x32xf32>
    %639 = arith.divf %637, %638 : vector<8x32xf32>
    %640 = vector.extract_strided_slice %627 {offsets = [0, 64], sizes = [8, 32], strides = [1, 1]} : vector<8x128xf32> to vector<8x32xf32>
    %641 = math.tanh %640 : vector<8x32xf32>
    %642 = vector.extract_strided_slice %627 {offsets = [0, 96], sizes = [8, 32], strides = [1, 1]} : vector<8x128xf32> to vector<8x32xf32>
    %643 = arith.negf %642 : vector<8x32xf32>
    %644 = math.exp %643 : vector<8x32xf32>
    %cst_318 = arith.constant 1.000000e+00 : f32
    %645 = vector.broadcast %cst_318 : f32 to vector<8x32xf32>
    %646 = arith.addf %645, %644 : vector<8x32xf32>
    %647 = arith.divf %645, %646 : vector<8x32xf32>
    %648 = arith.mulf %639, %620 : vector<8x32xf32>
    %649 = arith.mulf %633, %641 : vector<8x32xf32>
    %650 = arith.addf %648, %649 : vector<8x32xf32>
    %651 = math.tanh %650 : vector<8x32xf32>
    %652 = arith.mulf %647, %651 : vector<8x32xf32>
    %c56_319 = arith.constant 56 : index
    %c0_320 = arith.constant 0 : index
    %653 = vector.load %arg20[%c56_319, %c0_320] : memref<64x32xf32, #tpu.memory_space<vmem>>, vector<8x32xf32>
    tpu.vector_store %arg20[%c56_319, %c0_320], %652 {strides = array<i32>} : memref<64x32xf32, #tpu.memory_space<vmem>>, vector<8x32xf32>,
    %c0_321 = arith.constant 0 : index
    %c0_322 = arith.constant 0 : index
    %654 = vector.load %arg20[%c0_321, %c0_322] : memref<64x32xf32, #tpu.memory_space<vmem>>, vector<64x32xf32>
    %655 = arith.truncf %654 : vector<64x32xf32> to vector<64x32xbf16>
    %656 = vector.extract_strided_slice %654 {offsets = [56, 0], sizes = [8, 32], strides = [1, 1]} : vector<64x32xf32> to vector<8x32xf32>
    %657 = arith.truncf %656 : vector<8x32xf32> to vector<8x32xbf16>
    %c0_323 = arith.constant 0 : index
    %c0_324 = arith.constant 0 : index
    %658 = vector.load %arg8[%c0_323, %c0_324] : memref<32x16xbf16, #tpu.memory_space<vmem>>, vector<32x16xbf16>
    %cst_325 = arith.constant dense<0.000000e+00> : vector<64x16xf32>
    %659 = tpu.matmul %655, %658, %cst_325 {dimension_numbers = #tpu.dot_dimension_numbers<[1], [0], [0], [1], [0, 0, 1, 1], [], []>} : vector<64x32xbf16>, vector<32x16xbf16>, vector<64x16xf32> -> vector<64x16xf32>
    %c0_326 = arith.constant 0 : index
    %c0_327 = arith.constant 0 : index
    %660 = vector.load %arg9[%c0_326, %c0_327] : memref<1x16xf32, #tpu.memory_space<vmem>>, vector<1x16xf32>
    %661 = vector.broadcast %660 : vector<1x16xf32> to vector<64x16xf32>
    %662 = arith.addf %659, %661 : vector<64x16xf32>
    %c0_328 = arith.constant 0 : index
    %c0_329 = arith.constant 0 : index
    %663 = vector.load %arg10[%c0_328, %c0_329] : memref<32x16xbf16, #tpu.memory_space<vmem>>, vector<32x16xbf16>
    %cst_330 = arith.constant dense<0.000000e+00> : vector<8x16xf32>
    %664 = tpu.matmul %657, %663, %cst_330 {dimension_numbers = #tpu.dot_dimension_numbers<[1], [0], [0], [1], [0, 0, 1, 1], [], []>} : vector<8x32xbf16>, vector<32x16xbf16>, vector<8x16xf32> -> vector<8x16xf32>
    %c0_331 = arith.constant 0 : index
    %c0_332 = arith.constant 0 : index
    %665 = vector.load %arg11[%c0_331, %c0_332] : memref<1x16xf32, #tpu.memory_space<vmem>>, vector<1x16xf32>
    %666 = vector.broadcast %665 : vector<1x16xf32> to vector<8x16xf32>
    %667 = arith.addf %664, %666 : vector<8x16xf32>
    %c0_333 = arith.constant 0 : index
    %c0_334 = arith.constant 0 : index
    %668 = vector.load %arg12[%c0_333, %c0_334] : memref<1x16xf32, #tpu.memory_space<vmem>>, vector<1x16xf32>
    %669 = vector.extract_strided_slice %662 {offsets = [0, 0], sizes = [8, 16], strides = [1, 1]} : vector<64x16xf32> to vector<8x16xf32>
    %670 = arith.addf %669, %667 : vector<8x16xf32>
    %671 = math.tanh %670 : vector<8x16xf32>
    %672 = vector.broadcast %668 : vector<1x16xf32> to vector<8x16xf32>
    %673 = arith.mulf %671, %672 : vector<8x16xf32>
    %cst_335 = arith.constant dense<0.000000e+00> : vector<8xf32>
    %674 = vector.multi_reduction <add>, %673, %cst_335 [1] : vector<8x16xf32> to vector<8xf32>
    %675 = vector.shape_cast %674 : vector<8xf32> to vector<8x1xf32>
    %676 = vector.extract_strided_slice %662 {offsets = [8, 0], sizes = [8, 16], strides = [1, 1]} : vector<64x16xf32> to vector<8x16xf32>
    %677 = arith.addf %676, %667 : vector<8x16xf32>
    %678 = math.tanh %677 : vector<8x16xf32>
    %679 = vector.broadcast %668 : vector<1x16xf32> to vector<8x16xf32>
    %680 = arith.mulf %678, %679 : vector<8x16xf32>
    %cst_336 = arith.constant dense<0.000000e+00> : vector<8xf32>
    %681 = vector.multi_reduction <add>, %680, %cst_336 [1] : vector<8x16xf32> to vector<8xf32>
    %682 = vector.shape_cast %681 : vector<8xf32> to vector<8x1xf32>
    %683 = vector.extract_strided_slice %662 {offsets = [16, 0], sizes = [8, 16], strides = [1, 1]} : vector<64x16xf32> to vector<8x16xf32>
    %684 = arith.addf %683, %667 : vector<8x16xf32>
    %685 = math.tanh %684 : vector<8x16xf32>
    %686 = vector.broadcast %668 : vector<1x16xf32> to vector<8x16xf32>
    %687 = arith.mulf %685, %686 : vector<8x16xf32>
    %cst_337 = arith.constant dense<0.000000e+00> : vector<8xf32>
    %688 = vector.multi_reduction <add>, %687, %cst_337 [1] : vector<8x16xf32> to vector<8xf32>
    %689 = vector.shape_cast %688 : vector<8xf32> to vector<8x1xf32>
    %690 = vector.extract_strided_slice %662 {offsets = [24, 0], sizes = [8, 16], strides = [1, 1]} : vector<64x16xf32> to vector<8x16xf32>
    %691 = arith.addf %690, %667 : vector<8x16xf32>
    %692 = math.tanh %691 : vector<8x16xf32>
    %693 = vector.broadcast %668 : vector<1x16xf32> to vector<8x16xf32>
    %694 = arith.mulf %692, %693 : vector<8x16xf32>
    %cst_338 = arith.constant dense<0.000000e+00> : vector<8xf32>
    %695 = vector.multi_reduction <add>, %694, %cst_338 [1] : vector<8x16xf32> to vector<8xf32>
    %696 = vector.shape_cast %695 : vector<8xf32> to vector<8x1xf32>
    %697 = vector.extract_strided_slice %662 {offsets = [32, 0], sizes = [8, 16], strides = [1, 1]} : vector<64x16xf32> to vector<8x16xf32>
    %698 = arith.addf %697, %667 : vector<8x16xf32>
    %699 = math.tanh %698 : vector<8x16xf32>
    %700 = vector.broadcast %668 : vector<1x16xf32> to vector<8x16xf32>
    %701 = arith.mulf %699, %700 : vector<8x16xf32>
    %cst_339 = arith.constant dense<0.000000e+00> : vector<8xf32>
    %702 = vector.multi_reduction <add>, %701, %cst_339 [1] : vector<8x16xf32> to vector<8xf32>
    %703 = vector.shape_cast %702 : vector<8xf32> to vector<8x1xf32>
    %704 = vector.extract_strided_slice %662 {offsets = [40, 0], sizes = [8, 16], strides = [1, 1]} : vector<64x16xf32> to vector<8x16xf32>
    %705 = arith.addf %704, %667 : vector<8x16xf32>
    %706 = math.tanh %705 : vector<8x16xf32>
    %707 = vector.broadcast %668 : vector<1x16xf32> to vector<8x16xf32>
    %708 = arith.mulf %706, %707 : vector<8x16xf32>
    %cst_340 = arith.constant dense<0.000000e+00> : vector<8xf32>
    %709 = vector.multi_reduction <add>, %708, %cst_340 [1] : vector<8x16xf32> to vector<8xf32>
    %710 = vector.shape_cast %709 : vector<8xf32> to vector<8x1xf32>
    %711 = vector.extract_strided_slice %662 {offsets = [48, 0], sizes = [8, 16], strides = [1, 1]} : vector<64x16xf32> to vector<8x16xf32>
    %712 = arith.addf %711, %667 : vector<8x16xf32>
    %713 = math.tanh %712 : vector<8x16xf32>
    %714 = vector.broadcast %668 : vector<1x16xf32> to vector<8x16xf32>
    %715 = arith.mulf %713, %714 : vector<8x16xf32>
    %cst_341 = arith.constant dense<0.000000e+00> : vector<8xf32>
    %716 = vector.multi_reduction <add>, %715, %cst_341 [1] : vector<8x16xf32> to vector<8xf32>
    %717 = vector.shape_cast %716 : vector<8xf32> to vector<8x1xf32>
    %718 = vector.extract_strided_slice %662 {offsets = [56, 0], sizes = [8, 16], strides = [1, 1]} : vector<64x16xf32> to vector<8x16xf32>
    %719 = arith.addf %718, %667 : vector<8x16xf32>
    %720 = math.tanh %719 : vector<8x16xf32>
    %721 = vector.broadcast %668 : vector<1x16xf32> to vector<8x16xf32>
    %722 = arith.mulf %720, %721 : vector<8x16xf32>
    %cst_342 = arith.constant dense<0.000000e+00> : vector<8xf32>
    %723 = vector.multi_reduction <add>, %722, %cst_342 [1] : vector<8x16xf32> to vector<8xf32>
    %724 = vector.shape_cast %723 : vector<8xf32> to vector<8x1xf32>
    %725 = arith.maximumf %675, %682 : vector<8x1xf32>
    %726 = arith.maximumf %689, %696 : vector<8x1xf32>
    %727 = arith.maximumf %703, %710 : vector<8x1xf32>
    %728 = arith.maximumf %717, %724 : vector<8x1xf32>
    %729 = arith.maximumf %725, %726 : vector<8x1xf32>
    %730 = arith.maximumf %727, %728 : vector<8x1xf32>
    %731 = arith.maximumf %729, %730 : vector<8x1xf32>
    %732 = arith.subf %675, %731 : vector<8x1xf32>
    %733 = math.exp %732 : vector<8x1xf32>
    %734 = arith.subf %682, %731 : vector<8x1xf32>
    %735 = math.exp %734 : vector<8x1xf32>
    %736 = arith.subf %689, %731 : vector<8x1xf32>
    %737 = math.exp %736 : vector<8x1xf32>
    %738 = arith.subf %696, %731 : vector<8x1xf32>
    %739 = math.exp %738 : vector<8x1xf32>
    %740 = arith.subf %703, %731 : vector<8x1xf32>
    %741 = math.exp %740 : vector<8x1xf32>
    %742 = arith.subf %710, %731 : vector<8x1xf32>
    %743 = math.exp %742 : vector<8x1xf32>
    %744 = arith.subf %717, %731 : vector<8x1xf32>
    %745 = math.exp %744 : vector<8x1xf32>
    %746 = arith.subf %724, %731 : vector<8x1xf32>
    %747 = math.exp %746 : vector<8x1xf32>
    %748 = arith.addf %733, %735 : vector<8x1xf32>
    %749 = arith.addf %737, %739 : vector<8x1xf32>
    %750 = arith.addf %741, %743 : vector<8x1xf32>
    %751 = arith.addf %745, %747 : vector<8x1xf32>
    %752 = arith.addf %748, %749 : vector<8x1xf32>
    %753 = arith.addf %750, %751 : vector<8x1xf32>
    %754 = arith.addf %752, %753 : vector<8x1xf32>
    %755 = tpu.reciprocal %754 {approx = true} : vector<8x1xf32> -> vector<8x1xf32>
    %756 = arith.mulf %733, %755 : vector<8x1xf32>
    %757 = vector.extract_strided_slice %654 {offsets = [0, 0], sizes = [8, 32], strides = [1, 1]} : vector<64x32xf32> to vector<8x32xf32>
    %758 = vector.broadcast %756 : vector<8x1xf32> to vector<8x32xf32>
    %759 = arith.mulf %758, %757 : vector<8x32xf32>
    %760 = arith.mulf %735, %755 : vector<8x1xf32>
    %761 = vector.extract_strided_slice %654 {offsets = [8, 0], sizes = [8, 32], strides = [1, 1]} : vector<64x32xf32> to vector<8x32xf32>
    %762 = vector.broadcast %760 : vector<8x1xf32> to vector<8x32xf32>
    %763 = arith.mulf %762, %761 : vector<8x32xf32>
    %764 = arith.mulf %737, %755 : vector<8x1xf32>
    %765 = vector.extract_strided_slice %654 {offsets = [16, 0], sizes = [8, 32], strides = [1, 1]} : vector<64x32xf32> to vector<8x32xf32>
    %766 = vector.broadcast %764 : vector<8x1xf32> to vector<8x32xf32>
    %767 = arith.mulf %766, %765 : vector<8x32xf32>
    %768 = arith.mulf %739, %755 : vector<8x1xf32>
    %769 = vector.extract_strided_slice %654 {offsets = [24, 0], sizes = [8, 32], strides = [1, 1]} : vector<64x32xf32> to vector<8x32xf32>
    %770 = vector.broadcast %768 : vector<8x1xf32> to vector<8x32xf32>
    %771 = arith.mulf %770, %769 : vector<8x32xf32>
    %772 = arith.mulf %741, %755 : vector<8x1xf32>
    %773 = vector.extract_strided_slice %654 {offsets = [32, 0], sizes = [8, 32], strides = [1, 1]} : vector<64x32xf32> to vector<8x32xf32>
    %774 = vector.broadcast %772 : vector<8x1xf32> to vector<8x32xf32>
    %775 = arith.mulf %774, %773 : vector<8x32xf32>
    %776 = arith.mulf %743, %755 : vector<8x1xf32>
    %777 = vector.extract_strided_slice %654 {offsets = [40, 0], sizes = [8, 32], strides = [1, 1]} : vector<64x32xf32> to vector<8x32xf32>
    %778 = vector.broadcast %776 : vector<8x1xf32> to vector<8x32xf32>
    %779 = arith.mulf %778, %777 : vector<8x32xf32>
    %780 = arith.mulf %745, %755 : vector<8x1xf32>
    %781 = vector.extract_strided_slice %654 {offsets = [48, 0], sizes = [8, 32], strides = [1, 1]} : vector<64x32xf32> to vector<8x32xf32>
    %782 = vector.broadcast %780 : vector<8x1xf32> to vector<8x32xf32>
    %783 = arith.mulf %782, %781 : vector<8x32xf32>
    %784 = arith.mulf %747, %755 : vector<8x1xf32>
    %785 = vector.extract_strided_slice %654 {offsets = [56, 0], sizes = [8, 32], strides = [1, 1]} : vector<64x32xf32> to vector<8x32xf32>
    %786 = vector.broadcast %784 : vector<8x1xf32> to vector<8x32xf32>
    %787 = arith.mulf %786, %785 : vector<8x32xf32>
    %788 = arith.addf %759, %763 : vector<8x32xf32>
    %789 = arith.addf %767, %771 : vector<8x32xf32>
    %790 = arith.addf %775, %779 : vector<8x32xf32>
    %791 = arith.addf %783, %787 : vector<8x32xf32>
    %792 = arith.addf %788, %789 : vector<8x32xf32>
    %793 = arith.addf %790, %791 : vector<8x32xf32>
    %794 = arith.addf %792, %793 : vector<8x32xf32>
    %795 = arith.truncf %794 : vector<8x32xf32> to vector<8x32xbf16>
    %c0_343 = arith.constant 0 : index
    %c0_344 = arith.constant 0 : index
    %796 = vector.load %arg13[%c0_343, %c0_344] : memref<32x32xbf16, #tpu.memory_space<vmem>>, vector<32x32xbf16>
    %cst_345 = arith.constant dense<0.000000e+00> : vector<8x32xf32>
    %797 = tpu.matmul %795, %796, %cst_345 {dimension_numbers = #tpu.dot_dimension_numbers<[1], [0], [0], [1], [0, 0, 1, 1], [], []>} : vector<8x32xbf16>, vector<32x32xbf16>, vector<8x32xf32> -> vector<8x32xf32>
    %c0_346 = arith.constant 0 : index
    %c0_347 = arith.constant 0 : index
    %798 = vector.load %arg14[%c0_346, %c0_347] : memref<32x32xbf16, #tpu.memory_space<vmem>>, vector<32x32xbf16>
    %cst_348 = arith.constant dense<0.000000e+00> : vector<8x32xf32>
    %799 = tpu.matmul %657, %798, %cst_348 {dimension_numbers = #tpu.dot_dimension_numbers<[1], [0], [0], [1], [0, 0, 1, 1], [], []>} : vector<8x32xbf16>, vector<32x32xbf16>, vector<8x32xf32> -> vector<8x32xf32>
    %800 = arith.addf %797, %799 : vector<8x32xf32>
    %c0_349 = arith.constant 0 : index
    %c0_350 = arith.constant 0 : index
    %801 = vector.load %arg15[%c0_349, %c0_350] : memref<1x32xf32, #tpu.memory_space<vmem>>, vector<1x32xf32>
    %802 = vector.broadcast %801 : vector<1x32xf32> to vector<8x32xf32>
    %803 = arith.addf %800, %802 : vector<8x32xf32>
    %804 = math.tanh %803 : vector<8x32xf32>
    %805 = arith.truncf %804 : vector<8x32xf32> to vector<8x32xbf16>
    %c0_351 = arith.constant 0 : index
    %c0_352 = arith.constant 0 : index
    %806 = vector.load %arg16[%c0_351, %c0_352] : memref<32x4xbf16, #tpu.memory_space<vmem>>, vector<32x4xbf16>
    %cst_353 = arith.constant dense<0.000000e+00> : vector<8x4xf32>
    %807 = tpu.matmul %805, %806, %cst_353 {dimension_numbers = #tpu.dot_dimension_numbers<[1], [0], [0], [1], [0, 0, 1, 1], [], []>} : vector<8x32xbf16>, vector<32x4xbf16>, vector<8x4xf32> -> vector<8x4xf32>
    %c0_354 = arith.constant 0 : index
    %c0_355 = arith.constant 0 : index
    %808 = vector.load %arg17[%c0_354, %c0_355] : memref<1x4xf32, #tpu.memory_space<vmem>>, vector<1x4xf32>
    %809 = vector.broadcast %808 : vector<1x4xf32> to vector<8x4xf32>
    %810 = arith.addf %807, %809 : vector<8x4xf32>
    %c0_356 = arith.constant 0 : index
    %c0_357 = arith.constant 0 : index
    %811 = vector.load %arg18[%c0_356, %c0_357] : memref<8x4xf32, #tpu.memory_space<vmem>>, vector<8x4xf32>
    tpu.vector_store %arg18[%c0_356, %c0_357], %810 {strides = array<i32>} : memref<8x4xf32, #tpu.memory_space<vmem>>, vector<8x4xf32>,
    return
  }
}

</mosaic_0001>

<llo_original>
// kernel: attention_lstm_forward.1
$region0: #{attention_lstm_forward.1}
  #allocation0 [shape = 'u32[]', space=smem, size = 0x4, offset = 0x4, fixed_abs, tag = 'smem constant byte address 0x4 - core index']
  #allocation1 [shape = 'u32[72,128]{1,0:T(1,128)}', space=vmem, size = 0x9000, scoped, tag = 'internal scratch']
  #allocation2 [shape = 'f32[64,16]{1,0:T(8,128)}', space=vmem, size = 0x8000, scoped, tag = 'scratch operand']
  #allocation3 [shape = 'f32[64,32]{1,0:T(8,128)}', space=vmem, size = 0x8000, scoped, tag = 'scratch operand']
  #allocation4 [shape = 'f32[64,128]{1,0:T(8,128)}', space=vmem, size = 0x8000, scoped, tag = 'scratch operand']
  #allocation5 [shape = 's32[16]{0}', space=sflag, size = 0x40, scoped, tag = 'scratch operand']
  #allocation8 [shape = 's32[]', space=sflag, size = 0x4, offset = 0, fixed_abs, tag = 'sflag constant byte address 0x0 - dummy sync flag']
  #allocation9 [shape = 's32[]', space=sflag, size = 0x4, offset = 0, fixed_abs, tag = 'sflag constant byte address 0x0 - dummy sync flag']
  #allocation10 [shape = 's32[]', space=sflag, size = 0x4, offset = 0, fixed_abs, tag = 'sflag constant byte address 0x0 - dummy sync flag']
  #allocation11 [shape = 's32[]', space=sflag, size = 0x4, offset = 0, fixed_abs, tag = 'sflag constant byte address 0x0 - dummy sync flag']
  #allocation12 [shape = 's32[]', space=sflag, size = 0x4, offset = 0, fixed_abs, tag = 'sflag constant byte address 0x0 - dummy sync flag']
  #allocation13 [shape = 's32[]', space=sflag, size = 0x4, offset = 0, fixed_abs, tag = 'sflag constant byte address 0x0 - dummy sync flag']
  #allocation14 [shape = 's32[]', space=sflag, size = 0x4, offset = 0, fixed_abs, tag = 'sflag constant byte address 0x0 - dummy sync flag']
  #allocation15 [shape = 's32[]', space=sflag, size = 0x4, offset = 0, fixed_abs, tag = 'sflag constant byte address 0x0 - dummy sync flag']
  #allocation16 [shape = 's32[]', space=sflag, size = 0x4, offset = 0, fixed_abs, tag = 'sflag constant byte address 0x0 - dummy sync flag']
  #allocation17 [shape = 's32[]', space=sflag, size = 0x4, offset = 0, fixed_abs, tag = 'sflag constant byte address 0x0 - dummy sync flag']
  #allocation18 [shape = 's32[]', space=sflag, size = 0x4, offset = 0, fixed_abs, tag = 'sflag constant byte address 0x0 - dummy sync flag']
  #allocation19 [shape = 's32[]', space=sflag, size = 0x4, offset = 0, fixed_abs, tag = 'sflag constant byte address 0x0 - dummy sync flag']
  #allocation20 [shape = 's32[]', space=sflag, size = 0x4, offset = 0, fixed_abs, tag = 'sflag constant byte address 0x0 - dummy sync flag']
  #allocation21 [shape = 's32[]', space=sflag, size = 0x4, offset = 0, fixed_abs, tag = 'sflag constant byte address 0x0 - dummy sync flag']
  #allocation22 [shape = 's32[]', space=sflag, size = 0x4, offset = 0, fixed_abs, tag = 'sflag constant byte address 0x0 - dummy sync flag']
  #allocation23 [shape = 's32[]', space=sflag, size = 0x4, offset = 0, fixed_abs, tag = 'sflag constant byte address 0x0 - dummy sync flag']
  %s0 = inlined_call_operand.vmem [shape: s32[2,8], index: 0, kind: input, shape index: {}]
  %s1 = inlined_call_operand.vmem [shape: f32[50,16], index: 1, kind: input, shape index: {}]
  %s2 = inlined_call_operand.vmem [shape: bf16[16,128], index: 2, kind: input, shape index: {}]
  %s3 = inlined_call_operand.vmem [shape: bf16[32,128], index: 3, kind: input, shape index: {}]
  %s4 = inlined_call_operand.vmem [shape: f32[1,128], index: 4, kind: input, shape index: {}]
  %s5 = inlined_call_operand.vmem [shape: bf16[32,128], index: 5, kind: input, shape index: {}]
  %s6 = inlined_call_operand.vmem [shape: bf16[32,128], index: 6, kind: input, shape index: {}]
  %s7 = inlined_call_operand.vmem [shape: f32[1,128], index: 7, kind: input, shape index: {}]
  %s8 = inlined_call_operand.vmem [shape: bf16[32,16], index: 8, kind: input, shape index: {}]
  %s9 = inlined_call_operand.vmem [shape: f32[1,16], index: 9, kind: input, shape index: {}]
  %s10 = inlined_call_operand.vmem [shape: bf16[32,16], index: 10, kind: input, shape index: {}]
  %s11 = inlined_call_operand.vmem [shape: f32[1,16], index: 11, kind: input, shape index: {}]
  %s12 = inlined_call_operand.vmem [shape: f32[1,16], index: 12, kind: input, shape index: {}]
  %s13 = inlined_call_operand.vmem [shape: bf16[32,32], index: 13, kind: input, shape index: {}]
  %s14 = inlined_call_operand.vmem [shape: bf16[32,32], index: 14, kind: input, shape index: {}]
  %s15 = inlined_call_operand.vmem [shape: f32[1,32], index: 15, kind: input, shape index: {}]
  %s16 = inlined_call_operand.vmem [shape: bf16[32,4], index: 16, kind: input, shape index: {}]
  %s17 = inlined_call_operand.vmem [shape: f32[1,4], index: 17, kind: input, shape index: {}]
  %s18 = inlined_call_operand.vmem [shape: f32[8,4], index: 18, kind: output, shape index: {}]
  %s19 = sld [smem:[#allocation0]]
  $region562: #{attention_lstm_forward.1} parent=0
    _
  %s21 = ssub.s32 1, %s19
  %s22 = scalar_select 0, %s21, %s19
  $region1: #{attention_lstm_forward.1} parent=0
    #allocation6 [shape = 'u8[1024]{0}', space=smem, size = 0x400, scoped, tag = 'input window, operand 0, single buffered']
    #allocation7 [shape = 's32[1]{0}', space=sflag, size = 0x4, scoped, tag = 'scoped memory for attention_lstm_forward.1']
    %23 = vsyncpa [#allocation7], 0
    // Predicated region
    $region2: #{attention_lstm_forward.1} parent=1 // pred_check
      _
    $region3: #{attention_lstm_forward.1} parent=1 // pred_check_branch
      %25 = sbr.rel (0) target = $region5
    $region4: #{attention_lstm_forward.1} parent=1 // pred_region
      %27 = vsyncadd [#allocation7], 0
      %s29 = sshll.u32 %s0, 4
      %s30 = int_to_ptr.vmem [resolvable:$true] %s29
      %32 = dma.vmem_to_smem %s30, 32, [#allocation6], [#allocation7]
    $region5: #{attention_lstm_forward.1} parent=1 // pred_fallthru
      _
    // Predicated region
    $region6: #{attention_lstm_forward.1} parent=1 // pred_check
      _
    $region7: #{attention_lstm_forward.1} parent=1 // pred_check_branch
      %34 = sbr.rel (0) target = $region9
    $region8: #{attention_lstm_forward.1} parent=1 // pred_region
      _
    $region9: #{attention_lstm_forward.1} parent=1 // pred_fallthru
      _
    // Predicated region
    $region10: #{attention_lstm_forward.1} parent=1 // pred_check
      _
    $region11: #{attention_lstm_forward.1} parent=1 // pred_check_branch
      %36 = sbr.rel (0) target = $region13
    $region12: #{attention_lstm_forward.1} parent=1 // pred_region
      _
    $region13: #{attention_lstm_forward.1} parent=1 // pred_fallthru
      _
    // Predicated region
    $region14: #{attention_lstm_forward.1} parent=1 // pred_check
      _
    $region15: #{attention_lstm_forward.1} parent=1 // pred_check_branch
      %38 = sbr.rel (0) target = $region17
    $region16: #{attention_lstm_forward.1} parent=1 // pred_region
      _
    $region17: #{attention_lstm_forward.1} parent=1 // pred_fallthru
      _
    // Predicated region
    $region18: #{attention_lstm_forward.1} parent=1 // pred_check
      _
    $region19: #{attention_lstm_forward.1} parent=1 // pred_check_branch
      %40 = sbr.rel (0) target = $region21
    $region20: #{attention_lstm_forward.1} parent=1 // pred_region
      _
    $region21: #{attention_lstm_forward.1} parent=1 // pred_fallthru
      _
    // Predicated region
    $region22: #{attention_lstm_forward.1} parent=1 // pred_check
      _
    $region23: #{attention_lstm_forward.1} parent=1 // pred_check_branch
      %42 = sbr.rel (0) target = $region25
    $region24: #{attention_lstm_forward.1} parent=1 // pred_region
      _
    $region25: #{attention_lstm_forward.1} parent=1 // pred_fallthru
      _
    // Predicated region
    $region26: #{attention_lstm_forward.1} parent=1 // pred_check
      _
    $region27: #{attention_lstm_forward.1} parent=1 // pred_check_branch
      %44 = sbr.rel (0) target = $region29
    $region28: #{attention_lstm_forward.1} parent=1 // pred_region
      _
    $region29: #{attention_lstm_forward.1} parent=1 // pred_fallthru
      _
    // Predicated region
    $region30: #{attention_lstm_forward.1} parent=1 // pred_check
      _
    $region31: #{attention_lstm_forward.1} parent=1 // pred_check_branch
      %46 = sbr.rel (0) target = $region33
    $region32: #{attention_lstm_forward.1} parent=1 // pred_region
      _
    $region33: #{attention_lstm_forward.1} parent=1 // pred_fallthru
      _
    // Predicated region
    $region34: #{attention_lstm_forward.1} parent=1 // pred_check
      _
    $region35: #{attention_lstm_forward.1} parent=1 // pred_check_branch
      %48 = sbr.rel (0) target = $region37
    $region36: #{attention_lstm_forward.1} parent=1 // pred_region
      _
    $region37: #{attention_lstm_forward.1} parent=1 // pred_fallthru
      _
    // Predicated region
    $region38: #{attention_lstm_forward.1} parent=1 // pred_check
      _
    $region39: #{attention_lstm_forward.1} parent=1 // pred_check_branch
      %50 = sbr.rel (0) target = $region41
    $region40: #{attention_lstm_forward.1} parent=1 // pred_region
      _
    $region41: #{attention_lstm_forward.1} parent=1 // pred_fallthru
      _
    // Predicated region
    $region42: #{attention_lstm_forward.1} parent=1 // pred_check
      _
    $region43: #{attention_lstm_forward.1} parent=1 // pred_check_branch
      %52 = sbr.rel (0) target = $region45
    $region44: #{attention_lstm_forward.1} parent=1 // pred_region
      _
    $region45: #{attention_lstm_forward.1} parent=1 // pred_fallthru
      _
    // Predicated region
    $region46: #{attention_lstm_forward.1} parent=1 // pred_check
      _
    $region47: #{attention_lstm_forward.1} parent=1 // pred_check_branch
      %54 = sbr.rel (0) target = $region49
    $region48: #{attention_lstm_forward.1} parent=1 // pred_region
      _
    $region49: #{attention_lstm_forward.1} parent=1 // pred_fallthru
      _
    // Predicated region
    $region50: #{attention_lstm_forward.1} parent=1 // pred_check
      _
    $region51: #{attention_lstm_forward.1} parent=1 // pred_check_branch
      %56 = sbr.rel (0) target = $region53
    $region52: #{attention_lstm_forward.1} parent=1 // pred_region
      _
    $region53: #{attention_lstm_forward.1} parent=1 // pred_fallthru
      _
    // Predicated region
    $region54: #{attention_lstm_forward.1} parent=1 // pred_check
      _
    $region55: #{attention_lstm_forward.1} parent=1 // pred_check_branch
      %58 = sbr.rel (0) target = $region57
    $region56: #{attention_lstm_forward.1} parent=1 // pred_region
      _
    $region57: #{attention_lstm_forward.1} parent=1 // pred_fallthru
      _
    // Predicated region
    $region58: #{attention_lstm_forward.1} parent=1 // pred_check
      _
    $region59: #{attention_lstm_forward.1} parent=1 // pred_check_branch
      %60 = sbr.rel (0) target = $region61
    $region60: #{attention_lstm_forward.1} parent=1 // pred_region
      _
    $region61: #{attention_lstm_forward.1} parent=1 // pred_fallthru
      _
    // Predicated region
    $region62: #{attention_lstm_forward.1} parent=1 // pred_check
      _
    $region63: #{attention_lstm_forward.1} parent=1 // pred_check_branch
      %62 = sbr.rel (0) target = $region65
    $region64: #{attention_lstm_forward.1} parent=1 // pred_region
      _
    $region65: #{attention_lstm_forward.1} parent=1 // pred_fallthru
      _
    // Predicated region
    $region66: #{attention_lstm_forward.1} parent=1 // pred_check
      _
    $region67: #{attention_lstm_forward.1} parent=1 // pred_check_branch
      %64 = sbr.rel (0) target = $region69
    $region68: #{attention_lstm_forward.1} parent=1 // pred_region
      _
    $region69: #{attention_lstm_forward.1} parent=1 // pred_fallthru
      _
    // Predicated region
    $region70: #{attention_lstm_forward.1} parent=1 // pred_check
      _
    $region71: #{attention_lstm_forward.1} parent=1 // pred_check_branch
      %66 = sbr.rel (0) target = $region73
    $region72: #{attention_lstm_forward.1} parent=1 // pred_region
      %68 = dma.done [#allocation7], 32
    $region73: #{attention_lstm_forward.1} parent=1 // pred_fallthru
      _
    %69 = sfence
    %s71 = sld [smem:[#allocation6]]
    %s72 = scalar_lea.vmem %s1, %s71
    // Predicated region
    $region74: #{attention_lstm_forward.1} parent=1 // pred_check
      _
    $region75: #{attention_lstm_forward.1} parent=1 // pred_check_branch
      %74 = sbr.rel target = $region77
    $region76: #{attention_lstm_forward.1} parent=1 // pred_region
      // Predicated region
      $region89: #{attention_lstm_forward.1} parent=76 // pred_check
        _
      $region90: #{attention_lstm_forward.1} parent=76 // pred_check_branch
        %90 = sbr.rel (0) target = $region92
      $region91: #{attention_lstm_forward.1} parent=76 // pred_region
        %s92 = ssub.s32 2, 1
        loop: start=0, step=1, limit=1
        $region93: #{attention_lstm_forward.1} parent=91 // loop_pre_header
          _
        $region94: #{attention_lstm_forward.1} parent=91 // loop_header
          %s94 = sphi 0, %s98
          %p95 = scmp.ge.s32.totalorder %s94, 1
          %s99 = sphi %s72, %s72
          %s100 = sphi [#allocation2], [#allocation2]
        $region95: #{attention_lstm_forward.1} parent=91 // loop_header_branch
          %97 = sbr.rel (%p95) target = $region99
        $region96: #{attention_lstm_forward.1} parent=91 // loop_body
          %v101 = vld [vmem:[%s99] sm:%s92]
          %102 = vst [vmem:[%s100] sm:%s92] %v101
        $region97: #{attention_lstm_forward.1} parent=91 // loop_footer
          %s98 = sadd.s32 1, %s94
        $region98: #{attention_lstm_forward.1} parent=91 // loop_footer_branch
          %93 = sbr.rel target = $region94
        $region99: #{attention_lstm_forward.1} parent=91 // loop_exit
          _
      $region92: #{attention_lstm_forward.1} parent=76 // pred_fallthru
        _
    $region77: #{attention_lstm_forward.1} parent=1 // pred_fallthru
      _
    // Predicated region
    $region78: #{attention_lstm_forward.1} parent=1 // pred_check
      _
    $region79: #{attention_lstm_forward.1} parent=1 // pred_check_branch
      %76 = sbr.rel (0) target = $region81
    $region80: #{attention_lstm_forward.1} parent=1 // pred_region
      %s78 = ssub.s32 2, 1
      loop: start=0, step=1, limit=1
      $region82: #{attention_lstm_forward.1} parent=80 // loop_pre_header
        _
      $region83: #{attention_lstm_forward.1} parent=80 // loop_header
        %s80 = sphi 0, %s84
        %p81 = scmp.ge.s32.totalorder %s80, 1
        %s85 = sphi %s72, %s72
        %s86 = sphi [#allocation2], [#allocation2]
      $region84: #{attention_lstm_forward.1} parent=80 // loop_header_branch
        %83 = sbr.rel (%p81) target = $region88
      $region85: #{attention_lstm_forward.1} parent=80 // loop_body
        %v87 = vld [vmem:[%s85] sm:%s78]
        %88 = vst [vmem:[%s86] sm:%s78] %v87
      $region86: #{attention_lstm_forward.1} parent=80 // loop_footer
        %s84 = sadd.s32 1, %s80
      $region87: #{attention_lstm_forward.1} parent=80 // loop_footer_branch
        %79 = sbr.rel target = $region83
      $region88: #{attention_lstm_forward.1} parent=80 // loop_exit
        _
    $region81: #{attention_lstm_forward.1} parent=1 // pred_fallthru
      _
    // Predicated region
    $region100: #{attention_lstm_forward.1} parent=1 // pred_check
      _
    $region101: #{attention_lstm_forward.1} parent=1 // pred_check_branch
      %105 = sbr.rel (0) target = $region103
    $region102: #{attention_lstm_forward.1} parent=1 // pred_region
      %106 = vsyncadd [#allocation5], 16
    $region103: #{attention_lstm_forward.1} parent=1 // pred_fallthru
      _
    %s107 = sld [smem:[#allocation6 + $0x80]]
    %s108 = scalar_lea.vmem %s1, %s107
    %s109 = scalar_lea.vmem [#allocation2], 1
    %s110 = scalar_lea.sflag [#allocation5], 1
    // Predicated region
    $region104: #{attention_lstm_forward.1} parent=1 // pred_check
      _
    $region105: #{attention_lstm_forward.1} parent=1 // pred_check_branch
      %112 = sbr.rel target = $region107
    $region106: #{attention_lstm_forward.1} parent=1 // pred_region
      // Predicated region
      $region119: #{attention_lstm_forward.1} parent=106 // pred_check
        _
      $region120: #{attention_lstm_forward.1} parent=106 // pred_check_branch
        %128 = sbr.rel (0) target = $region122
      $region121: #{attention_lstm_forward.1} parent=106 // pred_region
        %s130 = ssub.s32 2, 1
        loop: start=0, step=1, limit=1
        $region123: #{attention_lstm_forward.1} parent=121 // loop_pre_header
          _
        $region124: #{attention_lstm_forward.1} parent=121 // loop_header
          %s132 = sphi 0, %s136
          %p133 = scmp.ge.s32.totalorder %s132, 1
          %s137 = sphi %s108, %s108
          %s138 = sphi %s109, %s109
        $region125: #{attention_lstm_forward.1} parent=121 // loop_header_branch
          %135 = sbr.rel (%p133) target = $region129
        $region126: #{attention_lstm_forward.1} parent=121 // loop_body
          %v139 = vld [vmem:[%s137] sm:%s130]
          %140 = vst [vmem:[%s138] sm:%s130] %v139
        $region127: #{attention_lstm_forward.1} parent=121 // loop_footer
          %s136 = sadd.s32 1, %s132
        $region128: #{attention_lstm_forward.1} parent=121 // loop_footer_branch
          %131 = sbr.rel target = $region124
        $region129: #{attention_lstm_forward.1} parent=121 // loop_exit
          _
      $region122: #{attention_lstm_forward.1} parent=106 // pred_fallthru
        _
    $region107: #{attention_lstm_forward.1} parent=1 // pred_fallthru
      _
    // Predicated region
    $region108: #{attention_lstm_forward.1} parent=1 // pred_check
      _
    $region109: #{attention_lstm_forward.1} parent=1 // pred_check_branch
      %114 = sbr.rel (0) target = $region111
    $region110: #{attention_lstm_forward.1} parent=1 // pred_region
      %s116 = ssub.s32 2, 1
      loop: start=0, step=1, limit=1
      $region112: #{attention_lstm_forward.1} parent=110 // loop_pre_header
        _
      $region113: #{attention_lstm_forward.1} parent=110 // loop_header
        %s118 = sphi 0, %s122
        %p119 = scmp.ge.s32.totalorder %s118, 1
        %s123 = sphi %s108, %s108
        %s124 = sphi %s109, %s109
      $region114: #{attention_lstm_forward.1} parent=110 // loop_header_branch
        %121 = sbr.rel (%p119) target = $region118
      $region115: #{attention_lstm_forward.1} parent=110 // loop_body
        %v125 = vld [vmem:[%s123] sm:%s116]
        %126 = vst [vmem:[%s124] sm:%s116] %v125
      $region116: #{attention_lstm_forward.1} parent=110 // loop_footer
        %s122 = sadd.s32 1, %s118
      $region117: #{attention_lstm_forward.1} parent=110 // loop_footer_branch
        %117 = sbr.rel target = $region113
      $region118: #{attention_lstm_forward.1} parent=110 // loop_exit
        _
    $region111: #{attention_lstm_forward.1} parent=1 // pred_fallthru
      _
    // Predicated region
    $region130: #{attention_lstm_forward.1} parent=1 // pred_check
      _
    $region131: #{attention_lstm_forward.1} parent=1 // pred_check_branch
      %143 = sbr.rel (0) target = $region133
    $region132: #{attention_lstm_forward.1} parent=1 // pred_region
      %144 = vsyncadd %s110, 16
    $region133: #{attention_lstm_forward.1} parent=1 // pred_fallthru
      _
    %s145 = sld [smem:[#allocation6 + $0x1]]
    %s146 = scalar_lea.vmem %s1, %s145
    %s147 = scalar_lea.vmem [#allocation2], 8
    %s148 = scalar_lea.sflag [#allocation5], 2
    // Predicated region
    $region134: #{attention_lstm_forward.1} parent=1 // pred_check
      _
    $region135: #{attention_lstm_forward.1} parent=1 // pred_check_branch
      %150 = sbr.rel target = $region137
    $region136: #{attention_lstm_forward.1} parent=1 // pred_region
      // Predicated region
      $region149: #{attention_lstm_forward.1} parent=136 // pred_check
        _
      $region150: #{attention_lstm_forward.1} parent=136 // pred_check_branch
        %166 = sbr.rel (0) target = $region152
      $region151: #{attention_lstm_forward.1} parent=136 // pred_region
        %s168 = ssub.s32 2, 1
        loop: start=0, step=1, limit=1
        $region153: #{attention_lstm_forward.1} parent=151 // loop_pre_header
          _
        $region154: #{attention_lstm_forward.1} parent=151 // loop_header
          %s170 = sphi 0, %s174
          %p171 = scmp.ge.s32.totalorder %s170, 1
          %s175 = sphi %s146, %s146
          %s176 = sphi %s147, %s147
        $region155: #{attention_lstm_forward.1} parent=151 // loop_header_branch
          %173 = sbr.rel (%p171) target = $region159
        $region156: #{attention_lstm_forward.1} parent=151 // loop_body
          %v177 = vld [vmem:[%s175] sm:%s168]
          %178 = vst [vmem:[%s176] sm:%s168] %v177
        $region157: #{attention_lstm_forward.1} parent=151 // loop_footer
          %s174 = sadd.s32 1, %s170
        $region158: #{attention_lstm_forward.1} parent=151 // loop_footer_branch
          %169 = sbr.rel target = $region154
        $region159: #{attention_lstm_forward.1} parent=151 // loop_exit
          _
      $region152: #{attention_lstm_forward.1} parent=136 // pred_fallthru
        _
    $region137: #{attention_lstm_forward.1} parent=1 // pred_fallthru
      _
    // Predicated region
    $region138: #{attention_lstm_forward.1} parent=1 // pred_check
      _
    $region139: #{attention_lstm_forward.1} parent=1 // pred_check_branch
      %152 = sbr.rel (0) target = $region141
    $region140: #{attention_lstm_forward.1} parent=1 // pred_region
      %s154 = ssub.s32 2, 1
      loop: start=0, step=1, limit=1
      $region142: #{attention_lstm_forward.1} parent=140 // loop_pre_header
        _
      $region143: #{attention_lstm_forward.1} parent=140 // loop_header
        %s156 = sphi 0, %s160
        %p157 = scmp.ge.s32.totalorder %s156, 1
        %s161 = sphi %s146, %s146
        %s162 = sphi %s147, %s147
      $region144: #{attention_lstm_forward.1} parent=140 // loop_header_branch
        %159 = sbr.rel (%p157) target = $region148
      $region145: #{attention_lstm_forward.1} parent=140 // loop_body
        %v163 = vld [vmem:[%s161] sm:%s154]
        %164 = vst [vmem:[%s162] sm:%s154] %v163
      $region146: #{attention_lstm_forward.1} parent=140 // loop_footer
        %s160 = sadd.s32 1, %s156
      $region147: #{attention_lstm_forward.1} parent=140 // loop_footer_branch
        %155 = sbr.rel target = $region143
      $region148: #{attention_lstm_forward.1} parent=140 // loop_exit
        _
    $region141: #{attention_lstm_forward.1} parent=1 // pred_fallthru
      _
    // Predicated region
    $region160: #{attention_lstm_forward.1} parent=1 // pred_check
      _
    $region161: #{attention_lstm_forward.1} parent=1 // pred_check_branch
      %181 = sbr.rel (0) target = $region163
    $region162: #{attention_lstm_forward.1} parent=1 // pred_region
      %182 = vsyncadd %s148, 16
    $region163: #{attention_lstm_forward.1} parent=1 // pred_fallthru
      _
    %s183 = sld [smem:[#allocation6 + $0x81]]
    %s184 = scalar_lea.vmem %s1, %s183
    %s185 = scalar_lea.vmem [#allocation2], 9
    %s186 = scalar_lea.sflag [#allocation5], 3
    // Predicated region
    $region164: #{attention_lstm_forward.1} parent=1 // pred_check
      _
    $region165: #{attention_lstm_forward.1} parent=1 // pred_check_branch
      %188 = sbr.rel target = $region167
    $region166: #{attention_lstm_forward.1} parent=1 // pred_region
      // Predicated region
      $region179: #{attention_lstm_forward.1} parent=166 // pred_check
        _
      $region180: #{attention_lstm_forward.1} parent=166 // pred_check_branch
        %204 = sbr.rel (0) target = $region182
      $region181: #{attention_lstm_forward.1} parent=166 // pred_region
        %s206 = ssub.s32 2, 1
        loop: start=0, step=1, limit=1
        $region183: #{attention_lstm_forward.1} parent=181 // loop_pre_header
          _
        $region184: #{attention_lstm_forward.1} parent=181 // loop_header
          %s208 = sphi 0, %s212
          %p209 = scmp.ge.s32.totalorder %s208, 1
          %s213 = sphi %s184, %s184
          %s214 = sphi %s185, %s185
        $region185: #{attention_lstm_forward.1} parent=181 // loop_header_branch
          %211 = sbr.rel (%p209) target = $region189
        $region186: #{attention_lstm_forward.1} parent=181 // loop_body
          %v215 = vld [vmem:[%s213] sm:%s206]
          %216 = vst [vmem:[%s214] sm:%s206] %v215
        $region187: #{attention_lstm_forward.1} parent=181 // loop_footer
          %s212 = sadd.s32 1, %s208
        $region188: #{attention_lstm_forward.1} parent=181 // loop_footer_branch
          %207 = sbr.rel target = $region184
        $region189: #{attention_lstm_forward.1} parent=181 // loop_exit
          _
      $region182: #{attention_lstm_forward.1} parent=166 // pred_fallthru
        _
    $region167: #{attention_lstm_forward.1} parent=1 // pred_fallthru
      _
    // Predicated region
    $region168: #{attention_lstm_forward.1} parent=1 // pred_check
      _
    $region169: #{attention_lstm_forward.1} parent=1 // pred_check_branch
      %190 = sbr.rel (0) target = $region171
    $region170: #{attention_lstm_forward.1} parent=1 // pred_region
      %s192 = ssub.s32 2, 1
      loop: start=0, step=1, limit=1
      $region172: #{attention_lstm_forward.1} parent=170 // loop_pre_header
        _
      $region173: #{attention_lstm_forward.1} parent=170 // loop_header
        %s194 = sphi 0, %s198
        %p195 = scmp.ge.s32.totalorder %s194, 1
        %s199 = sphi %s184, %s184
        %s200 = sphi %s185, %s185
      $region174: #{attention_lstm_forward.1} parent=170 // loop_header_branch
        %197 = sbr.rel (%p195) target = $region178
      $region175: #{attention_lstm_forward.1} parent=170 // loop_body
        %v201 = vld [vmem:[%s199] sm:%s192]
        %202 = vst [vmem:[%s200] sm:%s192] %v201
      $region176: #{attention_lstm_forward.1} parent=170 // loop_footer
        %s198 = sadd.s32 1, %s194
      $region177: #{attention_lstm_forward.1} parent=170 // loop_footer_branch
        %193 = sbr.rel target = $region173
      $region178: #{attention_lstm_forward.1} parent=170 // loop_exit
        _
    $region171: #{attention_lstm_forward.1} parent=1 // pred_fallthru
      _
    // Predicated region
    $region190: #{attention_lstm_forward.1} parent=1 // pred_check
      _
    $region191: #{attention_lstm_forward.1} parent=1 // pred_check_branch
      %219 = sbr.rel (0) target = $region193
    $region192: #{attention_lstm_forward.1} parent=1 // pred_region
      %220 = vsyncadd %s186, 16
    $region193: #{attention_lstm_forward.1} parent=1 // pred_fallthru
      _
    %s221 = sld [smem:[#allocation6 + $0x2]]
    %s222 = scalar_lea.vmem %s1, %s221
    %s223 = scalar_lea.vmem [#allocation2], 16
    %s224 = scalar_lea.sflag [#allocation5], 4
    // Predicated region
    $region194: #{attention_lstm_forward.1} parent=1 // pred_check
      _
    $region195: #{attention_lstm_forward.1} parent=1 // pred_check_branch
      %226 = sbr.rel target = $region197
    $region196: #{attention_lstm_forward.1} parent=1 // pred_region
      // Predicated region
      $region209: #{attention_lstm_forward.1} parent=196 // pred_check
        _
      $region210: #{attention_lstm_forward.1} parent=196 // pred_check_branch
        %242 = sbr.rel (0) target = $region212
      $region211: #{attention_lstm_forward.1} parent=196 // pred_region
        %s244 = ssub.s32 2, 1
        loop: start=0, step=1, limit=1
        $region213: #{attention_lstm_forward.1} parent=211 // loop_pre_header
          _
        $region214: #{attention_lstm_forward.1} parent=211 // loop_header
          %s246 = sphi 0, %s250
          %p247 = scmp.ge.s32.totalorder %s246, 1
          %s251 = sphi %s222, %s222
          %s252 = sphi %s223, %s223
        $region215: #{attention_lstm_forward.1} parent=211 // loop_header_branch
          %249 = sbr.rel (%p247) target = $region219
        $region216: #{attention_lstm_forward.1} parent=211 // loop_body
          %v253 = vld [vmem:[%s251] sm:%s244]
          %254 = vst [vmem:[%s252] sm:%s244] %v253
        $region217: #{attention_lstm_forward.1} parent=211 // loop_footer
          %s250 = sadd.s32 1, %s246
        $region218: #{attention_lstm_forward.1} parent=211 // loop_footer_branch
          %245 = sbr.rel target = $region214
        $region219: #{attention_lstm_forward.1} parent=211 // loop_exit
          _
      $region212: #{attention_lstm_forward.1} parent=196 // pred_fallthru
        _
    $region197: #{attention_lstm_forward.1} parent=1 // pred_fallthru
      _
    // Predicated region
    $region198: #{attention_lstm_forward.1} parent=1 // pred_check
      _
    $region199: #{attention_lstm_forward.1} parent=1 // pred_check_branch
      %228 = sbr.rel (0) target = $region201
    $region200: #{attention_lstm_forward.1} parent=1 // pred_region
      %s230 = ssub.s32 2, 1
      loop: start=0, step=1, limit=1
      $region202: #{attention_lstm_forward.1} parent=200 // loop_pre_header
        _
      $region203: #{attention_lstm_forward.1} parent=200 // loop_header
        %s232 = sphi 0, %s236
        %p233 = scmp.ge.s32.totalorder %s232, 1
        %s237 = sphi %s222, %s222
        %s238 = sphi %s223, %s223
      $region204: #{attention_lstm_forward.1} parent=200 // loop_header_branch
        %235 = sbr.rel (%p233) target = $region208
      $region205: #{attention_lstm_forward.1} parent=200 // loop_body
        %v239 = vld [vmem:[%s237] sm:%s230]
        %240 = vst [vmem:[%s238] sm:%s230] %v239
      $region206: #{attention_lstm_forward.1} parent=200 // loop_footer
        %s236 = sadd.s32 1, %s232
      $region207: #{attention_lstm_forward.1} parent=200 // loop_footer_branch
        %231 = sbr.rel target = $region203
      $region208: #{attention_lstm_forward.1} parent=200 // loop_exit
        _
    $region201: #{attention_lstm_forward.1} parent=1 // pred_fallthru
      _
    // Predicated region
    $region220: #{attention_lstm_forward.1} parent=1 // pred_check
      _
    $region221: #{attention_lstm_forward.1} parent=1 // pred_check_branch
      %257 = sbr.rel (0) target = $region223
    $region222: #{attention_lstm_forward.1} parent=1 // pred_region
      %258 = vsyncadd %s224, 16
    $region223: #{attention_lstm_forward.1} parent=1 // pred_fallthru
      _
    %s259 = sld [smem:[#allocation6 + $0x82]]
    %s260 = scalar_lea.vmem %s1, %s259
    %s261 = scalar_lea.vmem [#allocation2], 17
    %s262 = scalar_lea.sflag [#allocation5], 5
    // Predicated region
    $region224: #{attention_lstm_forward.1} parent=1 // pred_check
      _
    $region225: #{attention_lstm_forward.1} parent=1 // pred_check_branch
      %264 = sbr.rel target = $region227
    $region226: #{attention_lstm_forward.1} parent=1 // pred_region
      // Predicated region
      $region239: #{attention_lstm_forward.1} parent=226 // pred_check
        _
      $region240: #{attention_lstm_forward.1} parent=226 // pred_check_branch
        %280 = sbr.rel (0) target = $region242
      $region241: #{attention_lstm_forward.1} parent=226 // pred_region
        %s282 = ssub.s32 2, 1
        loop: start=0, step=1, limit=1
        $region243: #{attention_lstm_forward.1} parent=241 // loop_pre_header
          _
        $region244: #{attention_lstm_forward.1} parent=241 // loop_header
          %s284 = sphi 0, %s288
          %p285 = scmp.ge.s32.totalorder %s284, 1
          %s289 = sphi %s260, %s260
          %s290 = sphi %s261, %s261
        $region245: #{attention_lstm_forward.1} parent=241 // loop_header_branch
          %287 = sbr.rel (%p285) target = $region249
        $region246: #{attention_lstm_forward.1} parent=241 // loop_body
          %v291 = vld [vmem:[%s289] sm:%s282]
          %292 = vst [vmem:[%s290] sm:%s282] %v291
        $region247: #{attention_lstm_forward.1} parent=241 // loop_footer
          %s288 = sadd.s32 1, %s284
        $region248: #{attention_lstm_forward.1} parent=241 // loop_footer_branch
          %283 = sbr.rel target = $region244
        $region249: #{attention_lstm_forward.1} parent=241 // loop_exit
          _
      $region242: #{attention_lstm_forward.1} parent=226 // pred_fallthru
        _
    $region227: #{attention_lstm_forward.1} parent=1 // pred_fallthru
      _
    // Predicated region
    $region228: #{attention_lstm_forward.1} parent=1 // pred_check
      _
    $region229: #{attention_lstm_forward.1} parent=1 // pred_check_branch
      %266 = sbr.rel (0) target = $region231
    $region230: #{attention_lstm_forward.1} parent=1 // pred_region
      %s268 = ssub.s32 2, 1
      loop: start=0, step=1, limit=1
      $region232: #{attention_lstm_forward.1} parent=230 // loop_pre_header
        _
      $region233: #{attention_lstm_forward.1} parent=230 // loop_header
        %s270 = sphi 0, %s274
        %p271 = scmp.ge.s32.totalorder %s270, 1
        %s275 = sphi %s260, %s260
        %s276 = sphi %s261, %s261
      $region234: #{attention_lstm_forward.1} parent=230 // loop_header_branch
        %273 = sbr.rel (%p271) target = $region238
      $region235: #{attention_lstm_forward.1} parent=230 // loop_body
        %v277 = vld [vmem:[%s275] sm:%s268]
        %278 = vst [vmem:[%s276] sm:%s268] %v277
      $region236: #{attention_lstm_forward.1} parent=230 // loop_footer
        %s274 = sadd.s32 1, %s270
      $region237: #{attention_lstm_forward.1} parent=230 // loop_footer_branch
        %269 = sbr.rel target = $region233
      $region238: #{attention_lstm_forward.1} parent=230 // loop_exit
        _
    $region231: #{attention_lstm_forward.1} parent=1 // pred_fallthru
      _
    // Predicated region
    $region250: #{attention_lstm_forward.1} parent=1 // pred_check
      _
    $region251: #{attention_lstm_forward.1} parent=1 // pred_check_branch
      %295 = sbr.rel (0) target = $region253
    $region252: #{attention_lstm_forward.1} parent=1 // pred_region
      %296 = vsyncadd %s262, 16
    $region253: #{attention_lstm_forward.1} parent=1 // pred_fallthru
      _
    %s297 = sld [smem:[#allocation6 + $0x3]]
    %s298 = scalar_lea.vmem %s1, %s297
    %s299 = scalar_lea.vmem [#allocation2], 24
    %s300 = scalar_lea.sflag [#allocation5], 6
    // Predicated region
    $region254: #{attention_lstm_forward.1} parent=1 // pred_check
      _
    $region255: #{attention_lstm_forward.1} parent=1 // pred_check_branch
      %302 = sbr.rel target = $region257
    $region256: #{attention_lstm_forward.1} parent=1 // pred_region
      // Predicated region
      $region269: #{attention_lstm_forward.1} parent=256 // pred_check
        _
      $region270: #{attention_lstm_forward.1} parent=256 // pred_check_branch
        %318 = sbr.rel (0) target = $region272
      $region271: #{attention_lstm_forward.1} parent=256 // pred_region
        %s320 = ssub.s32 2, 1
        loop: start=0, step=1, limit=1
        $region273: #{attention_lstm_forward.1} parent=271 // loop_pre_header
          _
        $region274: #{attention_lstm_forward.1} parent=271 // loop_header
          %s322 = sphi 0, %s326
          %p323 = scmp.ge.s32.totalorder %s322, 1
          %s327 = sphi %s298, %s298
          %s328 = sphi %s299, %s299
        $region275: #{attention_lstm_forward.1} parent=271 // loop_header_branch
          %325 = sbr.rel (%p323) target = $region279
        $region276: #{attention_lstm_forward.1} parent=271 // loop_body
          %v329 = vld [vmem:[%s327] sm:%s320]
          %330 = vst [vmem:[%s328] sm:%s320] %v329
        $region277: #{attention_lstm_forward.1} parent=271 // loop_footer
          %s326 = sadd.s32 1, %s322
        $region278: #{attention_lstm_forward.1} parent=271 // loop_footer_branch
          %321 = sbr.rel target = $region274
        $region279: #{attention_lstm_forward.1} parent=271 // loop_exit
          _
      $region272: #{attention_lstm_forward.1} parent=256 // pred_fallthru
        _
    $region257: #{attention_lstm_forward.1} parent=1 // pred_fallthru
      _
    // Predicated region
    $region258: #{attention_lstm_forward.1} parent=1 // pred_check
      _
    $region259: #{attention_lstm_forward.1} parent=1 // pred_check_branch
      %304 = sbr.rel (0) target = $region261
    $region260: #{attention_lstm_forward.1} parent=1 // pred_region
      %s306 = ssub.s32 2, 1
      loop: start=0, step=1, limit=1
      $region262: #{attention_lstm_forward.1} parent=260 // loop_pre_header
        _
      $region263: #{attention_lstm_forward.1} parent=260 // loop_header
        %s308 = sphi 0, %s312
        %p309 = scmp.ge.s32.totalorder %s308, 1
        %s313 = sphi %s298, %s298
        %s314 = sphi %s299, %s299
      $region264: #{attention_lstm_forward.1} parent=260 // loop_header_branch
        %311 = sbr.rel (%p309) target = $region268
      $region265: #{attention_lstm_forward.1} parent=260 // loop_body
        %v315 = vld [vmem:[%s313] sm:%s306]
        %316 = vst [vmem:[%s314] sm:%s306] %v315
      $region266: #{attention_lstm_forward.1} parent=260 // loop_footer
        %s312 = sadd.s32 1, %s308
      $region267: #{attention_lstm_forward.1} parent=260 // loop_footer_branch
        %307 = sbr.rel target = $region263
      $region268: #{attention_lstm_forward.1} parent=260 // loop_exit
        _
    $region261: #{attention_lstm_forward.1} parent=1 // pred_fallthru
      _
    // Predicated region
    $region280: #{attention_lstm_forward.1} parent=1 // pred_check
      _
    $region281: #{attention_lstm_forward.1} parent=1 // pred_check_branch
      %333 = sbr.rel (0) target = $region283
    $region282: #{attention_lstm_forward.1} parent=1 // pred_region
      %334 = vsyncadd %s300, 16
    $region283: #{attention_lstm_forward.1} parent=1 // pred_fallthru
      _
    %s335 = sld [smem:[#allocation6 + $0x83]]
    %s336 = scalar_lea.vmem %s1, %s335
    %s337 = scalar_lea.vmem [#allocation2], 25
    %s338 = scalar_lea.sflag [#allocation5], 7
    // Predicated region
    $region284: #{attention_lstm_forward.1} parent=1 // pred_check
      _
    $region285: #{attention_lstm_forward.1} parent=1 // pred_check_branch
      %340 = sbr.rel target = $region287
    $region286: #{attention_lstm_forward.1} parent=1 // pred_region
      // Predicated region
      $region299: #{attention_lstm_forward.1} parent=286 // pred_check
        _
      $region300: #{attention_lstm_forward.1} parent=286 // pred_check_branch
        %356 = sbr.rel (0) target = $region302
      $region301: #{attention_lstm_forward.1} parent=286 // pred_region
        %s358 = ssub.s32 2, 1
        loop: start=0, step=1, limit=1
        $region303: #{attention_lstm_forward.1} parent=301 // loop_pre_header
          _
        $region304: #{attention_lstm_forward.1} parent=301 // loop_header
          %s360 = sphi 0, %s364
          %p361 = scmp.ge.s32.totalorder %s360, 1
          %s365 = sphi %s336, %s336
          %s366 = sphi %s337, %s337
        $region305: #{attention_lstm_forward.1} parent=301 // loop_header_branch
          %363 = sbr.rel (%p361) target = $region309
        $region306: #{attention_lstm_forward.1} parent=301 // loop_body
          %v367 = vld [vmem:[%s365] sm:%s358]
          %368 = vst [vmem:[%s366] sm:%s358] %v367
        $region307: #{attention_lstm_forward.1} parent=301 // loop_footer
          %s364 = sadd.s32 1, %s360
        $region308: #{attention_lstm_forward.1} parent=301 // loop_footer_branch
          %359 = sbr.rel target = $region304
        $region309: #{attention_lstm_forward.1} parent=301 // loop_exit
          _
      $region302: #{attention_lstm_forward.1} parent=286 // pred_fallthru
        _
    $region287: #{attention_lstm_forward.1} parent=1 // pred_fallthru
      _
    // Predicated region
    $region288: #{attention_lstm_forward.1} parent=1 // pred_check
      _
    $region289: #{attention_lstm_forward.1} parent=1 // pred_check_branch
      %342 = sbr.rel (0) target = $region291
    $region290: #{attention_lstm_forward.1} parent=1 // pred_region
      %s344 = ssub.s32 2, 1
      loop: start=0, step=1, limit=1
      $region292: #{attention_lstm_forward.1} parent=290 // loop_pre_header
        _
      $region293: #{attention_lstm_forward.1} parent=290 // loop_header
        %s346 = sphi 0, %s350
        %p347 = scmp.ge.s32.totalorder %s346, 1
        %s351 = sphi %s336, %s336
        %s352 = sphi %s337, %s337
      $region294: #{attention_lstm_forward.1} parent=290 // loop_header_branch
        %349 = sbr.rel (%p347) target = $region298
      $region295: #{attention_lstm_forward.1} parent=290 // loop_body
        %v353 = vld [vmem:[%s351] sm:%s344]
        %354 = vst [vmem:[%s352] sm:%s344] %v353
      $region296: #{attention_lstm_forward.1} parent=290 // loop_footer
        %s350 = sadd.s32 1, %s346
      $region297: #{attention_lstm_forward.1} parent=290 // loop_footer_branch
        %345 = sbr.rel target = $region293
      $region298: #{attention_lstm_forward.1} parent=290 // loop_exit
        _
    $region291: #{attention_lstm_forward.1} parent=1 // pred_fallthru
      _
    // Predicated region
    $region310: #{attention_lstm_forward.1} parent=1 // pred_check
      _
    $region311: #{attention_lstm_forward.1} parent=1 // pred_check_branch
      %371 = sbr.rel (0) target = $region313
    $region312: #{attention_lstm_forward.1} parent=1 // pred_region
      %372 = vsyncadd %s338, 16
    $region313: #{attention_lstm_forward.1} parent=1 // pred_fallthru
      _
    %s373 = sld [smem:[#allocation6 + $0x4]]
    %s374 = scalar_lea.vmem %s1, %s373
    %s375 = scalar_lea.vmem [#allocation2], 32
    %s376 = scalar_lea.sflag [#allocation5], 8
    // Predicated region
    $region314: #{attention_lstm_forward.1} parent=1 // pred_check
      _
    $region315: #{attention_lstm_forward.1} parent=1 // pred_check_branch
      %378 = sbr.rel target = $region317
    $region316: #{attention_lstm_forward.1} parent=1 // pred_region
      // Predicated region
      $region329: #{attention_lstm_forward.1} parent=316 // pred_check
        _
      $region330: #{attention_lstm_forward.1} parent=316 // pred_check_branch
        %394 = sbr.rel (0) target = $region332
      $region331: #{attention_lstm_forward.1} parent=316 // pred_region
        %s396 = ssub.s32 2, 1
        loop: start=0, step=1, limit=1
        $region333: #{attention_lstm_forward.1} parent=331 // loop_pre_header
          _
        $region334: #{attention_lstm_forward.1} parent=331 // loop_header
          %s398 = sphi 0, %s402
          %p399 = scmp.ge.s32.totalorder %s398, 1
          %s403 = sphi %s374, %s374
          %s404 = sphi %s375, %s375
        $region335: #{attention_lstm_forward.1} parent=331 // loop_header_branch
          %401 = sbr.rel (%p399) target = $region339
        $region336: #{attention_lstm_forward.1} parent=331 // loop_body
          %v405 = vld [vmem:[%s403] sm:%s396]
          %406 = vst [vmem:[%s404] sm:%s396] %v405
        $region337: #{attention_lstm_forward.1} parent=331 // loop_footer
          %s402 = sadd.s32 1, %s398
        $region338: #{attention_lstm_forward.1} parent=331 // loop_footer_branch
          %397 = sbr.rel target = $region334
        $region339: #{attention_lstm_forward.1} parent=331 // loop_exit
          _
      $region332: #{attention_lstm_forward.1} parent=316 // pred_fallthru
        _
    $region317: #{attention_lstm_forward.1} parent=1 // pred_fallthru
      _
    // Predicated region
    $region318: #{attention_lstm_forward.1} parent=1 // pred_check
      _
    $region319: #{attention_lstm_forward.1} parent=1 // pred_check_branch
      %380 = sbr.rel (0) target = $region321
    $region320: #{attention_lstm_forward.1} parent=1 // pred_region
      %s382 = ssub.s32 2, 1
      loop: start=0, step=1, limit=1
      $region322: #{attention_lstm_forward.1} parent=320 // loop_pre_header
        _
      $region323: #{attention_lstm_forward.1} parent=320 // loop_header
        %s384 = sphi 0, %s388
        %p385 = scmp.ge.s32.totalorder %s384, 1
        %s389 = sphi %s374, %s374
        %s390 = sphi %s375, %s375
      $region324: #{attention_lstm_forward.1} parent=320 // loop_header_branch
        %387 = sbr.rel (%p385) target = $region328
      $region325: #{attention_lstm_forward.1} parent=320 // loop_body
        %v391 = vld [vmem:[%s389] sm:%s382]
        %392 = vst [vmem:[%s390] sm:%s382] %v391
      $region326: #{attention_lstm_forward.1} parent=320 // loop_footer
        %s388 = sadd.s32 1, %s384
      $region327: #{attention_lstm_forward.1} parent=320 // loop_footer_branch
        %383 = sbr.rel target = $region323
      $region328: #{attention_lstm_forward.1} parent=320 // loop_exit
        _
    $region321: #{attention_lstm_forward.1} parent=1 // pred_fallthru
      _
    // Predicated region
    $region340: #{attention_lstm_forward.1} parent=1 // pred_check
      _
    $region341: #{attention_lstm_forward.1} parent=1 // pred_check_branch
      %409 = sbr.rel (0) target = $region343
    $region342: #{attention_lstm_forward.1} parent=1 // pred_region
      %410 = vsyncadd %s376, 16
    $region343: #{attention_lstm_forward.1} parent=1 // pred_fallthru
      _
    %s411 = sld [smem:[#allocation6 + $0x84]]
    %s412 = scalar_lea.vmem %s1, %s411
    %s413 = scalar_lea.vmem [#allocation2], 33
    %s414 = scalar_lea.sflag [#allocation5], 9
    // Predicated region
    $region344: #{attention_lstm_forward.1} parent=1 // pred_check
      _
    $region345: #{attention_lstm_forward.1} parent=1 // pred_check_branch
      %416 = sbr.rel target = $region347
    $region346: #{attention_lstm_forward.1} parent=1 // pred_region
      // Predicated region
      $region359: #{attention_lstm_forward.1} parent=346 // pred_check
        _
      $region360: #{attention_lstm_forward.1} parent=346 // pred_check_branch
        %432 = sbr.rel (0) target = $region362
      $region361: #{attention_lstm_forward.1} parent=346 // pred_region
        %s434 = ssub.s32 2, 1
        loop: start=0, step=1, limit=1
        $region363: #{attention_lstm_forward.1} parent=361 // loop_pre_header
          _
        $region364: #{attention_lstm_forward.1} parent=361 // loop_header
          %s436 = sphi 0, %s440
          %p437 = scmp.ge.s32.totalorder %s436, 1
          %s441 = sphi %s412, %s412
          %s442 = sphi %s413, %s413
        $region365: #{attention_lstm_forward.1} parent=361 // loop_header_branch
          %439 = sbr.rel (%p437) target = $region369
        $region366: #{attention_lstm_forward.1} parent=361 // loop_body
          %v443 = vld [vmem:[%s441] sm:%s434]
          %444 = vst [vmem:[%s442] sm:%s434] %v443
        $region367: #{attention_lstm_forward.1} parent=361 // loop_footer
          %s440 = sadd.s32 1, %s436
        $region368: #{attention_lstm_forward.1} parent=361 // loop_footer_branch
          %435 = sbr.rel target = $region364
        $region369: #{attention_lstm_forward.1} parent=361 // loop_exit
          _
      $region362: #{attention_lstm_forward.1} parent=346 // pred_fallthru
        _
    $region347: #{attention_lstm_forward.1} parent=1 // pred_fallthru
      _
    // Predicated region
    $region348: #{attention_lstm_forward.1} parent=1 // pred_check
      _
    $region349: #{attention_lstm_forward.1} parent=1 // pred_check_branch
      %418 = sbr.rel (0) target = $region351
    $region350: #{attention_lstm_forward.1} parent=1 // pred_region
      %s420 = ssub.s32 2, 1
      loop: start=0, step=1, limit=1
      $region352: #{attention_lstm_forward.1} parent=350 // loop_pre_header
        _
      $region353: #{attention_lstm_forward.1} parent=350 // loop_header
        %s422 = sphi 0, %s426
        %p423 = scmp.ge.s32.totalorder %s422, 1
        %s427 = sphi %s412, %s412
        %s428 = sphi %s413, %s413
      $region354: #{attention_lstm_forward.1} parent=350 // loop_header_branch
        %425 = sbr.rel (%p423) target = $region358
      $region355: #{attention_lstm_forward.1} parent=350 // loop_body
        %v429 = vld [vmem:[%s427] sm:%s420]
        %430 = vst [vmem:[%s428] sm:%s420] %v429
      $region356: #{attention_lstm_forward.1} parent=350 // loop_footer
        %s426 = sadd.s32 1, %s422
      $region357: #{attention_lstm_forward.1} parent=350 // loop_footer_branch
        %421 = sbr.rel target = $region353
      $region358: #{attention_lstm_forward.1} parent=350 // loop_exit
        _
    $region351: #{attention_lstm_forward.1} parent=1 // pred_fallthru
      _
    // Predicated region
    $region370: #{attention_lstm_forward.1} parent=1 // pred_check
      _
    $region371: #{attention_lstm_forward.1} parent=1 // pred_check_branch
      %447 = sbr.rel (0) target = $region373
    $region372: #{attention_lstm_forward.1} parent=1 // pred_region
      %448 = vsyncadd %s414, 16
    $region373: #{attention_lstm_forward.1} parent=1 // pred_fallthru
      _
    %s449 = sld [smem:[#allocation6 + $0x5]]
    %s450 = scalar_lea.vmem %s1, %s449
    %s451 = scalar_lea.vmem [#allocation2], 40
    %s452 = scalar_lea.sflag [#allocation5], 10
    // Predicated region
    $region374: #{attention_lstm_forward.1} parent=1 // pred_check
      _
    $region375: #{attention_lstm_forward.1} parent=1 // pred_check_branch
      %454 = sbr.rel target = $region377
    $region376: #{attention_lstm_forward.1} parent=1 // pred_region
      // Predicated region
      $region389: #{attention_lstm_forward.1} parent=376 // pred_check
        _
      $region390: #{attention_lstm_forward.1} parent=376 // pred_check_branch
        %470 = sbr.rel (0) target = $region392
      $region391: #{attention_lstm_forward.1} parent=376 // pred_region
        %s472 = ssub.s32 2, 1
        loop: start=0, step=1, limit=1
        $region393: #{attention_lstm_forward.1} parent=391 // loop_pre_header
          _
        $region394: #{attention_lstm_forward.1} parent=391 // loop_header
          %s474 = sphi 0, %s478
          %p475 = scmp.ge.s32.totalorder %s474, 1
          %s479 = sphi %s450, %s450
          %s480 = sphi %s451, %s451
        $region395: #{attention_lstm_forward.1} parent=391 // loop_header_branch
          %477 = sbr.rel (%p475) target = $region399
        $region396: #{attention_lstm_forward.1} parent=391 // loop_body
          %v481 = vld [vmem:[%s479] sm:%s472]
          %482 = vst [vmem:[%s480] sm:%s472] %v481
        $region397: #{attention_lstm_forward.1} parent=391 // loop_footer
          %s478 = sadd.s32 1, %s474
        $region398: #{attention_lstm_forward.1} parent=391 // loop_footer_branch
          %473 = sbr.rel target = $region394
        $region399: #{attention_lstm_forward.1} parent=391 // loop_exit
          _
      $region392: #{attention_lstm_forward.1} parent=376 // pred_fallthru
        _
    $region377: #{attention_lstm_forward.1} parent=1 // pred_fallthru
      _
    // Predicated region
    $region378: #{attention_lstm_forward.1} parent=1 // pred_check
      _
    $region379: #{attention_lstm_forward.1} parent=1 // pred_check_branch
      %456 = sbr.rel (0) target = $region381
    $region380: #{attention_lstm_forward.1} parent=1 // pred_region
      %s458 = ssub.s32 2, 1
      loop: start=0, step=1, limit=1
      $region382: #{attention_lstm_forward.1} parent=380 // loop_pre_header
        _
      $region383: #{attention_lstm_forward.1} parent=380 // loop_header
        %s460 = sphi 0, %s464
        %p461 = scmp.ge.s32.totalorder %s460, 1
        %s465 = sphi %s450, %s450
        %s466 = sphi %s451, %s451
      $region384: #{attention_lstm_forward.1} parent=380 // loop_header_branch
        %463 = sbr.rel (%p461) target = $region388
      $region385: #{attention_lstm_forward.1} parent=380 // loop_body
        %v467 = vld [vmem:[%s465] sm:%s458]
        %468 = vst [vmem:[%s466] sm:%s458] %v467
      $region386: #{attention_lstm_forward.1} parent=380 // loop_footer
        %s464 = sadd.s32 1, %s460
      $region387: #{attention_lstm_forward.1} parent=380 // loop_footer_branch
        %459 = sbr.rel target = $region383
      $region388: #{attention_lstm_forward.1} parent=380 // loop_exit
        _
    $region381: #{attention_lstm_forward.1} parent=1 // pred_fallthru
      _
    // Predicated region
    $region400: #{attention_lstm_forward.1} parent=1 // pred_check
      _
    $region401: #{attention_lstm_forward.1} parent=1 // pred_check_branch
      %485 = sbr.rel (0) target = $region403
    $region402: #{attention_lstm_forward.1} parent=1 // pred_region
      %486 = vsyncadd %s452, 16
    $region403: #{attention_lstm_forward.1} parent=1 // pred_fallthru
      _
    %s487 = sld [smem:[#allocation6 + $0x85]]
    %s488 = scalar_lea.vmem %s1, %s487
    %s489 = scalar_lea.vmem [#allocation2], 41
    %s490 = scalar_lea.sflag [#allocation5], 11
    // Predicated region
    $region404: #{attention_lstm_forward.1} parent=1 // pred_check
      _
    $region405: #{attention_lstm_forward.1} parent=1 // pred_check_branch
      %492 = sbr.rel target = $region407
    $region406: #{attention_lstm_forward.1} parent=1 // pred_region
      // Predicated region
      $region419: #{attention_lstm_forward.1} parent=406 // pred_check
        _
      $region420: #{attention_lstm_forward.1} parent=406 // pred_check_branch
        %508 = sbr.rel (0) target = $region422
      $region421: #{attention_lstm_forward.1} parent=406 // pred_region
        %s510 = ssub.s32 2, 1
        loop: start=0, step=1, limit=1
        $region423: #{attention_lstm_forward.1} parent=421 // loop_pre_header
          _
        $region424: #{attention_lstm_forward.1} parent=421 // loop_header
          %s512 = sphi 0, %s516
          %p513 = scmp.ge.s32.totalorder %s512, 1
          %s517 = sphi %s488, %s488
          %s518 = sphi %s489, %s489
        $region425: #{attention_lstm_forward.1} parent=421 // loop_header_branch
          %515 = sbr.rel (%p513) target = $region429
        $region426: #{attention_lstm_forward.1} parent=421 // loop_body
          %v519 = vld [vmem:[%s517] sm:%s510]
          %520 = vst [vmem:[%s518] sm:%s510] %v519
        $region427: #{attention_lstm_forward.1} parent=421 // loop_footer
          %s516 = sadd.s32 1, %s512
        $region428: #{attention_lstm_forward.1} parent=421 // loop_footer_branch
          %511 = sbr.rel target = $region424
        $region429: #{attention_lstm_forward.1} parent=421 // loop_exit
          _
      $region422: #{attention_lstm_forward.1} parent=406 // pred_fallthru
        _
    $region407: #{attention_lstm_forward.1} parent=1 // pred_fallthru
      _
    // Predicated region
    $region408: #{attention_lstm_forward.1} parent=1 // pred_check
      _
    $region409: #{attention_lstm_forward.1} parent=1 // pred_check_branch
      %494 = sbr.rel (0) target = $region411
    $region410: #{attention_lstm_forward.1} parent=1 // pred_region
      %s496 = ssub.s32 2, 1
      loop: start=0, step=1, limit=1
      $region412: #{attention_lstm_forward.1} parent=410 // loop_pre_header
        _
      $region413: #{attention_lstm_forward.1} parent=410 // loop_header
        %s498 = sphi 0, %s502
        %p499 = scmp.ge.s32.totalorder %s498, 1
        %s503 = sphi %s488, %s488
        %s504 = sphi %s489, %s489
      $region414: #{attention_lstm_forward.1} parent=410 // loop_header_branch
        %501 = sbr.rel (%p499) target = $region418
      $region415: #{attention_lstm_forward.1} parent=410 // loop_body
        %v505 = vld [vmem:[%s503] sm:%s496]
        %506 = vst [vmem:[%s504] sm:%s496] %v505
      $region416: #{attention_lstm_forward.1} parent=410 // loop_footer
        %s502 = sadd.s32 1, %s498
      $region417: #{attention_lstm_forward.1} parent=410 // loop_footer_branch
        %497 = sbr.rel target = $region413
      $region418: #{attention_lstm_forward.1} parent=410 // loop_exit
        _
    $region411: #{attention_lstm_forward.1} parent=1 // pred_fallthru
      _
    // Predicated region
    $region430: #{attention_lstm_forward.1} parent=1 // pred_check
      _
    $region431: #{attention_lstm_forward.1} parent=1 // pred_check_branch
      %523 = sbr.rel (0) target = $region433
    $region432: #{attention_lstm_forward.1} parent=1 // pred_region
      %524 = vsyncadd %s490, 16
    $region433: #{attention_lstm_forward.1} parent=1 // pred_fallthru
      _
    %s525 = sld [smem:[#allocation6 + $0x6]]
    %s526 = scalar_lea.vmem %s1, %s525
    %s527 = scalar_lea.vmem [#allocation2], 48
    %s528 = scalar_lea.sflag [#allocation5], 12
    // Predicated region
    $region434: #{attention_lstm_forward.1} parent=1 // pred_check
      _
    $region435: #{attention_lstm_forward.1} parent=1 // pred_check_branch
      %530 = sbr.rel target = $region437
    $region436: #{attention_lstm_forward.1} parent=1 // pred_region
      // Predicated region
      $region449: #{attention_lstm_forward.1} parent=436 // pred_check
        _
      $region450: #{attention_lstm_forward.1} parent=436 // pred_check_branch
        %546 = sbr.rel (0) target = $region452
      $region451: #{attention_lstm_forward.1} parent=436 // pred_region
        %s548 = ssub.s32 2, 1
        loop: start=0, step=1, limit=1
        $region453: #{attention_lstm_forward.1} parent=451 // loop_pre_header
          _
        $region454: #{attention_lstm_forward.1} parent=451 // loop_header
          %s550 = sphi 0, %s554
          %p551 = scmp.ge.s32.totalorder %s550, 1
          %s555 = sphi %s526, %s526
          %s556 = sphi %s527, %s527
        $region455: #{attention_lstm_forward.1} parent=451 // loop_header_branch
          %553 = sbr.rel (%p551) target = $region459
        $region456: #{attention_lstm_forward.1} parent=451 // loop_body
          %v557 = vld [vmem:[%s555] sm:%s548]
          %558 = vst [vmem:[%s556] sm:%s548] %v557
        $region457: #{attention_lstm_forward.1} parent=451 // loop_footer
          %s554 = sadd.s32 1, %s550
        $region458: #{attention_lstm_forward.1} parent=451 // loop_footer_branch
          %549 = sbr.rel target = $region454
        $region459: #{attention_lstm_forward.1} parent=451 // loop_exit
          _
      $region452: #{attention_lstm_forward.1} parent=436 // pred_fallthru
        _
    $region437: #{attention_lstm_forward.1} parent=1 // pred_fallthru
      _
    // Predicated region
    $region438: #{attention_lstm_forward.1} parent=1 // pred_check
      _
    $region439: #{attention_lstm_forward.1} parent=1 // pred_check_branch
      %532 = sbr.rel (0) target = $region441
    $region440: #{attention_lstm_forward.1} parent=1 // pred_region
      %s534 = ssub.s32 2, 1
      loop: start=0, step=1, limit=1
      $region442: #{attention_lstm_forward.1} parent=440 // loop_pre_header
        _
      $region443: #{attention_lstm_forward.1} parent=440 // loop_header
        %s536 = sphi 0, %s540
        %p537 = scmp.ge.s32.totalorder %s536, 1
        %s541 = sphi %s526, %s526
        %s542 = sphi %s527, %s527
      $region444: #{attention_lstm_forward.1} parent=440 // loop_header_branch
        %539 = sbr.rel (%p537) target = $region448
      $region445: #{attention_lstm_forward.1} parent=440 // loop_body
        %v543 = vld [vmem:[%s541] sm:%s534]
        %544 = vst [vmem:[%s542] sm:%s534] %v543
      $region446: #{attention_lstm_forward.1} parent=440 // loop_footer
        %s540 = sadd.s32 1, %s536
      $region447: #{attention_lstm_forward.1} parent=440 // loop_footer_branch
        %535 = sbr.rel target = $region443
      $region448: #{attention_lstm_forward.1} parent=440 // loop_exit
        _
    $region441: #{attention_lstm_forward.1} parent=1 // pred_fallthru
      _
    // Predicated region
    $region460: #{attention_lstm_forward.1} parent=1 // pred_check
      _
    $region461: #{attention_lstm_forward.1} parent=1 // pred_check_branch
      %561 = sbr.rel (0) target = $region463
    $region462: #{attention_lstm_forward.1} parent=1 // pred_region
      %562 = vsyncadd %s528, 16
    $region463: #{attention_lstm_forward.1} parent=1 // pred_fallthru
      _
    %s563 = sld [smem:[#allocation6 + $0x86]]
    %s564 = scalar_lea.vmem %s1, %s563
    %s565 = scalar_lea.vmem [#allocation2], 49
    %s566 = scalar_lea.sflag [#allocation5], 13
    // Predicated region
    $region464: #{attention_lstm_forward.1} parent=1 // pred_check
      _
    $region465: #{attention_lstm_forward.1} parent=1 // pred_check_branch
      %568 = sbr.rel target = $region467
    $region466: #{attention_lstm_forward.1} parent=1 // pred_region
      // Predicated region
      $region479: #{attention_lstm_forward.1} parent=466 // pred_check
        _
      $region480: #{attention_lstm_forward.1} parent=466 // pred_check_branch
        %584 = sbr.rel (0) target = $region482
      $region481: #{attention_lstm_forward.1} parent=466 // pred_region
        %s586 = ssub.s32 2, 1
        loop: start=0, step=1, limit=1
        $region483: #{attention_lstm_forward.1} parent=481 // loop_pre_header
          _
        $region484: #{attention_lstm_forward.1} parent=481 // loop_header
          %s588 = sphi 0, %s592
          %p589 = scmp.ge.s32.totalorder %s588, 1
          %s593 = sphi %s564, %s564
          %s594 = sphi %s565, %s565
        $region485: #{attention_lstm_forward.1} parent=481 // loop_header_branch
          %591 = sbr.rel (%p589) target = $region489
        $region486: #{attention_lstm_forward.1} parent=481 // loop_body
          %v595 = vld [vmem:[%s593] sm:%s586]
          %596 = vst [vmem:[%s594] sm:%s586] %v595
        $region487: #{attention_lstm_forward.1} parent=481 // loop_footer
          %s592 = sadd.s32 1, %s588
        $region488: #{attention_lstm_forward.1} parent=481 // loop_footer_branch
          %587 = sbr.rel target = $region484
        $region489: #{attention_lstm_forward.1} parent=481 // loop_exit
          _
      $region482: #{attention_lstm_forward.1} parent=466 // pred_fallthru
        _
    $region467: #{attention_lstm_forward.1} parent=1 // pred_fallthru
      _
    // Predicated region
    $region468: #{attention_lstm_forward.1} parent=1 // pred_check
      _
    $region469: #{attention_lstm_forward.1} parent=1 // pred_check_branch
      %570 = sbr.rel (0) target = $region471
    $region470: #{attention_lstm_forward.1} parent=1 // pred_region
      %s572 = ssub.s32 2, 1
      loop: start=0, step=1, limit=1
      $region472: #{attention_lstm_forward.1} parent=470 // loop_pre_header
        _
      $region473: #{attention_lstm_forward.1} parent=470 // loop_header
        %s574 = sphi 0, %s578
        %p575 = scmp.ge.s32.totalorder %s574, 1
        %s579 = sphi %s564, %s564
        %s580 = sphi %s565, %s565
      $region474: #{attention_lstm_forward.1} parent=470 // loop_header_branch
        %577 = sbr.rel (%p575) target = $region478
      $region475: #{attention_lstm_forward.1} parent=470 // loop_body
        %v581 = vld [vmem:[%s579] sm:%s572]
        %582 = vst [vmem:[%s580] sm:%s572] %v581
      $region476: #{attention_lstm_forward.1} parent=470 // loop_footer
        %s578 = sadd.s32 1, %s574
      $region477: #{attention_lstm_forward.1} parent=470 // loop_footer_branch
        %573 = sbr.rel target = $region473
      $region478: #{attention_lstm_forward.1} parent=470 // loop_exit
        _
    $region471: #{attention_lstm_forward.1} parent=1 // pred_fallthru
      _
    // Predicated region
    $region490: #{attention_lstm_forward.1} parent=1 // pred_check
      _
    $region491: #{attention_lstm_forward.1} parent=1 // pred_check_branch
      %599 = sbr.rel (0) target = $region493
    $region492: #{attention_lstm_forward.1} parent=1 // pred_region
      %600 = vsyncadd %s566, 16
    $region493: #{attention_lstm_forward.1} parent=1 // pred_fallthru
      _
    %s601 = sld [smem:[#allocation6 + $0x7]]
    %s602 = scalar_lea.vmem %s1, %s601
    %s603 = scalar_lea.vmem [#allocation2], 56
    %s604 = scalar_lea.sflag [#allocation5], 14
    // Predicated region
    $region494: #{attention_lstm_forward.1} parent=1 // pred_check
      _
    $region495: #{attention_lstm_forward.1} parent=1 // pred_check_branch
      %606 = sbr.rel target = $region497
    $region496: #{attention_lstm_forward.1} parent=1 // pred_region
      // Predicated region
      $region509: #{attention_lstm_forward.1} parent=496 // pred_check
        _
      $region510: #{attention_lstm_forward.1} parent=496 // pred_check_branch
        %622 = sbr.rel (0) target = $region512
      $region511: #{attention_lstm_forward.1} parent=496 // pred_region
        %s624 = ssub.s32 2, 1
        loop: start=0, step=1, limit=1
        $region513: #{attention_lstm_forward.1} parent=511 // loop_pre_header
          _
        $region514: #{attention_lstm_forward.1} parent=511 // loop_header
          %s626 = sphi 0, %s630
          %p627 = scmp.ge.s32.totalorder %s626, 1
          %s631 = sphi %s602, %s602
          %s632 = sphi %s603, %s603
        $region515: #{attention_lstm_forward.1} parent=511 // loop_header_branch
          %629 = sbr.rel (%p627) target = $region519
        $region516: #{attention_lstm_forward.1} parent=511 // loop_body
          %v633 = vld [vmem:[%s631] sm:%s624]
          %634 = vst [vmem:[%s632] sm:%s624] %v633
        $region517: #{attention_lstm_forward.1} parent=511 // loop_footer
          %s630 = sadd.s32 1, %s626
        $region518: #{attention_lstm_forward.1} parent=511 // loop_footer_branch
          %625 = sbr.rel target = $region514
        $region519: #{attention_lstm_forward.1} parent=511 // loop_exit
          _
      $region512: #{attention_lstm_forward.1} parent=496 // pred_fallthru
        _
    $region497: #{attention_lstm_forward.1} parent=1 // pred_fallthru
      _
    // Predicated region
    $region498: #{attention_lstm_forward.1} parent=1 // pred_check
      _
    $region499: #{attention_lstm_forward.1} parent=1 // pred_check_branch
      %608 = sbr.rel (0) target = $region501
    $region500: #{attention_lstm_forward.1} parent=1 // pred_region
      %s610 = ssub.s32 2, 1
      loop: start=0, step=1, limit=1
      $region502: #{attention_lstm_forward.1} parent=500 // loop_pre_header
        _
      $region503: #{attention_lstm_forward.1} parent=500 // loop_header
        %s612 = sphi 0, %s616
        %p613 = scmp.ge.s32.totalorder %s612, 1
        %s617 = sphi %s602, %s602
        %s618 = sphi %s603, %s603
      $region504: #{attention_lstm_forward.1} parent=500 // loop_header_branch
        %615 = sbr.rel (%p613) target = $region508
      $region505: #{attention_lstm_forward.1} parent=500 // loop_body
        %v619 = vld [vmem:[%s617] sm:%s610]
        %620 = vst [vmem:[%s618] sm:%s610] %v619
      $region506: #{attention_lstm_forward.1} parent=500 // loop_footer
        %s616 = sadd.s32 1, %s612
      $region507: #{attention_lstm_forward.1} parent=500 // loop_footer_branch
        %611 = sbr.rel target = $region503
      $region508: #{attention_lstm_forward.1} parent=500 // loop_exit
        _
    $region501: #{attention_lstm_forward.1} parent=1 // pred_fallthru
      _
    // Predicated region
    $region520: #{attention_lstm_forward.1} parent=1 // pred_check
      _
    $region521: #{attention_lstm_forward.1} parent=1 // pred_check_branch
      %637 = sbr.rel (0) target = $region523
    $region522: #{attention_lstm_forward.1} parent=1 // pred_region
      %638 = vsyncadd %s604, 16
    $region523: #{attention_lstm_forward.1} parent=1 // pred_fallthru
      _
    %s639 = sld [smem:[#allocation6 + $0x87]]
    %s640 = scalar_lea.vmem %s1, %s639
    %s641 = scalar_lea.vmem [#allocation2], 57
    %s642 = scalar_lea.sflag [#allocation5], 15
    // Predicated region
    $region524: #{attention_lstm_forward.1} parent=1 // pred_check
      _
    $region525: #{attention_lstm_forward.1} parent=1 // pred_check_branch
      %644 = sbr.rel target = $region527
    $region526: #{attention_lstm_forward.1} parent=1 // pred_region
      // Predicated region
      $region539: #{attention_lstm_forward.1} parent=526 // pred_check
        _
      $region540: #{attention_lstm_forward.1} parent=526 // pred_check_branch
        %660 = sbr.rel (0) target = $region542
      $region541: #{attention_lstm_forward.1} parent=526 // pred_region
        %s662 = ssub.s32 2, 1
        loop: start=0, step=1, limit=1
        $region543: #{attention_lstm_forward.1} parent=541 // loop_pre_header
          _
        $region544: #{attention_lstm_forward.1} parent=541 // loop_header
          %s664 = sphi 0, %s668
          %p665 = scmp.ge.s32.totalorder %s664, 1
          %s669 = sphi %s640, %s640
          %s670 = sphi %s641, %s641
        $region545: #{attention_lstm_forward.1} parent=541 // loop_header_branch
          %667 = sbr.rel (%p665) target = $region549
        $region546: #{attention_lstm_forward.1} parent=541 // loop_body
          %v671 = vld [vmem:[%s669] sm:%s662]
          %672 = vst [vmem:[%s670] sm:%s662] %v671
        $region547: #{attention_lstm_forward.1} parent=541 // loop_footer
          %s668 = sadd.s32 1, %s664
        $region548: #{attention_lstm_forward.1} parent=541 // loop_footer_branch
          %663 = sbr.rel target = $region544
        $region549: #{attention_lstm_forward.1} parent=541 // loop_exit
          _
      $region542: #{attention_lstm_forward.1} parent=526 // pred_fallthru
        _
    $region527: #{attention_lstm_forward.1} parent=1 // pred_fallthru
      _
    // Predicated region
    $region528: #{attention_lstm_forward.1} parent=1 // pred_check
      _
    $region529: #{attention_lstm_forward.1} parent=1 // pred_check_branch
      %646 = sbr.rel (0) target = $region531
    $region530: #{attention_lstm_forward.1} parent=1 // pred_region
      %s648 = ssub.s32 2, 1
      loop: start=0, step=1, limit=1
      $region532: #{attention_lstm_forward.1} parent=530 // loop_pre_header
        _
      $region533: #{attention_lstm_forward.1} parent=530 // loop_header
        %s650 = sphi 0, %s654
        %p651 = scmp.ge.s32.totalorder %s650, 1
        %s655 = sphi %s640, %s640
        %s656 = sphi %s641, %s641
      $region534: #{attention_lstm_forward.1} parent=530 // loop_header_branch
        %653 = sbr.rel (%p651) target = $region538
      $region535: #{attention_lstm_forward.1} parent=530 // loop_body
        %v657 = vld [vmem:[%s655] sm:%s648]
        %658 = vst [vmem:[%s656] sm:%s648] %v657
      $region536: #{attention_lstm_forward.1} parent=530 // loop_footer
        %s654 = sadd.s32 1, %s650
      $region537: #{attention_lstm_forward.1} parent=530 // loop_footer_branch
        %649 = sbr.rel target = $region533
      $region538: #{attention_lstm_forward.1} parent=530 // loop_exit
        _
    $region531: #{attention_lstm_forward.1} parent=1 // pred_fallthru
      _
    // Predicated region
    $region550: #{attention_lstm_forward.1} parent=1 // pred_check
      _
    $region551: #{attention_lstm_forward.1} parent=1 // pred_check_branch
      %675 = sbr.rel (0) target = $region553
    $region552: #{attention_lstm_forward.1} parent=1 // pred_region
      %676 = vsyncadd %s642, 16
    $region553: #{attention_lstm_forward.1} parent=1 // pred_fallthru
      _
    %vm677 = vcmask 128000
    %678 = vst.msk [vmem:[#allocation2 + $0x2] sm:$0x3f] %vm677, 0.0
    %679 = vst.msk [vmem:[#allocation2 + $0xa] sm:$0x3f] %vm677, 0.0
    %680 = vst.msk [vmem:[#allocation2 + $0x12] sm:$0x3f] %vm677, 0.0
    %681 = vst.msk [vmem:[#allocation2 + $0x1a] sm:$0x3f] %vm677, 0.0
    %682 = vst.msk [vmem:[#allocation2 + $0x22] sm:$0x3f] %vm677, 0.0
    %683 = vst.msk [vmem:[#allocation2 + $0x2a] sm:$0x3f] %vm677, 0.0
    %684 = vst.msk [vmem:[#allocation2 + $0x32] sm:$0x3f] %vm677, 0.0
    %685 = vst.msk [vmem:[#allocation2 + $0x3a] sm:$0x3f] %vm677, 0.0
    %s686 = smul.u32 1, 1
    %s687 = sshll.u32 %s686, 4
    %688 = dma.done [#allocation5], %s687
    %s689 = sshll.u32 %s686, 4
    %690 = dma.done %s110, %s689
    %s691 = sshll.u32 %s686, 4
    %692 = dma.done %s148, %s691
    %s693 = sshll.u32 %s686, 4
    %694 = dma.done %s186, %s693
    %s695 = sshll.u32 %s686, 4
    %696 = dma.done %s224, %s695
    %s697 = sshll.u32 %s686, 4
    %698 = dma.done %s262, %s697
    %s699 = sshll.u32 %s686, 4
    %700 = dma.done %s300, %s699
    %s701 = sshll.u32 %s686, 4
    %702 = dma.done %s338, %s701
    %s703 = sshll.u32 %s686, 4
    %704 = dma.done %s376, %s703
    %s705 = sshll.u32 %s686, 4
    %706 = dma.done %s414, %s705
    %s707 = sshll.u32 %s686, 4
    %708 = dma.done %s452, %s707
    %s709 = sshll.u32 %s686, 4
    %710 = dma.done %s490, %s709
    %s711 = sshll.u32 %s686, 4
    %712 = dma.done %s528, %s711
    %s713 = sshll.u32 %s686, 4
    %714 = dma.done %s566, %s713
    %s715 = sshll.u32 %s686, 4
    %716 = dma.done %s604, %s715
    %s717 = sshll.u32 %s686, 4
    %718 = dma.done %s642, %s717
    %v719 = vld [vmem:[#allocation2] sm:$0xff]
    %v720 = vld [vmem:[#allocation2 + $0x8] sm:$0xff]
    %v721 = vld [vmem:[#allocation2 + $0x10] sm:$0xff]
    %v722 = vld [vmem:[#allocation2 + $0x18] sm:$0xff]
    %v723 = vld [vmem:[#allocation2 + $0x20] sm:$0xff]
    %v724 = vld [vmem:[#allocation2 + $0x28] sm:$0xff]
    %v725 = vld [vmem:[#allocation2 + $0x30] sm:$0xff]
    %v726 = vld [vmem:[#allocation2 + $0x38] sm:$0xff]
    %v727 = vpack.c.bf16 %v720, %v719
    %v728 = vpack.c.bf16 %v722, %v721
    %v729 = vpack.c.bf16 %v724, %v723
    %v730 = vpack.c.bf16 %v726, %v725
    %v731 = vld [vmem:[%s2] sm:$0xf]
    %v732 = vld [vmem:[%s2 + $0x4] sm:$0xf]
    %v733 = vld [vmem:[%s4] sm:$0x1]
    %v735 = vperm.slane %v733, 0
    %v739 = vunpack.c.l.b16 %v731
    %v740 = vunpack.c.l.b16 %v732
    %v741 = vpack.c.b16 %v740, %v739
    %vm743 = vcmask 130048
    %v745 = vsel %vm743, %v727, 0
    %v748 = vsel %vm743, %v728, 0
    %v751 = vsel %vm743, %v729, 0
    %v754 = vsel %vm743, %v730, 0
    %756 = vmatpush.bf16.msra.mxu0 0
    %757 = vmatpush.bf16.msra.mxu0 0
    %758 = vmatpush.bf16.msra.mxu0 0
    %759 = vmatpush.bf16.msra.mxu0 0
    %760 = vmatpush.bf16.msra.mxu0 0
    %761 = vmatpush.bf16.msra.mxu0 0
    %762 = vmatpush.bf16.msra.mxu0 0
    %763 = vmatpush.bf16.msra.mxu0 %v741
    %764 = vmatmul.bf16.gmra.mxu0 %v745
    %v765 = vpop.f32.mrf.mxu0
    %v766 = vadd.f32 %v735, %v765
    %v767 = vpop.f32.mrf.mxu0
    %v768 = vadd.f32 %v735, %v767
    %769 = vmatmul.bf16.gmra.mxu0 %v748
    %v770 = vpop.f32.mrf.mxu0
    %v771 = vadd.f32 %v735, %v770
    %v772 = vpop.f32.mrf.mxu0
    %v773 = vadd.f32 %v735, %v772
    %774 = vmatmul.bf16.gmra.mxu0 %v751
    %v775 = vpop.f32.mrf.mxu0
    %v776 = vadd.f32 %v735, %v775
    %v777 = vpop.f32.mrf.mxu0
    %v778 = vadd.f32 %v735, %v777
    %779 = vmatmul.bf16.gmra.mxu0 %v754
    %v780 = vpop.f32.mrf.mxu0
    %v781 = vadd.f32 %v735, %v780
    %v782 = vpop.f32.mrf.mxu0
    %v783 = vadd.f32 %v735, %v782
    %784 = vdwg.mxu0
    %785 = vst [vmem:[#allocation4] sm:$0xff] %v766
    %786 = vst [vmem:[#allocation4 + $0x8] sm:$0xff] %v768
    %787 = vst [vmem:[#allocation4 + $0x10] sm:$0xff] %v771
    %788 = vst [vmem:[#allocation4 + $0x18] sm:$0xff] %v773
    %789 = vst [vmem:[#allocation4 + $0x20] sm:$0xff] %v776
    %790 = vst [vmem:[#allocation4 + $0x28] sm:$0xff] %v778
    %791 = vst [vmem:[#allocation4 + $0x30] sm:$0xff] %v781
    %792 = vst [vmem:[#allocation4 + $0x38] sm:$0xff] %v783
    %v793 = vld [vmem:[%s3] sm:$0xf]
    %v794 = vld [vmem:[%s3 + $0x4] sm:$0xf]
    %v795 = vld [vmem:[%s3 + $0x8] sm:$0xf]
    %v796 = vld [vmem:[%s3 + $0xc] sm:$0xf]
    %v797 = vld [vmem:[#allocation4] sm:$0xff]
    %v798 = vxor.u32 %v797, 2147483648
    %v799 = vmul.f32 %v798, 1.442695
    %v800 = vpow.pop %v799
    %v801 = vadd.f32 %v800, 1.0
    %v802 = vrcp.pop %v801
    %v803 = vmul.f32 %v801, %v802
    %v804 = vsub.f32 1.0, %v803
    %v805 = vmul.f32 %v802, %v804
    %v806 = vadd.f32 %v802, %v805
    %vm807 = vweird.f32 %v801
    %vm808 = vweird.f32 %v802
    %vm809 = vmor %vm807, %vm808
    %v810 = vsel %vm809, %v802, %v806
    %v811 = vand.u32 2147483647, %v801
    %vm812 = vcmp.eq.f32.partialorder %v811, 8.507059e+37
    %v813 = vand.u32 %v801, 2147483648
    %v814 = vor.u32 1.1754944e-38, %v813
    %v815 = vsel %vm812, %v814, %v810
    %v816 = vmul.f32 1.0, %v815
    %v817 = vtanh.pop %v797
    %v818 = vmul.f32 %v816, 0.0
    %820 = vrot.lane.b32.xlu0 %v817, 64
    %v821 = vpop.permute.xlu0 %820
    %v823 = vmul.f32 %v816, %v821
    %825 = vrot.lane.b32.xlu0 %v823, 32
    %v826 = vpop.permute.xlu0 %825
    %v828 = vadd.f32 %v818, %v826
    %v829 = vtanh.pop %v828
    %831 = vrot.lane.b32.xlu0 %v829, 64
    %v832 = vpop.permute.xlu0 %831
    %v834 = vmul.f32 %v816, %v832
    %836 = vrot.lane.b32.xlu0 %v834, 32
    %v837 = vpop.permute.xlu0 %836
    %vm839 = vcmask 261120
    %840 = vst.msk [vmem:[#allocation3] sm:$0xff] %vm839, %v837
    %v841 = vld [vmem:[#allocation4 + $0x8] sm:$0xff]
    %v842 = vpack.c.bf16 %v834, %v834
    %844 = vrot.lane.b32.xlu0 %v842, 32
    %v845 = vpop.permute.xlu0 %844
    %v850 = vunpack.c.l.b16 %v793
    %v851 = vunpack.c.l.b16 %v794
    %v852 = vunpack.c.l.b16 %v795
    %v853 = vunpack.c.l.b16 %v796
    %v854 = vpack.c.b16 %v851, %v850
    %v855 = vpack.c.b16 %v853, %v852
    %v859 = vsel %vm839, %v845, 0
    %861 = vmatpush.bf16.msra.mxu0 0
    %862 = vmatpush.bf16.msra.mxu0 0
    %863 = vmatpush.bf16.msra.mxu0 0
    %864 = vmatpush.bf16.msra.mxu0 0
    %865 = vmatpush.bf16.msra.mxu0 0
    %866 = vmatpush.bf16.msra.mxu0 0
    %867 = vmatpush.bf16.msra.mxu0 %v855
    %868 = vmatpush.bf16.msra.mxu0 %v854
    %869 = vmatmul.bf16.gmra.mxu0 %v859
    %v870 = vpop.f32.mrf.mxu0
    %v871 = vadd.f32 0.0, %v870
    %v872 = vpop.f32.mrf.mxu0
    %873 = vdwg.mxu0
    %v874 = vadd.f32 %v841, %v871
    %v875 = vxor.u32 %v874, 2147483648
    %v876 = vmul.f32 %v875, 1.442695
    %v877 = vpow.pop %v876
    %v878 = vadd.f32 %v877, 1.0
    %v879 = vrcp.pop %v878
    %v880 = vmul.f32 %v878, %v879
    %v881 = vsub.f32 1.0, %v880
    %v882 = vmul.f32 %v879, %v881
    %v883 = vadd.f32 %v879, %v882
    %vm884 = vweird.f32 %v878
    %vm885 = vweird.f32 %v879
    %vm886 = vmor %vm884, %vm885
    %v887 = vsel %vm886, %v879, %v883
    %v888 = vand.u32 2147483647, %v878
    %vm889 = vcmp.eq.f32.partialorder %v888, 8.507059e+37
    %v890 = vand.u32 %v878, 2147483648
    %v891 = vor.u32 1.1754944e-38, %v890
    %v892 = vsel %vm889, %v891, %v887
    %v893 = vmul.f32 1.0, %v892
    %v894 = vtanh.pop %v874
    %v895 = vmul.f32 %v893, %v828
    %897 = vrot.lane.b32.xlu0 %v894, 64
    %v898 = vpop.permute.xlu0 %897
    %v900 = vmul.f32 %v893, %v898
    %902 = vrot.lane.b32.xlu0 %v900, 32
    %v903 = vpop.permute.xlu0 %902
    %v905 = vadd.f32 %v895, %v903
    %v906 = vtanh.pop %v905
    %908 = vrot.lane.b32.xlu0 %v906, 64
    %v909 = vpop.permute.xlu0 %908
    %v911 = vmul.f32 %v893, %v909
    %913 = vrot.lane.b32.xlu0 %v911, 32
    %v914 = vpop.permute.xlu0 %913
    %916 = vst.msk [vmem:[#allocation3 + $0x8] sm:$0xff] %vm839, %v914
    %v917 = vld [vmem:[#allocation4 + $0x10] sm:$0xff]
    %v918 = vpack.c.bf16 %v911, %v911
    %920 = vrot.lane.b32.xlu0 %v918, 32
    %v921 = vpop.permute.xlu0 %920
    %v923 = vsel %vm839, %v921, 0
    %925 = vmatpush.bf16.msra.mxu0 0
    %926 = vmatpush.bf16.msra.mxu0 0
    %927 = vmatpush.bf16.msra.mxu0 0
    %928 = vmatpush.bf16.msra.mxu0 0
    %929 = vmatpush.bf16.msra.mxu0 0
    %930 = vmatpush.bf16.msra.mxu0 0
    %931 = vmatpush.bf16.msra.mxu0 %v855
    %932 = vmatpush.bf16.msra.mxu0 %v854
    %933 = vmatmul.bf16.gmra.mxu0 %v923
    %v934 = vpop.f32.mrf.mxu0
    %v935 = vadd.f32 0.0, %v934
    %v936 = vpop.f32.mrf.mxu0
    %937 = vdwg.mxu0
    %v938 = vadd.f32 %v917, %v935
    %v939 = vxor.u32 %v938, 2147483648
    %v940 = vmul.f32 %v939, 1.442695
    %v941 = vpow.pop %v940
    %v942 = vadd.f32 %v941, 1.0
    %v943 = vrcp.pop %v942
    %v944 = vmul.f32 %v942, %v943
    %v945 = vsub.f32 1.0, %v944
    %v946 = vmul.f32 %v943, %v945
    %v947 = vadd.f32 %v943, %v946
    %vm948 = vweird.f32 %v942
    %vm949 = vweird.f32 %v943
    %vm950 = vmor %vm948, %vm949
    %v951 = vsel %vm950, %v943, %v947
    %v952 = vand.u32 2147483647, %v942
    %vm953 = vcmp.eq.f32.partialorder %v952, 8.507059e+37
    %v954 = vand.u32 %v942, 2147483648
    %v955 = vor.u32 1.1754944e-38, %v954
    %v956 = vsel %vm953, %v955, %v951
    %v957 = vmul.f32 1.0, %v956
    %v958 = vtanh.pop %v938
    %v959 = vmul.f32 %v957, %v905
    %961 = vrot.lane.b32.xlu0 %v958, 64
    %v962 = vpop.permute.xlu0 %961
    %v964 = vmul.f32 %v957, %v962
    %966 = vrot.lane.b32.xlu0 %v964, 32
    %v967 = vpop.permute.xlu0 %966
    %v969 = vadd.f32 %v959, %v967
    %v970 = vtanh.pop %v969
    %972 = vrot.lane.b32.xlu0 %v970, 64
    %v973 = vpop.permute.xlu0 %972
    %v975 = vmul.f32 %v957, %v973
    %977 = vrot.lane.b32.xlu0 %v975, 32
    %v978 = vpop.permute.xlu0 %977
    %980 = vst.msk [vmem:[#allocation3 + $0x10] sm:$0xff] %vm839, %v978
    %v981 = vld [vmem:[#allocation4 + $0x18] sm:$0xff]
    %v982 = vpack.c.bf16 %v975, %v975
    %984 = vrot.lane.b32.xlu0 %v982, 32
    %v985 = vpop.permute.xlu0 %984
    %v987 = vsel %vm839, %v985, 0
    %989 = vmatpush.bf16.msra.mxu0 0
    %990 = vmatpush.bf16.msra.mxu0 0
    %991 = vmatpush.bf16.msra.mxu0 0
    %992 = vmatpush.bf16.msra.mxu0 0
    %993 = vmatpush.bf16.msra.mxu0 0
    %994 = vmatpush.bf16.msra.mxu0 0
    %995 = vmatpush.bf16.msra.mxu0 %v855
    %996 = vmatpush.bf16.msra.mxu0 %v854
    %997 = vmatmul.bf16.gmra.mxu0 %v987
    %v998 = vpop.f32.mrf.mxu0
    %v999 = vadd.f32 0.0, %v998
    %v1000 = vpop.f32.mrf.mxu0
    %1001 = vdwg.mxu0
    %v1002 = vadd.f32 %v981, %v999
    %v1003 = vxor.u32 %v1002, 2147483648
    %v1004 = vmul.f32 %v1003, 1.442695
    %v1005 = vpow.pop %v1004
    %v1006 = vadd.f32 %v1005, 1.0
    %v1007 = vrcp.pop %v1006
    %v1008 = vmul.f32 %v1006, %v1007
    %v1009 = vsub.f32 1.0, %v1008
    %v1010 = vmul.f32 %v1007, %v1009
    %v1011 = vadd.f32 %v1007, %v1010
    %vm1012 = vweird.f32 %v1006
    %vm1013 = vweird.f32 %v1007
    %vm1014 = vmor %vm1012, %vm1013
    %v1015 = vsel %vm1014, %v1007, %v1011
    %v1016 = vand.u32 2147483647, %v1006
    %vm1017 = vcmp.eq.f32.partialorder %v1016, 8.507059e+37
    %v1018 = vand.u32 %v1006, 2147483648
    %v1019 = vor.u32 1.1754944e-38, %v1018
    %v1020 = vsel %vm1017, %v1019, %v1015
    %v1021 = vmul.f32 1.0, %v1020
    %v1022 = vtanh.pop %v1002
    %v1023 = vmul.f32 %v1021, %v969
    %1025 = vrot.lane.b32.xlu0 %v1022, 64
    %v1026 = vpop.permute.xlu0 %1025
    %v1028 = vmul.f32 %v1021, %v1026
    %1030 = vrot.lane.b32.xlu0 %v1028, 32
    %v1031 = vpop.permute.xlu0 %1030
    %v1033 = vadd.f32 %v1023, %v1031
    %v1034 = vtanh.pop %v1033
    %1036 = vrot.lane.b32.xlu0 %v1034, 64
    %v1037 = vpop.permute.xlu0 %1036
    %v1039 = vmul.f32 %v1021, %v1037
    %1041 = vrot.lane.b32.xlu0 %v1039, 32
    %v1042 = vpop.permute.xlu0 %1041
    %1044 = vst.msk [vmem:[#allocation3 + $0x18] sm:$0xff] %vm839, %v1042
    %v1045 = vld [vmem:[#allocation4 + $0x20] sm:$0xff]
    %v1046 = vpack.c.bf16 %v1039, %v1039
    %1048 = vrot.lane.b32.xlu0 %v1046, 32
    %v1049 = vpop.permute.xlu0 %1048
    %v1051 = vsel %vm839, %v1049, 0
    %1053 = vmatpush.bf16.msra.mxu0 0
    %1054 = vmatpush.bf16.msra.mxu0 0
    %1055 = vmatpush.bf16.msra.mxu0 0
    %1056 = vmatpush.bf16.msra.mxu0 0
    %1057 = vmatpush.bf16.msra.mxu0 0
    %1058 = vmatpush.bf16.msra.mxu0 0
    %1059 = vmatpush.bf16.msra.mxu0 %v855
    %1060 = vmatpush.bf16.msra.mxu0 %v854
    %1061 = vmatmul.bf16.gmra.mxu0 %v1051
    %v1062 = vpop.f32.mrf.mxu0
    %v1063 = vadd.f32 0.0, %v1062
    %v1064 = vpop.f32.mrf.mxu0
    %1065 = vdwg.mxu0
    %v1066 = vadd.f32 %v1045, %v1063
    %v1067 = vxor.u32 %v1066, 2147483648
    %v1068 = vmul.f32 %v1067, 1.442695
    %v1069 = vpow.pop %v1068
    %v1070 = vadd.f32 %v1069, 1.0
    %v1071 = vrcp.pop %v1070
    %v1072 = vmul.f32 %v1070, %v1071
    %v1073 = vsub.f32 1.0, %v1072
    %v1074 = vmul.f32 %v1071, %v1073
    %v1075 = vadd.f32 %v1071, %v1074
    %vm1076 = vweird.f32 %v1070
    %vm1077 = vweird.f32 %v1071
    %vm1078 = vmor %vm1076, %vm1077
    %v1079 = vsel %vm1078, %v1071, %v1075
    %v1080 = vand.u32 2147483647, %v1070
    %vm1081 = vcmp.eq.f32.partialorder %v1080, 8.507059e+37
    %v1082 = vand.u32 %v1070, 2147483648
    %v1083 = vor.u32 1.1754944e-38, %v1082
    %v1084 = vsel %vm1081, %v1083, %v1079
    %v1085 = vmul.f32 1.0, %v1084
    %v1086 = vtanh.pop %v1066
    %v1087 = vmul.f32 %v1085, %v1033
    %1089 = vrot.lane.b32.xlu0 %v1086, 64
    %v1090 = vpop.permute.xlu0 %1089
    %v1092 = vmul.f32 %v1085, %v1090
    %1094 = vrot.lane.b32.xlu0 %v1092, 32
    %v1095 = vpop.permute.xlu0 %1094
    %v1097 = vadd.f32 %v1087, %v1095
    %v1098 = vtanh.pop %v1097
    %1100 = vrot.lane.b32.xlu0 %v1098, 64
    %v1101 = vpop.permute.xlu0 %1100
    %v1103 = vmul.f32 %v1085, %v1101
    %1105 = vrot.lane.b32.xlu0 %v1103, 32
    %v1106 = vpop.permute.xlu0 %1105
    %1108 = vst.msk [vmem:[#allocation3 + $0x20] sm:$0xff] %vm839, %v1106
    %v1109 = vld [vmem:[#allocation4 + $0x28] sm:$0xff]
    %v1110 = vpack.c.bf16 %v1103, %v1103
    %1112 = vrot.lane.b32.xlu0 %v1110, 32
    %v1113 = vpop.permute.xlu0 %1112
    %v1115 = vsel %vm839, %v1113, 0
    %1117 = vmatpush.bf16.msra.mxu0 0
    %1118 = vmatpush.bf16.msra.mxu0 0
    %1119 = vmatpush.bf16.msra.mxu0 0
    %1120 = vmatpush.bf16.msra.mxu0 0
    %1121 = vmatpush.bf16.msra.mxu0 0
    %1122 = vmatpush.bf16.msra.mxu0 0
    %1123 = vmatpush.bf16.msra.mxu0 %v855
    %1124 = vmatpush.bf16.msra.mxu0 %v854
    %1125 = vmatmul.bf16.gmra.mxu0 %v1115
    %v1126 = vpop.f32.mrf.mxu0
    %v1127 = vadd.f32 0.0, %v1126
    %v1128 = vpop.f32.mrf.mxu0
    %1129 = vdwg.mxu0
    %v1130 = vadd.f32 %v1109, %v1127
    %v1131 = vxor.u32 %v1130, 2147483648
    %v1132 = vmul.f32 %v1131, 1.442695
    %v1133 = vpow.pop %v1132
    %v1134 = vadd.f32 %v1133, 1.0
    %v1135 = vrcp.pop %v1134
    %v1136 = vmul.f32 %v1134, %v1135
    %v1137 = vsub.f32 1.0, %v1136
    %v1138 = vmul.f32 %v1135, %v1137
    %v1139 = vadd.f32 %v1135, %v1138
    %vm1140 = vweird.f32 %v1134
    %vm1141 = vweird.f32 %v1135
    %vm1142 = vmor %vm1140, %vm1141
    %v1143 = vsel %vm1142, %v1135, %v1139
    %v1144 = vand.u32 2147483647, %v1134
    %vm1145 = vcmp.eq.f32.partialorder %v1144, 8.507059e+37
    %v1146 = vand.u32 %v1134, 2147483648
    %v1147 = vor.u32 1.1754944e-38, %v1146
    %v1148 = vsel %vm1145, %v1147, %v1143
    %v1149 = vmul.f32 1.0, %v1148
    %v1150 = vtanh.pop %v1130
    %v1151 = vmul.f32 %v1149, %v1097
    %1153 = vrot.lane.b32.xlu0 %v1150, 64
    %v1154 = vpop.permute.xlu0 %1153
    %v1156 = vmul.f32 %v1149, %v1154
    %1158 = vrot.lane.b32.xlu0 %v1156, 32
    %v1159 = vpop.permute.xlu0 %1158
    %v1161 = vadd.f32 %v1151, %v1159
    %v1162 = vtanh.pop %v1161
    %1164 = vrot.lane.b32.xlu0 %v1162, 64
    %v1165 = vpop.permute.xlu0 %1164
    %v1167 = vmul.f32 %v1149, %v1165
    %1169 = vrot.lane.b32.xlu0 %v1167, 32
    %v1170 = vpop.permute.xlu0 %1169
    %1172 = vst.msk [vmem:[#allocation3 + $0x28] sm:$0xff] %vm839, %v1170
    %v1173 = vld [vmem:[#allocation4 + $0x30] sm:$0xff]
    %v1174 = vpack.c.bf16 %v1167, %v1167
    %1176 = vrot.lane.b32.xlu0 %v1174, 32
    %v1177 = vpop.permute.xlu0 %1176
    %v1179 = vsel %vm839, %v1177, 0
    %1181 = vmatpush.bf16.msra.mxu0 0
    %1182 = vmatpush.bf16.msra.mxu0 0
    %1183 = vmatpush.bf16.msra.mxu0 0
    %1184 = vmatpush.bf16.msra.mxu0 0
    %1185 = vmatpush.bf16.msra.mxu0 0
    %1186 = vmatpush.bf16.msra.mxu0 0
    %1187 = vmatpush.bf16.msra.mxu0 %v855
    %1188 = vmatpush.bf16.msra.mxu0 %v854
    %1189 = vmatmul.bf16.gmra.mxu0 %v1179
    %v1190 = vpop.f32.mrf.mxu0
    %v1191 = vadd.f32 0.0, %v1190
    %v1192 = vpop.f32.mrf.mxu0
    %1193 = vdwg.mxu0
    %v1194 = vadd.f32 %v1173, %v1191
    %v1195 = vxor.u32 %v1194, 2147483648
    %v1196 = vmul.f32 %v1195, 1.442695
    %v1197 = vpow.pop %v1196
    %v1198 = vadd.f32 %v1197, 1.0
    %v1199 = vrcp.pop %v1198
    %v1200 = vmul.f32 %v1198, %v1199
    %v1201 = vsub.f32 1.0, %v1200
    %v1202 = vmul.f32 %v1199, %v1201
    %v1203 = vadd.f32 %v1199, %v1202
    %vm1204 = vweird.f32 %v1198
    %vm1205 = vweird.f32 %v1199
    %vm1206 = vmor %vm1204, %vm1205
    %v1207 = vsel %vm1206, %v1199, %v1203
    %v1208 = vand.u32 2147483647, %v1198
    %vm1209 = vcmp.eq.f32.partialorder %v1208, 8.507059e+37
    %v1210 = vand.u32 %v1198, 2147483648
    %v1211 = vor.u32 1.1754944e-38, %v1210
    %v1212 = vsel %vm1209, %v1211, %v1207
    %v1213 = vmul.f32 1.0, %v1212
    %v1214 = vtanh.pop %v1194
    %v1215 = vmul.f32 %v1213, %v1161
    %1217 = vrot.lane.b32.xlu0 %v1214, 64
    %v1218 = vpop.permute.xlu0 %1217
    %v1220 = vmul.f32 %v1213, %v1218
    %1222 = vrot.lane.b32.xlu0 %v1220, 32
    %v1223 = vpop.permute.xlu0 %1222
    %v1225 = vadd.f32 %v1215, %v1223
    %v1226 = vtanh.pop %v1225
    %1228 = vrot.lane.b32.xlu0 %v1226, 64
    %v1229 = vpop.permute.xlu0 %1228
    %v1231 = vmul.f32 %v1213, %v1229
    %1233 = vrot.lane.b32.xlu0 %v1231, 32
    %v1234 = vpop.permute.xlu0 %1233
    %1236 = vst.msk [vmem:[#allocation3 + $0x30] sm:$0xff] %vm839, %v1234
    %v1237 = vld [vmem:[#allocation4 + $0x38] sm:$0xff]
    %v1238 = vpack.c.bf16 %v1231, %v1231
    %1240 = vrot.lane.b32.xlu0 %v1238, 32
    %v1241 = vpop.permute.xlu0 %1240
    %v1243 = vsel %vm839, %v1241, 0
    %1245 = vmatpush.bf16.msra.mxu0 0
    %1246 = vmatpush.bf16.msra.mxu0 0
    %1247 = vmatpush.bf16.msra.mxu0 0
    %1248 = vmatpush.bf16.msra.mxu0 0
    %1249 = vmatpush.bf16.msra.mxu0 0
    %1250 = vmatpush.bf16.msra.mxu0 0
    %1251 = vmatpush.bf16.msra.mxu0 %v855
    %1252 = vmatpush.bf16.msra.mxu0 %v854
    %1253 = vmatmul.bf16.gmra.mxu0 %v1243
    %v1254 = vpop.f32.mrf.mxu0
    %v1255 = vadd.f32 0.0, %v1254
    %v1256 = vpop.f32.mrf.mxu0
    %1257 = vdwg.mxu0
    %v1258 = vadd.f32 %v1237, %v1255
    %v1259 = vxor.u32 %v1258, 2147483648
    %v1260 = vmul.f32 %v1259, 1.442695
    %v1261 = vpow.pop %v1260
    %v1262 = vadd.f32 %v1261, 1.0
    %v1263 = vrcp.pop %v1262
    %v1264 = vmul.f32 %v1262, %v1263
    %v1265 = vsub.f32 1.0, %v1264
    %v1266 = vmul.f32 %v1263, %v1265
    %v1267 = vadd.f32 %v1263, %v1266
    %vm1268 = vweird.f32 %v1262
    %vm1269 = vweird.f32 %v1263
    %vm1270 = vmor %vm1268, %vm1269
    %v1271 = vsel %vm1270, %v1263, %v1267
    %v1272 = vand.u32 2147483647, %v1262
    %vm1273 = vcmp.eq.f32.partialorder %v1272, 8.507059e+37
    %v1274 = vand.u32 %v1262, 2147483648
    %v1275 = vor.u32 1.1754944e-38, %v1274
    %v1276 = vsel %vm1273, %v1275, %v1271
    %v1277 = vmul.f32 1.0, %v1276
    %v1278 = vtanh.pop %v1258
    %v1279 = vmul.f32 %v1277, %v1225
    %1281 = vrot.lane.b32.xlu0 %v1278, 64
    %v1282 = vpop.permute.xlu0 %1281
    %v1284 = vmul.f32 %v1277, %v1282
    %1286 = vrot.lane.b32.xlu0 %v1284, 32
    %v1287 = vpop.permute.xlu0 %1286
    %v1289 = vadd.f32 %v1279, %v1287
    %v1290 = vtanh.pop %v1289
    %1292 = vrot.lane.b32.xlu0 %v1290, 64
    %v1293 = vpop.permute.xlu0 %1292
    %v1295 = vmul.f32 %v1277, %v1293
    %1297 = vrot.lane.b32.xlu0 %v1295, 32
    %v1298 = vpop.permute.xlu0 %1297
    %1300 = vst.msk [vmem:[#allocation3 + $0x38] sm:$0xff] %vm839, %v1298
    %v1301 = vld [vmem:[#allocation3] sm:$0xff]
    %v1302 = vld [vmem:[#allocation3 + $0x8] sm:$0xff]
    %v1303 = vld [vmem:[#allocation3 + $0x10] sm:$0xff]
    %v1304 = vld [vmem:[#allocation3 + $0x18] sm:$0xff]
    %v1305 = vld [vmem:[#allocation3 + $0x20] sm:$0xff]
    %v1306 = vld [vmem:[#allocation3 + $0x28] sm:$0xff]
    %v1307 = vld [vmem:[#allocation3 + $0x30] sm:$0xff]
    %v1308 = vld [vmem:[#allocation3 + $0x38] sm:$0xff]
    %v1309 = vpack.c.bf16 %v1302, %v1301
    %v1310 = vpack.c.bf16 %v1304, %v1303
    %v1311 = vpack.c.bf16 %v1306, %v1305
    %v1312 = vpack.c.bf16 %v1308, %v1307
    %v1313 = vld [vmem:[%s5] sm:$0xf]
    %v1314 = vld [vmem:[%s5 + $0x4] sm:$0xf]
    %v1315 = vld [vmem:[%s5 + $0x8] sm:$0xf]
    %v1316 = vld [vmem:[%s5 + $0xc] sm:$0xf]
    %v1317 = vld [vmem:[%s7] sm:$0x1]
    %v1319 = vperm.slane %v1317, 0
    %v1325 = vunpack.c.l.b16 %v1313
    %v1326 = vunpack.c.l.b16 %v1314
    %v1327 = vunpack.c.l.b16 %v1315
    %v1328 = vunpack.c.l.b16 %v1316
    %v1329 = vpack.c.b16 %v1326, %v1325
    %v1330 = vpack.c.b16 %v1328, %v1327
    %v1334 = vsel %vm839, %v1309, 0
    %v1337 = vsel %vm839, %v1310, 0
    %v1340 = vsel %vm839, %v1311, 0
    %v1343 = vsel %vm839, %v1312, 0
    %1345 = vmatpush.bf16.msra.mxu0 0
    %1346 = vmatpush.bf16.msra.mxu0 0
    %1347 = vmatpush.bf16.msra.mxu0 0
    %1348 = vmatpush.bf16.msra.mxu0 0
    %1349 = vmatpush.bf16.msra.mxu0 0
    %1350 = vmatpush.bf16.msra.mxu0 0
    %1351 = vmatpush.bf16.msra.mxu0 %v1330
    %1352 = vmatpush.bf16.msra.mxu0 %v1329
    %1353 = vmatmul.bf16.gmra.mxu0 %v1334
    %v1354 = vpop.f32.mrf.mxu0
    %v1355 = vadd.f32 %v1319, %v1354
    %v1356 = vpop.f32.mrf.mxu0
    %v1357 = vadd.f32 %v1319, %v1356
    %1358 = vmatmul.bf16.gmra.mxu0 %v1337
    %v1359 = vpop.f32.mrf.mxu0
    %v1360 = vadd.f32 %v1319, %v1359
    %v1361 = vpop.f32.mrf.mxu0
    %v1362 = vadd.f32 %v1319, %v1361
    %1363 = vmatmul.bf16.gmra.mxu0 %v1340
    %v1364 = vpop.f32.mrf.mxu0
    %v1365 = vadd.f32 %v1319, %v1364
    %v1366 = vpop.f32.mrf.mxu0
    %v1367 = vadd.f32 %v1319, %v1366
    %1368 = vmatmul.bf16.gmra.mxu0 %v1343
    %v1369 = vpop.f32.mrf.mxu0
    %v1370 = vadd.f32 %v1319, %v1369
    %v1371 = vpop.f32.mrf.mxu0
    %v1372 = vadd.f32 %v1319, %v1371
    %1373 = vdwg.mxu0
    %1374 = vst [vmem:[#allocation4] sm:$0xff] %v1355
    %1375 = vst [vmem:[#allocation4 + $0x8] sm:$0xff] %v1357
    %1376 = vst [vmem:[#allocation4 + $0x10] sm:$0xff] %v1360
    %1377 = vst [vmem:[#allocation4 + $0x18] sm:$0xff] %v1362
    %1378 = vst [vmem:[#allocation4 + $0x20] sm:$0xff] %v1365
    %1379 = vst [vmem:[#allocation4 + $0x28] sm:$0xff] %v1367
    %1380 = vst [vmem:[#allocation4 + $0x30] sm:$0xff] %v1370
    %1381 = vst [vmem:[#allocation4 + $0x38] sm:$0xff] %v1372
    %v1382 = vld [vmem:[%s6] sm:$0xf]
    %v1383 = vld [vmem:[%s6 + $0x4] sm:$0xf]
    %v1384 = vld [vmem:[%s6 + $0x8] sm:$0xf]
    %v1385 = vld [vmem:[%s6 + $0xc] sm:$0xf]
    %v1386 = vld [vmem:[#allocation4] sm:$0xff]
    %v1387 = vxor.u32 %v1386, 2147483648
    %v1388 = vmul.f32 %v1387, 1.442695
    %v1389 = vpow.pop %v1388
    %v1390 = vadd.f32 %v1389, 1.0
    %v1391 = vrcp.pop %v1390
    %v1392 = vmul.f32 %v1390, %v1391
    %v1393 = vsub.f32 1.0, %v1392
    %v1394 = vmul.f32 %v1391, %v1393
    %v1395 = vadd.f32 %v1391, %v1394
    %vm1396 = vweird.f32 %v1390
    %vm1397 = vweird.f32 %v1391
    %vm1398 = vmor %vm1396, %vm1397
    %v1399 = vsel %vm1398, %v1391, %v1395
    %v1400 = vand.u32 2147483647, %v1390
    %vm1401 = vcmp.eq.f32.partialorder %v1400, 8.507059e+37
    %v1402 = vand.u32 %v1390, 2147483648
    %v1403 = vor.u32 1.1754944e-38, %v1402
    %v1404 = vsel %vm1401, %v1403, %v1399
    %v1405 = vmul.f32 1.0, %v1404
    %v1406 = vtanh.pop %v1386
    %v1407 = vmul.f32 %v1405, 0.0
    %1409 = vrot.lane.b32.xlu0 %v1406, 64
    %v1410 = vpop.permute.xlu0 %1409
    %v1412 = vmul.f32 %v1405, %v1410
    %1414 = vrot.lane.b32.xlu0 %v1412, 32
    %v1415 = vpop.permute.xlu0 %1414
    %v1417 = vadd.f32 %v1407, %v1415
    %v1418 = vtanh.pop %v1417
    %1420 = vrot.lane.b32.xlu0 %v1418, 64
    %v1421 = vpop.permute.xlu0 %1420
    %v1423 = vmul.f32 %v1405, %v1421
    %1425 = vrot.lane.b32.xlu0 %v1423, 32
    %v1426 = vpop.permute.xlu0 %1425
    %1428 = vst.msk [vmem:[#allocation3] sm:$0xff] %vm839, %v1426
    %v1429 = vld [vmem:[#allocation4 + $0x8] sm:$0xff]
    %v1430 = vpack.c.bf16 %v1423, %v1423
    %1432 = vrot.lane.b32.xlu0 %v1430, 32
    %v1433 = vpop.permute.xlu0 %1432
    %v1438 = vunpack.c.l.b16 %v1382
    %v1439 = vunpack.c.l.b16 %v1383
    %v1440 = vunpack.c.l.b16 %v1384
    %v1441 = vunpack.c.l.b16 %v1385
    %v1442 = vpack.c.b16 %v1439, %v1438
    %v1443 = vpack.c.b16 %v1441, %v1440
    %v1447 = vsel %vm839, %v1433, 0
    %1449 = vmatpush.bf16.msra.mxu0 0
    %1450 = vmatpush.bf16.msra.mxu0 0
    %1451 = vmatpush.bf16.msra.mxu0 0
    %1452 = vmatpush.bf16.msra.mxu0 0
    %1453 = vmatpush.bf16.msra.mxu0 0
    %1454 = vmatpush.bf16.msra.mxu0 0
    %1455 = vmatpush.bf16.msra.mxu0 %v1443
    %1456 = vmatpush.bf16.msra.mxu0 %v1442
    %1457 = vmatmul.bf16.gmra.mxu0 %v1447
    %v1458 = vpop.f32.mrf.mxu0
    %v1459 = vadd.f32 0.0, %v1458
    %v1460 = vpop.f32.mrf.mxu0
    %1461 = vdwg.mxu0
    %v1462 = vadd.f32 %v1429, %v1459
    %v1463 = vxor.u32 %v1462, 2147483648
    %v1464 = vmul.f32 %v1463, 1.442695
    %v1465 = vpow.pop %v1464
    %v1466 = vadd.f32 %v1465, 1.0
    %v1467 = vrcp.pop %v1466
    %v1468 = vmul.f32 %v1466, %v1467
    %v1469 = vsub.f32 1.0, %v1468
    %v1470 = vmul.f32 %v1467, %v1469
    %v1471 = vadd.f32 %v1467, %v1470
    %vm1472 = vweird.f32 %v1466
    %vm1473 = vweird.f32 %v1467
    %vm1474 = vmor %vm1472, %vm1473
    %v1475 = vsel %vm1474, %v1467, %v1471
    %v1476 = vand.u32 2147483647, %v1466
    %vm1477 = vcmp.eq.f32.partialorder %v1476, 8.507059e+37
    %v1478 = vand.u32 %v1466, 2147483648
    %v1479 = vor.u32 1.1754944e-38, %v1478
    %v1480 = vsel %vm1477, %v1479, %v1475
    %v1481 = vmul.f32 1.0, %v1480
    %v1482 = vtanh.pop %v1462
    %v1483 = vmul.f32 %v1481, %v1417
    %1485 = vrot.lane.b32.xlu0 %v1482, 64
    %v1486 = vpop.permute.xlu0 %1485
    %v1488 = vmul.f32 %v1481, %v1486
    %1490 = vrot.lane.b32.xlu0 %v1488, 32
    %v1491 = vpop.permute.xlu0 %1490
    %v1493 = vadd.f32 %v1483, %v1491
    %v1494 = vtanh.pop %v1493
    %1496 = vrot.lane.b32.xlu0 %v1494, 64
    %v1497 = vpop.permute.xlu0 %1496
    %v1499 = vmul.f32 %v1481, %v1497
    %1501 = vrot.lane.b32.xlu0 %v1499, 32
    %v1502 = vpop.permute.xlu0 %1501
    %1504 = vst.msk [vmem:[#allocation3 + $0x8] sm:$0xff] %vm839, %v1502
    %v1505 = vld [vmem:[#allocation4 + $0x10] sm:$0xff]
    %v1506 = vpack.c.bf16 %v1499, %v1499
    %1508 = vrot.lane.b32.xlu0 %v1506, 32
    %v1509 = vpop.permute.xlu0 %1508
    %v1511 = vsel %vm839, %v1509, 0
    %1513 = vmatpush.bf16.msra.mxu0 0
    %1514 = vmatpush.bf16.msra.mxu0 0
    %1515 = vmatpush.bf16.msra.mxu0 0
    %1516 = vmatpush.bf16.msra.mxu0 0
    %1517 = vmatpush.bf16.msra.mxu0 0
    %1518 = vmatpush.bf16.msra.mxu0 0
    %1519 = vmatpush.bf16.msra.mxu0 %v1443
    %1520 = vmatpush.bf16.msra.mxu0 %v1442
    %1521 = vmatmul.bf16.gmra.mxu0 %v1511
    %v1522 = vpop.f32.mrf.mxu0
    %v1523 = vadd.f32 0.0, %v1522
    %v1524 = vpop.f32.mrf.mxu0
    %1525 = vdwg.mxu0
    %v1526 = vadd.f32 %v1505, %v1523
    %v1527 = vxor.u32 %v1526, 2147483648
    %v1528 = vmul.f32 %v1527, 1.442695
    %v1529 = vpow.pop %v1528
    %v1530 = vadd.f32 %v1529, 1.0
    %v1531 = vrcp.pop %v1530
    %v1532 = vmul.f32 %v1530, %v1531
    %v1533 = vsub.f32 1.0, %v1532
    %v1534 = vmul.f32 %v1531, %v1533
    %v1535 = vadd.f32 %v1531, %v1534
    %vm1536 = vweird.f32 %v1530
    %vm1537 = vweird.f32 %v1531
    %vm1538 = vmor %vm1536, %vm1537
    %v1539 = vsel %vm1538, %v1531, %v1535
    %v1540 = vand.u32 2147483647, %v1530
    %vm1541 = vcmp.eq.f32.partialorder %v1540, 8.507059e+37
    %v1542 = vand.u32 %v1530, 2147483648
    %v1543 = vor.u32 1.1754944e-38, %v1542
    %v1544 = vsel %vm1541, %v1543, %v1539
    %v1545 = vmul.f32 1.0, %v1544
    %v1546 = vtanh.pop %v1526
    %v1547 = vmul.f32 %v1545, %v1493
    %1549 = vrot.lane.b32.xlu0 %v1546, 64
    %v1550 = vpop.permute.xlu0 %1549
    %v1552 = vmul.f32 %v1545, %v1550
    %1554 = vrot.lane.b32.xlu0 %v1552, 32
    %v1555 = vpop.permute.xlu0 %1554
    %v1557 = vadd.f32 %v1547, %v1555
    %v1558 = vtanh.pop %v1557
    %1560 = vrot.lane.b32.xlu0 %v1558, 64
    %v1561 = vpop.permute.xlu0 %1560
    %v1563 = vmul.f32 %v1545, %v1561
    %1565 = vrot.lane.b32.xlu0 %v1563, 32
    %v1566 = vpop.permute.xlu0 %1565
    %1568 = vst.msk [vmem:[#allocation3 + $0x10] sm:$0xff] %vm839, %v1566
    %v1569 = vld [vmem:[#allocation4 + $0x18] sm:$0xff]
    %v1570 = vpack.c.bf16 %v1563, %v1563
    %1572 = vrot.lane.b32.xlu0 %v1570, 32
    %v1573 = vpop.permute.xlu0 %1572
    %v1575 = vsel %vm839, %v1573, 0
    %1577 = vmatpush.bf16.msra.mxu0 0
    %1578 = vmatpush.bf16.msra.mxu0 0
    %1579 = vmatpush.bf16.msra.mxu0 0
    %1580 = vmatpush.bf16.msra.mxu0 0
    %1581 = vmatpush.bf16.msra.mxu0 0
    %1582 = vmatpush.bf16.msra.mxu0 0
    %1583 = vmatpush.bf16.msra.mxu0 %v1443
    %1584 = vmatpush.bf16.msra.mxu0 %v1442
    %1585 = vmatmul.bf16.gmra.mxu0 %v1575
    %v1586 = vpop.f32.mrf.mxu0
    %v1587 = vadd.f32 0.0, %v1586
    %v1588 = vpop.f32.mrf.mxu0
    %1589 = vdwg.mxu0
    %v1590 = vadd.f32 %v1569, %v1587
    %v1591 = vxor.u32 %v1590, 2147483648
    %v1592 = vmul.f32 %v1591, 1.442695
    %v1593 = vpow.pop %v1592
    %v1594 = vadd.f32 %v1593, 1.0
    %v1595 = vrcp.pop %v1594
    %v1596 = vmul.f32 %v1594, %v1595
    %v1597 = vsub.f32 1.0, %v1596
    %v1598 = vmul.f32 %v1595, %v1597
    %v1599 = vadd.f32 %v1595, %v1598
    %vm1600 = vweird.f32 %v1594
    %vm1601 = vweird.f32 %v1595
    %vm1602 = vmor %vm1600, %vm1601
    %v1603 = vsel %vm1602, %v1595, %v1599
    %v1604 = vand.u32 2147483647, %v1594
    %vm1605 = vcmp.eq.f32.partialorder %v1604, 8.507059e+37
    %v1606 = vand.u32 %v1594, 2147483648
    %v1607 = vor.u32 1.1754944e-38, %v1606
    %v1608 = vsel %vm1605, %v1607, %v1603
    %v1609 = vmul.f32 1.0, %v1608
    %v1610 = vtanh.pop %v1590
    %v1611 = vmul.f32 %v1609, %v1557
    %1613 = vrot.lane.b32.xlu0 %v1610, 64
    %v1614 = vpop.permute.xlu0 %1613
    %v1616 = vmul.f32 %v1609, %v1614
    %1618 = vrot.lane.b32.xlu0 %v1616, 32
    %v1619 = vpop.permute.xlu0 %1618
    %v1621 = vadd.f32 %v1611, %v1619
    %v1622 = vtanh.pop %v1621
    %1624 = vrot.lane.b32.xlu0 %v1622, 64
    %v1625 = vpop.permute.xlu0 %1624
    %v1627 = vmul.f32 %v1609, %v1625
    %1629 = vrot.lane.b32.xlu0 %v1627, 32
    %v1630 = vpop.permute.xlu0 %1629
    %1632 = vst.msk [vmem:[#allocation3 + $0x18] sm:$0xff] %vm839, %v1630
    %v1633 = vld [vmem:[#allocation4 + $0x20] sm:$0xff]
    %v1634 = vpack.c.bf16 %v1627, %v1627
    %1636 = vrot.lane.b32.xlu0 %v1634, 32
    %v1637 = vpop.permute.xlu0 %1636
    %v1639 = vsel %vm839, %v1637, 0
    %1641 = vmatpush.bf16.msra.mxu0 0
    %1642 = vmatpush.bf16.msra.mxu0 0
    %1643 = vmatpush.bf16.msra.mxu0 0
    %1644 = vmatpush.bf16.msra.mxu0 0
    %1645 = vmatpush.bf16.msra.mxu0 0
    %1646 = vmatpush.bf16.msra.mxu0 0
    %1647 = vmatpush.bf16.msra.mxu0 %v1443
    %1648 = vmatpush.bf16.msra.mxu0 %v1442
    %1649 = vmatmul.bf16.gmra.mxu0 %v1639
    %v1650 = vpop.f32.mrf.mxu0
    %v1651 = vadd.f32 0.0, %v1650
    %v1652 = vpop.f32.mrf.mxu0
    %1653 = vdwg.mxu0
    %v1654 = vadd.f32 %v1633, %v1651
    %v1655 = vxor.u32 %v1654, 2147483648
    %v1656 = vmul.f32 %v1655, 1.442695
    %v1657 = vpow.pop %v1656
    %v1658 = vadd.f32 %v1657, 1.0
    %v1659 = vrcp.pop %v1658
    %v1660 = vmul.f32 %v1658, %v1659
    %v1661 = vsub.f32 1.0, %v1660
    %v1662 = vmul.f32 %v1659, %v1661
    %v1663 = vadd.f32 %v1659, %v1662
    %vm1664 = vweird.f32 %v1658
    %vm1665 = vweird.f32 %v1659
    %vm1666 = vmor %vm1664, %vm1665
    %v1667 = vsel %vm1666, %v1659, %v1663
    %v1668 = vand.u32 2147483647, %v1658
    %vm1669 = vcmp.eq.f32.partialorder %v1668, 8.507059e+37
    %v1670 = vand.u32 %v1658, 2147483648
    %v1671 = vor.u32 1.1754944e-38, %v1670
    %v1672 = vsel %vm1669, %v1671, %v1667
    %v1673 = vmul.f32 1.0, %v1672
    %v1674 = vtanh.pop %v1654
    %v1675 = vmul.f32 %v1673, %v1621
    %1677 = vrot.lane.b32.xlu0 %v1674, 64
    %v1678 = vpop.permute.xlu0 %1677
    %v1680 = vmul.f32 %v1673, %v1678
    %1682 = vrot.lane.b32.xlu0 %v1680, 32
    %v1683 = vpop.permute.xlu0 %1682
    %v1685 = vadd.f32 %v1675, %v1683
    %v1686 = vtanh.pop %v1685
    %1688 = vrot.lane.b32.xlu0 %v1686, 64
    %v1689 = vpop.permute.xlu0 %1688
    %v1691 = vmul.f32 %v1673, %v1689
    %1693 = vrot.lane.b32.xlu0 %v1691, 32
    %v1694 = vpop.permute.xlu0 %1693
    %1696 = vst.msk [vmem:[#allocation3 + $0x20] sm:$0xff] %vm839, %v1694
    %v1697 = vld [vmem:[#allocation4 + $0x28] sm:$0xff]
    %v1698 = vpack.c.bf16 %v1691, %v1691
    %1700 = vrot.lane.b32.xlu0 %v1698, 32
    %v1701 = vpop.permute.xlu0 %1700
    %v1703 = vsel %vm839, %v1701, 0
    %1705 = vmatpush.bf16.msra.mxu0 0
    %1706 = vmatpush.bf16.msra.mxu0 0
    %1707 = vmatpush.bf16.msra.mxu0 0
    %1708 = vmatpush.bf16.msra.mxu0 0
    %1709 = vmatpush.bf16.msra.mxu0 0
    %1710 = vmatpush.bf16.msra.mxu0 0
    %1711 = vmatpush.bf16.msra.mxu0 %v1443
    %1712 = vmatpush.bf16.msra.mxu0 %v1442
    %1713 = vmatmul.bf16.gmra.mxu0 %v1703
    %v1714 = vpop.f32.mrf.mxu0
    %v1715 = vadd.f32 0.0, %v1714
    %v1716 = vpop.f32.mrf.mxu0
    %1717 = vdwg.mxu0
    %v1718 = vadd.f32 %v1697, %v1715
    %v1719 = vxor.u32 %v1718, 2147483648
    %v1720 = vmul.f32 %v1719, 1.442695
    %v1721 = vpow.pop %v1720
    %v1722 = vadd.f32 %v1721, 1.0
    %v1723 = vrcp.pop %v1722
    %v1724 = vmul.f32 %v1722, %v1723
    %v1725 = vsub.f32 1.0, %v1724
    %v1726 = vmul.f32 %v1723, %v1725
    %v1727 = vadd.f32 %v1723, %v1726
    %vm1728 = vweird.f32 %v1722
    %vm1729 = vweird.f32 %v1723
    %vm1730 = vmor %vm1728, %vm1729
    %v1731 = vsel %vm1730, %v1723, %v1727
    %v1732 = vand.u32 2147483647, %v1722
    %vm1733 = vcmp.eq.f32.partialorder %v1732, 8.507059e+37
    %v1734 = vand.u32 %v1722, 2147483648
    %v1735 = vor.u32 1.1754944e-38, %v1734
    %v1736 = vsel %vm1733, %v1735, %v1731
    %v1737 = vmul.f32 1.0, %v1736
    %v1738 = vtanh.pop %v1718
    %v1739 = vmul.f32 %v1737, %v1685
    %1741 = vrot.lane.b32.xlu0 %v1738, 64
    %v1742 = vpop.permute.xlu0 %1741
    %v1744 = vmul.f32 %v1737, %v1742
    %1746 = vrot.lane.b32.xlu0 %v1744, 32
    %v1747 = vpop.permute.xlu0 %1746
    %v1749 = vadd.f32 %v1739, %v1747
    %v1750 = vtanh.pop %v1749
    %1752 = vrot.lane.b32.xlu0 %v1750, 64
    %v1753 = vpop.permute.xlu0 %1752
    %v1755 = vmul.f32 %v1737, %v1753
    %1757 = vrot.lane.b32.xlu0 %v1755, 32
    %v1758 = vpop.permute.xlu0 %1757
    %1760 = vst.msk [vmem:[#allocation3 + $0x28] sm:$0xff] %vm839, %v1758
    %v1761 = vld [vmem:[#allocation4 + $0x30] sm:$0xff]
    %v1762 = vpack.c.bf16 %v1755, %v1755
    %1764 = vrot.lane.b32.xlu0 %v1762, 32
    %v1765 = vpop.permute.xlu0 %1764
    %v1767 = vsel %vm839, %v1765, 0
    %1769 = vmatpush.bf16.msra.mxu0 0
    %1770 = vmatpush.bf16.msra.mxu0 0
    %1771 = vmatpush.bf16.msra.mxu0 0
    %1772 = vmatpush.bf16.msra.mxu0 0
    %1773 = vmatpush.bf16.msra.mxu0 0
    %1774 = vmatpush.bf16.msra.mxu0 0
    %1775 = vmatpush.bf16.msra.mxu0 %v1443
    %1776 = vmatpush.bf16.msra.mxu0 %v1442
    %1777 = vmatmul.bf16.gmra.mxu0 %v1767
    %v1778 = vpop.f32.mrf.mxu0
    %v1779 = vadd.f32 0.0, %v1778
    %v1780 = vpop.f32.mrf.mxu0
    %1781 = vdwg.mxu0
    %v1782 = vadd.f32 %v1761, %v1779
    %v1783 = vxor.u32 %v1782, 2147483648
    %v1784 = vmul.f32 %v1783, 1.442695
    %v1785 = vpow.pop %v1784
    %v1786 = vadd.f32 %v1785, 1.0
    %v1787 = vrcp.pop %v1786
    %v1788 = vmul.f32 %v1786, %v1787
    %v1789 = vsub.f32 1.0, %v1788
    %v1790 = vmul.f32 %v1787, %v1789
    %v1791 = vadd.f32 %v1787, %v1790
    %vm1792 = vweird.f32 %v1786
    %vm1793 = vweird.f32 %v1787
    %vm1794 = vmor %vm1792, %vm1793
    %v1795 = vsel %vm1794, %v1787, %v1791
    %v1796 = vand.u32 2147483647, %v1786
    %vm1797 = vcmp.eq.f32.partialorder %v1796, 8.507059e+37
    %v1798 = vand.u32 %v1786, 2147483648
    %v1799 = vor.u32 1.1754944e-38, %v1798
    %v1800 = vsel %vm1797, %v1799, %v1795
    %v1801 = vmul.f32 1.0, %v1800
    %v1802 = vtanh.pop %v1782
    %v1803 = vmul.f32 %v1801, %v1749
    %1805 = vrot.lane.b32.xlu0 %v1802, 64
    %v1806 = vpop.permute.xlu0 %1805
    %v1808 = vmul.f32 %v1801, %v1806
    %1810 = vrot.lane.b32.xlu0 %v1808, 32
    %v1811 = vpop.permute.xlu0 %1810
    %v1813 = vadd.f32 %v1803, %v1811
    %v1814 = vtanh.pop %v1813
    %1816 = vrot.lane.b32.xlu0 %v1814, 64
    %v1817 = vpop.permute.xlu0 %1816
    %v1819 = vmul.f32 %v1801, %v1817
    %1821 = vrot.lane.b32.xlu0 %v1819, 32
    %v1822 = vpop.permute.xlu0 %1821
    %1824 = vst.msk [vmem:[#allocation3 + $0x30] sm:$0xff] %vm839, %v1822
    %v1825 = vld [vmem:[#allocation4 + $0x38] sm:$0xff]
    %v1826 = vpack.c.bf16 %v1819, %v1819
    %1828 = vrot.lane.b32.xlu0 %v1826, 32
    %v1829 = vpop.permute.xlu0 %1828
    %v1831 = vsel %vm839, %v1829, 0
    %1833 = vmatpush.bf16.msra.mxu0 0
    %1834 = vmatpush.bf16.msra.mxu0 0
    %1835 = vmatpush.bf16.msra.mxu0 0
    %1836 = vmatpush.bf16.msra.mxu0 0
    %1837 = vmatpush.bf16.msra.mxu0 0
    %1838 = vmatpush.bf16.msra.mxu0 0
    %1839 = vmatpush.bf16.msra.mxu0 %v1443
    %1840 = vmatpush.bf16.msra.mxu0 %v1442
    %1841 = vmatmul.bf16.gmra.mxu0 %v1831
    %v1842 = vpop.f32.mrf.mxu0
    %v1843 = vadd.f32 0.0, %v1842
    %v1844 = vpop.f32.mrf.mxu0
    %1845 = vdwg.mxu0
    %v1846 = vadd.f32 %v1825, %v1843
    %v1847 = vxor.u32 %v1846, 2147483648
    %v1848 = vmul.f32 %v1847, 1.442695
    %v1849 = vpow.pop %v1848
    %v1850 = vadd.f32 %v1849, 1.0
    %v1851 = vrcp.pop %v1850
    %v1852 = vmul.f32 %v1850, %v1851
    %v1853 = vsub.f32 1.0, %v1852
    %v1854 = vmul.f32 %v1851, %v1853
    %v1855 = vadd.f32 %v1851, %v1854
    %vm1856 = vweird.f32 %v1850
    %vm1857 = vweird.f32 %v1851
    %vm1858 = vmor %vm1856, %vm1857
    %v1859 = vsel %vm1858, %v1851, %v1855
    %v1860 = vand.u32 2147483647, %v1850
    %vm1861 = vcmp.eq.f32.partialorder %v1860, 8.507059e+37
    %v1862 = vand.u32 %v1850, 2147483648
    %v1863 = vor.u32 1.1754944e-38, %v1862
    %v1864 = vsel %vm1861, %v1863, %v1859
    %v1865 = vmul.f32 1.0, %v1864
    %v1866 = vtanh.pop %v1846
    %v1867 = vmul.f32 %v1865, %v1813
    %1869 = vrot.lane.b32.xlu0 %v1866, 64
    %v1870 = vpop.permute.xlu0 %1869
    %v1872 = vmul.f32 %v1865, %v1870
    %1874 = vrot.lane.b32.xlu0 %v1872, 32
    %v1875 = vpop.permute.xlu0 %1874
    %v1877 = vadd.f32 %v1867, %v1875
    %v1878 = vtanh.pop %v1877
    %1880 = vrot.lane.b32.xlu0 %v1878, 64
    %v1881 = vpop.permute.xlu0 %1880
    %v1883 = vmul.f32 %v1865, %v1881
    %1885 = vrot.lane.b32.xlu0 %v1883, 32
    %v1886 = vpop.permute.xlu0 %1885
    %1888 = vst.msk [vmem:[#allocation3 + $0x38] sm:$0xff] %vm839, %v1886
    %v1889 = vld [vmem:[#allocation3] sm:$0xff]
    %v1890 = vld [vmem:[#allocation3 + $0x8] sm:$0xff]
    %v1891 = vld [vmem:[#allocation3 + $0x10] sm:$0xff]
    %v1892 = vld [vmem:[#allocation3 + $0x18] sm:$0xff]
    %v1893 = vld [vmem:[#allocation3 + $0x20] sm:$0xff]
    %v1894 = vld [vmem:[#allocation3 + $0x28] sm:$0xff]
    %v1895 = vld [vmem:[#allocation3 + $0x30] sm:$0xff]
    %v1896 = vld [vmem:[#allocation3 + $0x38] sm:$0xff]
    %v1897 = vpack.c.bf16 %v1890, %v1889
    %v1898 = vpack.c.bf16 %v1892, %v1891
    %v1899 = vpack.c.bf16 %v1894, %v1893
    %v1900 = vpack.c.bf16 %v1896, %v1895
    %v1901 = vpack.c.bf16 %v1896, %v1896
    %v1902 = vld [vmem:[%s8] sm:$0xf]
    %v1903 = vld [vmem:[%s8 + $0x4] sm:$0xf]
    %v1904 = vld [vmem:[%s8 + $0x8] sm:$0xf]
    %v1905 = vld [vmem:[%s8 + $0xc] sm:$0xf]
    %v1906 = vld [vmem:[%s9] sm:$0x1]
    %v1908 = vperm.slane %v1906, 0
    %v1914 = vunpack.c.l.b16 %v1902
    %v1915 = vunpack.c.l.b16 %v1903
    %v1916 = vunpack.c.l.b16 %v1904
    %v1917 = vunpack.c.l.b16 %v1905
    %v1918 = vpack.c.b16 %v1915, %v1914
    %v1919 = vpack.c.b16 %v1917, %v1916
    %v1923 = vsel %vm839, %v1897, 0
    %v1926 = vsel %vm839, %v1898, 0
    %v1929 = vsel %vm839, %v1899, 0
    %v1932 = vsel %vm839, %v1900, 0
    %1934 = vmatpush.bf16.msra.mxu0 0
    %1935 = vmatpush.bf16.msra.mxu0 0
    %1936 = vmatpush.bf16.msra.mxu0 0
    %1937 = vmatpush.bf16.msra.mxu0 0
    %1938 = vmatpush.bf16.msra.mxu0 0
    %1939 = vmatpush.bf16.msra.mxu0 0
    %1940 = vmatpush.bf16.msra.mxu0 %v1919
    %1941 = vmatpush.bf16.msra.mxu0 %v1918
    %1942 = vmatmul.bf16.gmra.mxu0 %v1923
    %v1943 = vpop.f32.mrf.mxu0
    %v1944 = vadd.f32 %v1908, %v1943
    %v1945 = vpop.f32.mrf.mxu0
    %v1946 = vadd.f32 %v1908, %v1945
    %1947 = vmatmul.bf16.gmra.mxu0 %v1926
    %v1948 = vpop.f32.mrf.mxu0
    %v1949 = vadd.f32 %v1908, %v1948
    %v1950 = vpop.f32.mrf.mxu0
    %v1951 = vadd.f32 %v1908, %v1950
    %1952 = vmatmul.bf16.gmra.mxu0 %v1929
    %v1953 = vpop.f32.mrf.mxu0
    %v1954 = vadd.f32 %v1908, %v1953
    %v1955 = vpop.f32.mrf.mxu0
    %v1956 = vadd.f32 %v1908, %v1955
    %1957 = vmatmul.bf16.gmra.mxu0 %v1932
    %v1958 = vpop.f32.mrf.mxu0
    %v1959 = vadd.f32 %v1908, %v1958
    %v1960 = vpop.f32.mrf.mxu0
    %v1961 = vadd.f32 %v1908, %v1960
    %1962 = vdwg.mxu0
    %v1963 = vld [vmem:[%s10] sm:$0xf]
    %v1964 = vld [vmem:[%s10 + $0x4] sm:$0xf]
    %v1965 = vld [vmem:[%s10 + $0x8] sm:$0xf]
    %v1966 = vld [vmem:[%s10 + $0xc] sm:$0xf]
    %v1967 = vld [vmem:[%s11] sm:$0x1]
    %v1969 = vperm.slane %v1967, 0
    %v1975 = vunpack.c.l.b16 %v1963
    %v1976 = vunpack.c.l.b16 %v1964
    %v1977 = vunpack.c.l.b16 %v1965
    %v1978 = vunpack.c.l.b16 %v1966
    %v1979 = vpack.c.b16 %v1976, %v1975
    %v1980 = vpack.c.b16 %v1978, %v1977
    %v1984 = vsel %vm839, %v1901, 0
    %1986 = vmatpush.bf16.msra.mxu0 0
    %1987 = vmatpush.bf16.msra.mxu0 0
    %1988 = vmatpush.bf16.msra.mxu0 0
    %1989 = vmatpush.bf16.msra.mxu0 0
    %1990 = vmatpush.bf16.msra.mxu0 0
    %1991 = vmatpush.bf16.msra.mxu0 0
    %1992 = vmatpush.bf16.msra.mxu0 %v1980
    %1993 = vmatpush.bf16.msra.mxu0 %v1979
    %1994 = vmatmul.bf16.gmra.mxu0 %v1984
    %v1995 = vpop.f32.mrf.mxu0
    %v1996 = vadd.f32 %v1969, %v1995
    %v1997 = vpop.f32.mrf.mxu0
    %1998 = vdwg.mxu0
    %v1999 = vld [vmem:[%s12] sm:$0x1]
    %v2000 = vadd.f32 %v1944, %v1996
    %v2001 = vtanh.pop %v2000
    %v2003 = vperm.slane %v1999, 0
    %v2005 = vmul.f32 %v2001, %v2003
    %v2006 = vsel %vm743, %v2005, 0.0
    %2007 = vadd.xlane.f32.xlu0 %v2006
    %v2008 = vpop.xlane.xlu0 %2007
    %v2009 = vadd.f32 %v1946, %v1996
    %v2010 = vtanh.pop %v2009
    %v2011 = vmul.f32 %v2010, %v2003
    %v2012 = vsel %vm743, %v2011, 0.0
    %2013 = vadd.xlane.f32.xlu0 %v2012
    %v2014 = vpop.xlane.xlu0 %2013
    %v2015 = vadd.f32 %v1949, %v1996
    %v2016 = vtanh.pop %v2015
    %v2017 = vmul.f32 %v2016, %v2003
    %v2018 = vsel %vm743, %v2017, 0.0
    %2019 = vadd.xlane.f32.xlu0 %v2018
    %v2020 = vpop.xlane.xlu0 %2019
    %v2021 = vadd.f32 %v1951, %v1996
    %v2022 = vtanh.pop %v2021
    %v2023 = vmul.f32 %v2022, %v2003
    %v2024 = vsel %vm743, %v2023, 0.0
    %2025 = vadd.xlane.f32.xlu0 %v2024
    %v2026 = vpop.xlane.xlu0 %2025
    %v2027 = vadd.f32 %v1954, %v1996
    %v2028 = vtanh.pop %v2027
    %v2029 = vmul.f32 %v2028, %v2003
    %v2030 = vsel %vm743, %v2029, 0.0
    %2031 = vadd.xlane.f32.xlu0 %v2030
    %v2032 = vpop.xlane.xlu0 %2031
    %v2033 = vadd.f32 %v1956, %v1996
    %v2034 = vtanh.pop %v2033
    %v2035 = vmul.f32 %v2034, %v2003
    %v2036 = vsel %vm743, %v2035, 0.0
    %2037 = vadd.xlane.f32.xlu0 %v2036
    %v2038 = vpop.xlane.xlu0 %2037
    %v2039 = vadd.f32 %v1959, %v1996
    %v2040 = vtanh.pop %v2039
    %v2041 = vmul.f32 %v2040, %v2003
    %v2042 = vsel %vm743, %v2041, 0.0
    %2043 = vadd.xlane.f32.xlu0 %v2042
    %v2044 = vpop.xlane.xlu0 %2043
    %v2045 = vadd.f32 %v1961, %v1996
    %v2046 = vtanh.pop %v2045
    %v2047 = vmul.f32 %v2046, %v2003
    %v2048 = vsel %vm743, %v2047, 0.0
    %2049 = vadd.xlane.f32.xlu0 %v2048
    %v2050 = vpop.xlane.xlu0 %2049
    %v2051 = vmax.f32 %v2008, %v2014
    %v2052 = vmax.f32 %v2020, %v2026
    %v2053 = vmax.f32 %v2032, %v2038
    %v2054 = vmax.f32 %v2044, %v2050
    %v2055 = vmax.f32 %v2051, %v2052
    %v2056 = vmax.f32 %v2053, %v2054
    %v2057 = vmax.f32 %v2055, %v2056
    %v2058 = vsub.f32 %v2008, %v2057
    %v2059 = vmul.f32 %v2058, 1.442695
    %v2060 = vpow.pop %v2059
    %v2061 = vsub.f32 %v2014, %v2057
    %v2062 = vmul.f32 %v2061, 1.442695
    %v2063 = vpow.pop %v2062
    %v2064 = vsub.f32 %v2020, %v2057
    %v2065 = vmul.f32 %v2064, 1.442695
    %v2066 = vpow.pop %v2065
    %v2067 = vsub.f32 %v2026, %v2057
    %v2068 = vmul.f32 %v2067, 1.442695
    %v2069 = vpow.pop %v2068
    %v2070 = vsub.f32 %v2032, %v2057
    %v2071 = vmul.f32 %v2070, 1.442695
    %v2072 = vpow.pop %v2071
    %v2073 = vsub.f32 %v2038, %v2057
    %v2074 = vmul.f32 %v2073, 1.442695
    %v2075 = vpow.pop %v2074
    %v2076 = vsub.f32 %v2044, %v2057
    %v2077 = vmul.f32 %v2076, 1.442695
    %v2078 = vpow.pop %v2077
    %v2079 = vsub.f32 %v2050, %v2057
    %v2080 = vmul.f32 %v2079, 1.442695
    %v2081 = vpow.pop %v2080
    %v2082 = vadd.f32 %v2060, %v2063
    %v2083 = vadd.f32 %v2066, %v2069
    %v2084 = vadd.f32 %v2072, %v2075
    %v2085 = vadd.f32 %v2078, %v2081
    %v2086 = vadd.f32 %v2082, %v2083
    %v2087 = vadd.f32 %v2084, %v2085
    %v2088 = vadd.f32 %v2086, %v2087
    %v2089 = vrcp.pop %v2088
    %v2090 = vmul.f32 %v2060, %v2089
    %v2091 = vmul.f32 %v2090, %v1889
    %v2092 = vmul.f32 %v2063, %v2089
    %v2093 = vmul.f32 %v2092, %v1890
    %v2094 = vmul.f32 %v2066, %v2089
    %v2095 = vmul.f32 %v2094, %v1891
    %v2096 = vmul.f32 %v2069, %v2089
    %v2097 = vmul.f32 %v2096, %v1892
    %v2098 = vmul.f32 %v2072, %v2089
    %v2099 = vmul.f32 %v2098, %v1893
    %v2100 = vmul.f32 %v2075, %v2089
    %v2101 = vmul.f32 %v2100, %v1894
    %v2102 = vmul.f32 %v2078, %v2089
    %v2103 = vmul.f32 %v2102, %v1895
    %v2104 = vmul.f32 %v2081, %v2089
    %v2105 = vmul.f32 %v2104, %v1896
    %v2106 = vadd.f32 %v2091, %v2093
    %v2107 = vadd.f32 %v2095, %v2097
    %v2108 = vadd.f32 %v2099, %v2101
    %v2109 = vadd.f32 %v2103, %v2105
    %v2110 = vadd.f32 %v2106, %v2107
    %v2111 = vadd.f32 %v2108, %v2109
    %v2112 = vadd.f32 %v2110, %v2111
    %v2113 = vpack.c.bf16 %v2112, %v2112
    %v2114 = vld [vmem:[%s13] sm:$0xf]
    %v2115 = vld [vmem:[%s13 + $0x4] sm:$0xf]
    %v2116 = vld [vmem:[%s13 + $0x8] sm:$0xf]
    %v2117 = vld [vmem:[%s13 + $0xc] sm:$0xf]
    %v2118 = vld [vmem:[%s14] sm:$0xf]
    %v2119 = vld [vmem:[%s14 + $0x4] sm:$0xf]
    %v2120 = vld [vmem:[%s14 + $0x8] sm:$0xf]
    %v2121 = vld [vmem:[%s14 + $0xc] sm:$0xf]
    %v2126 = vunpack.c.l.b16 %v2118
    %v2127 = vunpack.c.l.b16 %v2119
    %v2128 = vunpack.c.l.b16 %v2120
    %v2129 = vunpack.c.l.b16 %v2121
    %v2130 = vpack.c.b16 %v2127, %v2126
    %v2131 = vpack.c.b16 %v2129, %v2128
    %2134 = vmatpush.bf16.msra.mxu0 0
    %2135 = vmatpush.bf16.msra.mxu0 0
    %2136 = vmatpush.bf16.msra.mxu0 0
    %2137 = vmatpush.bf16.msra.mxu0 0
    %2138 = vmatpush.bf16.msra.mxu0 0
    %2139 = vmatpush.bf16.msra.mxu0 0
    %2140 = vmatpush.bf16.msra.mxu0 %v2131
    %2141 = vmatpush.bf16.msra.mxu0 %v2130
    %2142 = vmatmul.bf16.gmra.mxu0 %v1984
    %v2143 = vpop.f32.mrf.mxu0
    %v2144 = vadd.f32 0.0, %v2143
    %v2145 = vpop.f32.mrf.mxu0
    %2146 = vdwg.mxu0
    %v2151 = vunpack.c.l.b16 %v2114
    %v2152 = vunpack.c.l.b16 %v2115
    %v2153 = vunpack.c.l.b16 %v2116
    %v2154 = vunpack.c.l.b16 %v2117
    %v2155 = vpack.c.b16 %v2152, %v2151
    %v2156 = vpack.c.b16 %v2154, %v2153
    %v2160 = vsel %vm839, %v2113, 0
    %2162 = vmatpush.bf16.msra.mxu0 0
    %2163 = vmatpush.bf16.msra.mxu0 0
    %2164 = vmatpush.bf16.msra.mxu0 0
    %2165 = vmatpush.bf16.msra.mxu0 0
    %2166 = vmatpush.bf16.msra.mxu0 0
    %2167 = vmatpush.bf16.msra.mxu0 0
    %2168 = vmatpush.bf16.msra.mxu0 %v2156
    %2169 = vmatpush.bf16.msra.mxu0 %v2155
    %2170 = vmatmul.bf16.gmra.mxu0 %v2160
    %v2171 = vpop.f32.mrf.mxu0
    %v2172 = vadd.f32 %v2144, %v2171
    %v2173 = vpop.f32.mrf.mxu0
    %2174 = vdwg.mxu0
    %v2175 = vld [vmem:[%s15] sm:$0x1]
    %v2177 = vperm.slane %v2175, 0
    %v2179 = vadd.f32 %v2172, %v2177
    %v2180 = vtanh.pop %v2179
    %v2181 = vpack.c.bf16 %v2180, %v2180
    %v2182 = vld [vmem:[%s16] sm:$0xf]
    %v2183 = vld [vmem:[%s16 + $0x4] sm:$0xf]
    %v2184 = vld [vmem:[%s16 + $0x8] sm:$0xf]
    %v2185 = vld [vmem:[%s16 + $0xc] sm:$0xf]
    %v2186 = vld [vmem:[%s17] sm:$0x1]
    %v2188 = vperm.slane %v2186, 0
    %v2194 = vunpack.c.l.b16 %v2182
    %v2195 = vunpack.c.l.b16 %v2183
    %v2196 = vunpack.c.l.b16 %v2184
    %v2197 = vunpack.c.l.b16 %v2185
    %v2198 = vpack.c.b16 %v2195, %v2194
    %v2199 = vpack.c.b16 %v2197, %v2196
    %v2203 = vsel %vm839, %v2181, 0
    %2205 = vmatpush.bf16.msra.mxu0 0
    %2206 = vmatpush.bf16.msra.mxu0 0
    %2207 = vmatpush.bf16.msra.mxu0 0
    %2208 = vmatpush.bf16.msra.mxu0 0
    %2209 = vmatpush.bf16.msra.mxu0 0
    %2210 = vmatpush.bf16.msra.mxu0 0
    %2211 = vmatpush.bf16.msra.mxu0 %v2199
    %2212 = vmatpush.bf16.msra.mxu0 %v2198
    %2213 = vmatmul.bf16.gmra.mxu0 %v2203
    %v2214 = vpop.f32.mrf.mxu0
    %v2215 = vadd.f32 %v2188, %v2214
    %v2216 = vpop.f32.mrf.mxu0
    %2217 = vdwg.mxu0
    %vm2218 = vcmask 31744
    %2219 = vst.msk [vmem:[%s18] sm:$0xff] %vm2218, %v2215
    // Predicated region
    $region554: #{attention_lstm_forward.1} parent=1 // pred_check
      _
    $region555: #{attention_lstm_forward.1} parent=1 // pred_check_branch
      %2221 = sbr.rel (0) target = $region557
    $region556: #{attention_lstm_forward.1} parent=1 // pred_region
      _
    $region557: #{attention_lstm_forward.1} parent=1 // pred_fallthru
      _
    // Predicated region
    $region558: #{attention_lstm_forward.1} parent=1 // pred_check
      _
    $region559: #{attention_lstm_forward.1} parent=1 // pred_check_branch
      %2223 = sbr.rel (0) target = $region561
    $region560: #{attention_lstm_forward.1} parent=1 // pred_region
      _
    $region561: #{attention_lstm_forward.1} parent=1 // pred_fallthru
      _
    %2224 = vsyncpa [#allocation7], 1
  %2225 = vsyncmov [#allocation5]
  %s2226 = vpop.sfrf %2225
  %p2227 = scmp.eq.s32.totalorder %s2226, 0
  %p2228 = pneg %p2227
  %2230 = shalt.err (%p2228)
  %s2231 = scalar_lea.sflag [#allocation5], 1
  %2232 = vsyncmov %s2231
  %s2233 = vpop.sfrf %2232
  %p2234 = scmp.eq.s32.totalorder %s2233, 0
  %p2235 = pneg %p2234
  %2237 = shalt.err (%p2235)
  %s2238 = scalar_lea.sflag [#allocation5], 2
  %2239 = vsyncmov %s2238
  %s2240 = vpop.sfrf %2239
  %p2241 = scmp.eq.s32.totalorder %s2240, 0
  %p2242 = pneg %p2241
  %2244 = shalt.err (%p2242)
  %s2245 = scalar_lea.sflag [#allocation5], 3
  %2246 = vsyncmov %s2245
  %s2247 = vpop.sfrf %2246
  %p2248 = scmp.eq.s32.totalorder %s2247, 0
  %p2249 = pneg %p2248
  %2251 = shalt.err (%p2249)
  %s2252 = scalar_lea.sflag [#allocation5], 4
  %2253 = vsyncmov %s2252
  %s2254 = vpop.sfrf %2253
  %p2255 = scmp.eq.s32.totalorder %s2254, 0
  %p2256 = pneg %p2255
  %2258 = shalt.err (%p2256)
  %s2259 = scalar_lea.sflag [#allocation5], 5
  %2260 = vsyncmov %s2259
  %s2261 = vpop.sfrf %2260
  %p2262 = scmp.eq.s32.totalorder %s2261, 0
  %p2263 = pneg %p2262
  %2265 = shalt.err (%p2263)
  %s2266 = scalar_lea.sflag [#allocation5], 6
  %2267 = vsyncmov %s2266
  %s2268 = vpop.sfrf %2267
  %p2269 = scmp.eq.s32.totalorder %s2268, 0
  %p2270 = pneg %p2269
  %2272 = shalt.err (%p2270)
  %s2273 = scalar_lea.sflag [#allocation5], 7
  %2274 = vsyncmov %s2273
  %s2275 = vpop.sfrf %2274
  %p2276 = scmp.eq.s32.totalorder %s2275, 0
  %p2277 = pneg %p2276
  %2279 = shalt.err (%p2277)
  %s2280 = scalar_lea.sflag [#allocation5], 8
  %2281 = vsyncmov %s2280
  %s2282 = vpop.sfrf %2281
  %p2283 = scmp.eq.s32.totalorder %s2282, 0
  %p2284 = pneg %p2283
  %2286 = shalt.err (%p2284)
  %s2287 = scalar_lea.sflag [#allocation5], 9
  %2288 = vsyncmov %s2287
  %s2289 = vpop.sfrf %2288
  %p2290 = scmp.eq.s32.totalorder %s2289, 0
  %p2291 = pneg %p2290
  %2293 = shalt.err (%p2291)
  %s2294 = scalar_lea.sflag [#allocation5], 10
  %2295 = vsyncmov %s2294
  %s2296 = vpop.sfrf %2295
  %p2297 = scmp.eq.s32.totalorder %s2296, 0
  %p2298 = pneg %p2297
  %2300 = shalt.err (%p2298)
  %s2301 = scalar_lea.sflag [#allocation5], 11
  %2302 = vsyncmov %s2301
  %s2303 = vpop.sfrf %2302
  %p2304 = scmp.eq.s32.totalorder %s2303, 0
  %p2305 = pneg %p2304
  %2307 = shalt.err (%p2305)
  %s2308 = scalar_lea.sflag [#allocation5], 12
  %2309 = vsyncmov %s2308
  %s2310 = vpop.sfrf %2309
  %p2311 = scmp.eq.s32.totalorder %s2310, 0
  %p2312 = pneg %p2311
  %2314 = shalt.err (%p2312)
  %s2315 = scalar_lea.sflag [#allocation5], 13
  %2316 = vsyncmov %s2315
  %s2317 = vpop.sfrf %2316
  %p2318 = scmp.eq.s32.totalorder %s2317, 0
  %p2319 = pneg %p2318
  %2321 = shalt.err (%p2319)
  %s2322 = scalar_lea.sflag [#allocation5], 14
  %2323 = vsyncmov %s2322
  %s2324 = vpop.sfrf %2323
  %p2325 = scmp.eq.s32.totalorder %s2324, 0
  %p2326 = pneg %p2325
  %2328 = shalt.err (%p2326)
  %s2329 = scalar_lea.sflag [#allocation5], 15
  %2330 = vsyncmov %s2329
  %s2331 = vpop.sfrf %2330
  %p2332 = scmp.eq.s32.totalorder %s2331, 0
  %p2333 = pneg %p2332
  %2335 = shalt.err (%p2333)

</llo_original>
